<compile_context>
chip_gen: v5e
topology: v5e:2x2
jax: 0.10.0
libtpu: 0.0.40
codegen_flags: <defaults>
</compile_context>

<pallas_src>
import functools

import jax
import jax.numpy as jnp
from jax.experimental import pallas as pl
from jax.experimental.pallas import tpu as pltpu


# --------------------------- hardware-aware tuning ---------------------------


def _hw_tuning():
    """(tm, tn, tk, vmem_limit) — bigger tiles on 128-MiB-VMEM chips (v5e/v6e),
    conservative on v7x (64 MiB) or when the query is unavailable."""
    try:
        info = pltpu.get_tpu_info()
        vmem_bytes = getattr(info, "vmem_capacity_bytes", 64 * 1024 * 1024)
    except Exception:  # pragma: no cover - defensive, fall back to safe values
        vmem_bytes = 64 * 1024 * 1024
    if vmem_bytes >= 128 * 1024 * 1024:            # v5e / v6e
        return 512, 256, 512, 96 * 1024 * 1024
    return 256, 256, 512, 40 * 1024 * 1024         # v7x / unknown


_TM, _TN, _TK, _VMEM_LIMIT = _hw_tuning()


# ------------------------------ small helpers -------------------------------


def _round_up(x, m):
    return (x + m - 1) // m * m


def _choose_tile(dim, target, align):
    """Return (tile, padded_dim). Prefer a full-dim single block (no padding)
    when the dim fits in <= 2*target and is layout-aligned."""
    if dim <= target:
        return dim, dim
    if dim % align == 0 and dim <= 2 * target:
        return dim, dim
    return target, _round_up(dim, target)


def _pad2(x, rows, cols):
    r, c = x.shape
    if r == rows and c == cols:
        return x
    return jnp.pad(x, ((0, rows - r), (0, cols - c)))


def _bf16(x):
    return x if x.dtype == jnp.bfloat16 else x.astype(jnp.bfloat16)


# ------------------------- tiled matmul (+epilogue) --------------------------


def _matmul_kernel(*refs, activation, has_residual):
    if has_residual:
        x_ref, w_ref, b_ref, r_ref, o_ref, acc_ref = refs
    else:
        x_ref, w_ref, b_ref, o_ref, acc_ref = refs
        r_ref = None
    k = pl.program_id(2)

    @pl.when(k == 0)
    def _():
        acc_ref[...] = jnp.zeros_like(acc_ref)

    acc_ref[...] += jnp.dot(x_ref[...], w_ref[...],
                            preferred_element_type=jnp.float32)

    @pl.when(k == pl.num_programs(2) - 1)
    def _():
        y = acc_ref[...] + b_ref[...].astype(jnp.float32)
        if activation == "quick_gelu":           # CLIP QuickGELU: x*sigmoid(1.702x)
            y = y * jax.nn.sigmoid(1.702 * y)
        if r_ref is not None:                    # fused residual add (bf16 stream)
            y = y + r_ref[...].astype(jnp.float32)
        o_ref[...] = y.astype(o_ref.dtype)


def matmul(x, w, b, residual=None, activation=None, *, out_dtype=jnp.bfloat16,
           tm=None, tn=None, tk=None):
    """x[M,K] @ w[K,N] + b, optional fused QuickGELU / residual add.
    Weights are expected pre-cast to bf16 (prepare_params) so the casts/pads
    below are no-ops on the per-forward path."""
    tm = _TM if tm is None else tm
    tn = _TN if tn is None else tn
    tk = _TK if tk is None else tk
    M, K = x.shape
    _, N = w.shape
    tm_e, Mp = _choose_tile(M, tm, 8)
    tn_e, Np = _choose_tile(N, tn, 128)
    tk_e, Kp = _choose_tile(K, tk, 128)

    xb = _pad2(_bf16(x), Mp, Kp)
    wb = _pad2(_bf16(w), Kp, Np)
    bb = _pad2(b.reshape(1, -1).astype(jnp.float32), 1, Np)

    in_specs = [
        pl.BlockSpec((tm_e, tk_e), lambda i, j, k: (i, k)),
        pl.BlockSpec((tk_e, tn_e), lambda i, j, k: (k, j)),
        pl.BlockSpec((1, tn_e), lambda i, j, k: (0, j)),
    ]
    args = [xb, wb, bb]
    has_residual = residual is not None
    if has_residual:
        args.append(_pad2(_bf16(residual), Mp, Np))       # residual stays bf16
        in_specs.append(pl.BlockSpec((tm_e, tn_e), lambda i, j, k: (i, j)))

    out = pl.pallas_call(
        functools.partial(_matmul_kernel, activation=activation,
                          has_residual=has_residual),
        grid=(Mp // tm_e, Np // tn_e, Kp // tk_e),
        in_specs=in_specs,
        out_specs=pl.BlockSpec((tm_e, tn_e), lambda i, j, k: (i, j)),
        out_shape=jax.ShapeDtypeStruct((Mp, Np), out_dtype),
        scratch_shapes=[pltpu.VMEM((tm_e, tn_e), jnp.float32)],
        compiler_params=pltpu.CompilerParams(
            dimension_semantics=("parallel", "parallel", "arbitrary"),
            vmem_limit_bytes=_VMEM_LIMIT),
    )(*args)
    if (Mp, Np) != (M, N):
        out = out[:M, :N]
    return out


# --------------------- fused LayerNorm -> matmul kernel ----------------------


def _ln_matmul_kernel(*refs, activation, emit_ln, eps):
    if emit_ln:
        x_ref, g_ref, bln_ref, w_ref, b_ref, o_ref, ln_ref, ln_scr = refs
    else:
        x_ref, g_ref, bln_ref, w_ref, b_ref, o_ref, ln_scr = refs
        ln_ref = None

    # LayerNorm computed once per row tile (j == 0) into VMEM scratch; every
    # N tile (j > 0) reuses it instead of redoing mean/var/rsqrt/affine.
    @pl.when(pl.program_id(1) == 0)
    def _():
        x = x_ref[...].astype(jnp.float32)
        mu = jnp.mean(x, axis=-1, keepdims=True)
        xc = x - mu
        var = jnp.mean(xc * xc, axis=-1, keepdims=True)
        ln = xc * jax.lax.rsqrt(var + eps) * g_ref[...] + bln_ref[...]
        ln_scr[...] = ln
        if ln_ref is not None:                    # ln_2 hook output (module return)
            ln_ref[...] = ln.astype(ln_ref.dtype)

    y = jnp.dot(ln_scr[...].astype(w_ref.dtype), w_ref[...],
                preferred_element_type=jnp.float32)
    y = y + b_ref[...].astype(jnp.float32)
    if activation == "quick_gelu":
        y = y * jax.nn.sigmoid(1.702 * y)
    o_ref[...] = y.astype(o_ref.dtype)


def ln_matmul(x, g, bln, w, b, *, activation=None, emit_ln=False,
              out_dtype=jnp.bfloat16, eps=1e-5, tm=None, tn=None):
    """LayerNorm(x) @ w + b in one kernel. K (=D) stays untiled so LN sees full rows."""
    tm = _TM if tm is None else tm
    tn = _TN if tn is None else tn
    M, D = x.shape
    _, N = w.shape
    tm_e, Mp = _choose_tile(M, tm, 8)
    tn_e, Np = _choose_tile(N, tn, 128)

    xb = _pad2(_bf16(x), Mp, D)                    # bf16 activation reads
    gf = g.reshape(1, D).astype(jnp.float32)
    bf = bln.reshape(1, D).astype(jnp.float32)
    wb = _pad2(_bf16(w), D, Np)
    bb = _pad2(b.reshape(1, -1).astype(jnp.float32), 1, Np)

    in_specs = [
        pl.BlockSpec((tm_e, D), lambda i, j: (i, 0)),
        pl.BlockSpec((1, D), lambda i, j: (0, 0)),     # gamma reused across grid
        pl.BlockSpec((1, D), lambda i, j: (0, 0)),     # beta  reused across grid
        pl.BlockSpec((D, tn_e), lambda i, j: (0, j)),
        pl.BlockSpec((1, tn_e), lambda i, j: (0, j)),
    ]
    out_shape = jax.ShapeDtypeStruct((Mp, Np), out_dtype)
    out_specs = pl.BlockSpec((tm_e, tn_e), lambda i, j: (i, j))
    if emit_ln:
        # ln_2 hook is the module's return value -> keep it fp32.
        out_shape = (out_shape, jax.ShapeDtypeStruct((Mp, D), jnp.float32))
        out_specs = (out_specs, pl.BlockSpec((tm_e, D), lambda i, j: (i, 0)))

    outs = pl.pallas_call(
        functools.partial(_ln_matmul_kernel, activation=activation,
                          emit_ln=emit_ln, eps=eps),
        grid=(Mp // tm_e, Np // tn_e),
        in_specs=in_specs,
        out_specs=out_specs,
        out_shape=out_shape,
        scratch_shapes=[pltpu.VMEM((tm_e, D), jnp.float32)],
        compiler_params=pltpu.CompilerParams(
            dimension_semantics=("parallel", "arbitrary"),
            vmem_limit_bytes=_VMEM_LIMIT),
    )(xb, gf, bf, wb, bb)

    if emit_ln:
        y, ln = outs
        if (Mp, Np) != (M, N):
            y = y[:M, :N]
        if Mp != M:
            ln = ln[:M]
        return y, ln
    y = outs
    if (Mp, Np) != (M, N):
        y = y[:M, :N]
    return y


# ----------------------------- plain LayerNorm -------------------------------


def _layernorm_kernel(x_ref, g_ref, b_ref, o_ref, *, eps):
    x = x_ref[...].astype(jnp.float32)
    mu = jnp.mean(x, axis=-1, keepdims=True)
    xc = x - mu
    var = jnp.mean(xc * xc, axis=-1, keepdims=True)
    o_ref[...] = (xc * jax.lax.rsqrt(var + eps) * g_ref[...]
                  + b_ref[...]).astype(o_ref.dtype)


def layernorm(x, g, b, *, eps=1e-5, out_dtype=jnp.bfloat16, tm=None):
    tm = _TM if tm is None else tm
    M, D = x.shape
    tm_e, Mp = _choose_tile(M, tm, 8)
    xb = _pad2(_bf16(x), Mp, D)
    out = pl.pallas_call(
        functools.partial(_layernorm_kernel, eps=eps),
        grid=(Mp // tm_e,),
        in_specs=[pl.BlockSpec((tm_e, D), lambda i: (i, 0)),
                  pl.BlockSpec((1, D), lambda i: (0, 0)),
                  pl.BlockSpec((1, D), lambda i: (0, 0))],
        out_specs=pl.BlockSpec((tm_e, D), lambda i: (i, 0)),
        out_shape=jax.ShapeDtypeStruct((Mp, D), out_dtype),
        compiler_params=pltpu.CompilerParams(
            dimension_semantics=("parallel",),
            vmem_limit_bytes=_VMEM_LIMIT),
    )(xb, g.reshape(1, D).astype(jnp.float32), b.reshape(1, D).astype(jnp.float32))
    return out[:M] if Mp != M else out


# --------------- fused attention + out-projection + residual -----------------


def _attn_block_kernel(qkv_ref, wo_ref, bo_ref, res_ref, o_ref, *, num_heads, scale):
    L = qkv_ref.shape[1]
    D = qkv_ref.shape[2] // 3
    dh = D // num_heads

    qkv = qkv_ref[0]                                 # [L, 3D] bf16, all heads
    heads = []
    for h in range(num_heads):                       # static unroll; VMEM-only slices
        qh = qkv[:, h * dh:(h + 1) * dh]
        kh = qkv[:, D + h * dh:D + (h + 1) * dh]
        vh = qkv[:, 2 * D + h * dh:2 * D + (h + 1) * dh]
        # contract dh of q and k directly (no in-kernel transpose)
        s = jax.lax.dot_general(qh, kh, (((1,), (1,)), ((), ())),
                                preferred_element_type=jnp.float32) * scale
        m = jnp.max(s, axis=-1, keepdims=True)
        p = jnp.exp(s - m)
        denom = jnp.sum(p, axis=-1, keepdims=True)
        p = p * pl.reciprocal(denom, approx=True)    # softmax divide on the EUP slot
        heads.append(jnp.dot(p.astype(vh.dtype), vh,
                             preferred_element_type=jnp.float32))
    attn = jnp.concatenate(heads, axis=-1)           # [L, D] lane-dense (head concat)

    # fused out-projection + bias + residual; lane-dense [L, D] store
    y = jnp.dot(attn.astype(wo_ref.dtype), wo_ref[...],
                preferred_element_type=jnp.float32)
    y = y + bo_ref[...].astype(jnp.float32) + res_ref[0].astype(jnp.float32)
    o_ref[0] = y.astype(o_ref.dtype)


def attn_block(tokens, qkv, wo, bo, *, num_heads):
    """tokens + out_proj(MHA_heads(qkv)) — one grid step per batch row, heads
    split inside the kernel (no host relayouts), lane-dense [1, L, D] output."""
    B, L, D = tokens.shape
    dh = D // num_heads
    qkv3 = qkv.reshape(B, L, 3 * D)                  # metadata-only reshape
    return pl.pallas_call(
        functools.partial(_attn_block_kernel, num_heads=num_heads,
                          scale=1.0 / (dh ** 0.5)),
        grid=(B,),
        in_specs=[
            pl.BlockSpec((1, L, 3 * D), lambda b: (b, 0, 0)),
            pl.BlockSpec((D, D), lambda b: (0, 0)),
            pl.BlockSpec((1, D), lambda b: (0, 0)),
            pl.BlockSpec((1, L, D), lambda b: (b, 0, 0)),
        ],
        out_specs=pl.BlockSpec((1, L, D), lambda b: (b, 0, 0)),
        out_shape=jax.ShapeDtypeStruct((B, L, D), jnp.bfloat16),
        compiler_params=pltpu.CompilerParams(
            dimension_semantics=("parallel",),
            vmem_limit_bytes=_VMEM_LIMIT),
    )(qkv3, _bf16(wo), bo.reshape(1, D).astype(jnp.float32), _bf16(tokens))


# ----------------------------- transformer block ------------------------------


def transformer_block(tokens, blk, num_heads):
    """x = x + attn(ln_1(x));  hook = ln_2(x);  x = x + mlp(hook)."""
    B, L, D = tokens.shape
    x2 = tokens.reshape(B * L, D)

    qkv = ln_matmul(x2, blk["ln1_g"], blk["ln1_b"],
                    blk["attn"]["in_w"], blk["attn"]["in_b"],
                    out_dtype=jnp.bfloat16)                     # LN1 + QKV
    tokens = attn_block(tokens, qkv, blk["attn"]["out_w"], blk["attn"]["out_b"],
                        num_heads=num_heads)                    # MHA + out-proj + res

    x2 = tokens.reshape(B * L, D)
    h, ln2 = ln_matmul(x2, blk["ln2_g"], blk["ln2_b"],
                       blk["fc_w"], blk["fc_b"],
                       activation="quick_gelu", emit_ln=True,
                       out_dtype=jnp.bfloat16)                  # LN2 + c_fc + GELU
    out = matmul(h, blk["proj_w"], blk["proj_b"],
                 residual=x2, out_dtype=jnp.bfloat16)           # c_proj + residual
    return out.reshape(B, L, D), ln2.reshape(B, L, D)


# ------------------------------ model forward --------------------------------


def clip_backbone_forward(x, params, *, patch, num_heads):
    """Reproduces CLIPBackbone.forward: stacked ln_2 outputs of every resblock,
    CLS token dropped, permuted to [B, num_layers, L-1, D]."""
    B, C, H, W = x.shape
    gh, gw = H // patch, W // patch
    D = params["class_embedding"].shape[0]

    # conv1 (stride == kernel == patch, no bias)  ==  patchify + matmul
    patches = x.reshape(B, C, gh, patch, gw, patch)
    patches = patches.transpose(0, 2, 4, 1, 3, 5).reshape(B * gh * gw, C * patch * patch)
    tok = matmul(_bf16(patches), params["conv1_w"],
                 jnp.zeros((D,), jnp.float32), out_dtype=jnp.float32)
    tok = tok.reshape(B, gh * gw, D)

    cls = jnp.broadcast_to(params["class_embedding"].reshape(1, 1, D), (B, 1, D))
    tokens = jnp.concatenate([cls, tok], axis=1) + params["positional_embedding"][None]
    L = tokens.shape[1]

    tokens = layernorm(tokens.reshape(B * L, D),
                       params["ln_pre_g"], params["ln_pre_b"]).reshape(B, L, D)

    ln2_outs = []
    for blk in params["blocks"]:
        tokens, ln2 = transformer_block(tokens, blk, num_heads)
        ln2_outs.append(ln2[:, 1:, :])                  # drop CLS token
    # TODO(synk): write each layer's ln_2 tiles straight into the stacked
    # [B, layers, L-1, D] result (input_output_aliases + layer-indexed out spec)
    # to remove this final copy.
    # TODO(synk): ln_post / visual projection of encode_image are skipped — they
    # do not influence the hooked ln_2 outputs that form the module's return.
    return jnp.stack(ln2_outs, axis=1)


# ------------------------------- param setup ---------------------------------


def init_params(key, *, C, patch, L, D, heads, layers, mlp_dim):
    def nrm(k, shape, scale=0.02):
        return scale * jax.random.normal(k, shape, dtype=jnp.float32)

    keys = jax.random.split(key, 4 + layers)
    params = {
        "conv1_w": nrm(keys[0], (D, C, patch, patch)),
        "class_embedding": nrm(keys[1], (D,)),
        "positional_embedding": nrm(keys[2], (L, D)),
        "ln_pre_g": jnp.ones((D,), jnp.float32),
        "ln_pre_b": jnp.zeros((D,), jnp.float32),
        "blocks": [],
    }
    for i in range(layers):
        bk = jax.random.split(keys[4 + i], 6)
        params["blocks"].append(
            {
                "ln1_g": jnp.ones((D,), jnp.float32),
                "ln1_b": jnp.zeros((D,), jnp.float32),
                "attn": {
                    "in_w": nrm(bk[0], (D, 3 * D)),
                    "in_b": nrm(bk[1], (3 * D,), 0.01),
                    "out_w": nrm(bk[2], (D, D)),
                    "out_b": jnp.zeros((D,), jnp.float32),
                },
                "ln2_g": jnp.ones((D,), jnp.float32),
                "ln2_b": jnp.zeros((D,), jnp.float32),
                "fc_w": nrm(bk[3], (D, mlp_dim)),
                "fc_b": nrm(bk[4], (mlp_dim,), 0.01),
                "proj_w": nrm(bk[5], (mlp_dim, D)),
                "proj_b": jnp.zeros((D,), jnp.float32),
            }
        )
    return params


def prepare_params(params):
    """One-time weight preprocessing (outside the per-forward path):
    bf16 MXU operands + matmul-friendly conv weight layout."""
    D = params["class_embedding"].shape[0]
    prep = {
        "conv1_w": params["conv1_w"].reshape(D, -1).T.astype(jnp.bfloat16),
        "class_embedding": params["class_embedding"].astype(jnp.float32),
        "positional_embedding": params["positional_embedding"].astype(jnp.float32),
        "ln_pre_g": params["ln_pre_g"].astype(jnp.float32),
        "ln_pre_b": params["ln_pre_b"].astype(jnp.float32),
        "blocks": [],
    }
    for blk in params["blocks"]:
        prep["blocks"].append(
            {
                "ln1_g": blk["ln1_g"].astype(jnp.float32),
                "ln1_b": blk["ln1_b"].astype(jnp.float32),
                "ln2_g": blk["ln2_g"].astype(jnp.float32),
                "ln2_b": blk["ln2_b"].astype(jnp.float32),
                "attn": {
                    "in_w": blk["attn"]["in_w"].astype(jnp.bfloat16),
                    "in_b": blk["attn"]["in_b"].astype(jnp.float32),
                    "out_w": blk["attn"]["out_w"].astype(jnp.bfloat16),
                    "out_b": blk["attn"]["out_b"].astype(jnp.float32),
                },
                "fc_w": blk["fc_w"].astype(jnp.bfloat16),
                "fc_b": blk["fc_b"].astype(jnp.float32),
                "proj_w": blk["proj_w"].astype(jnp.bfloat16),
                "proj_b": blk["proj_b"].astype(jnp.float32),
            }
        )
    return prep


# ---------------------------------- main --------------------------------------


if __name__ == "__main__":
    # Small ViT-consistent shapes, lane-friendly: 32x32 image, 8x8 patches ->
    # 16 patches + CLS = 17 tokens; width 128, 4 heads (head_dim 32), 3 blocks.
    B, C, H, W = 2, 3, 32, 32
    PATCH = 8
    D = 128
    HEADS = 4
    LAYERS = 3
    MLP = 4 * D
    L = (H // PATCH) * (W // PATCH) + 1

    key = jax.random.PRNGKey(0)
    kx, kp = jax.random.split(key)
    x = jax.random.normal(kx, (B, C, H, W), dtype=jnp.float32)
    params = prepare_params(init_params(kp, C=C, patch=PATCH, L=L, D=D,
                                        heads=HEADS, layers=LAYERS, mlp_dim=MLP))

    fwd = jax.jit(functools.partial(clip_backbone_forward, patch=PATCH,
                                    num_heads=HEADS))
    out = jax.block_until_ready(fwd(x, params))

    expected = (B, LAYERS, L - 1, D)
    assert out.shape == expected, (out.shape, expected)
    assert bool(jnp.all(jnp.isfinite(out)))
    print("KERNEL_OK")
</pallas_src>

<mosaic_0001>
module attributes {stable_mosaic.version = 11 : i64} {
  func.func @_matmul_kernel(%arg0: i32, %arg1: i32, %arg2: i32, %arg3: memref<32x192xbf16, #tpu.memory_space<vmem>>, %arg4: memref<192x128xbf16, #tpu.memory_space<vmem>>, %arg5: memref<1x128xf32, #tpu.memory_space<vmem>>, %arg6: memref<32x128xf32, #tpu.memory_space<vmem>>, %arg7: memref<32x128xf32, #tpu.memory_space<vmem>>) attributes {dimension_semantics = [#tpu.dimension_semantics<parallel>, #tpu.dimension_semantics<parallel>, #tpu.dimension_semantics<arbitrary>], iteration_bounds = array<i64: 1, 1, 1>, scalar_prefetch = 0 : i64, scratch_operands = 1 : i64, tpu.core_type = #tpu.core_type<tc>, window_params = [{transform_indices = @transform_0, window_bounds = array<i64: 32, 192>}, {transform_indices = @transform_1, window_bounds = array<i64: 192, 128>}, {transform_indices = @transform_2, window_bounds = array<i64: 1, 128>}, {transform_indices = @transform_3, window_bounds = array<i64: 32, 128>}]} {
    %c0_i32 = arith.constant 0 : i32
    %0 = arith.cmpi eq, %arg2, %c0_i32 : i32
    %1 = arith.extui %0 : i1 to i32
    %c0_i32_0 = arith.constant 0 : i32
    %2 = arith.cmpi ne, %1, %c0_i32_0 : i32
    scf.if %2 {
      %cst_10 = arith.constant 0.000000e+00 : f32
      %12 = vector.broadcast %cst_10 : f32 to vector<32x128xf32>
      %c0_11 = arith.constant 0 : index
      %c0_12 = arith.constant 0 : index
      %13 = vector.load %arg7[%c0_11, %c0_12] : memref<32x128xf32, #tpu.memory_space<vmem>>, vector<32x128xf32>
      tpu.vector_store %arg7[%c0_11, %c0_12], %12 {strides = array<i32>} : memref<32x128xf32, #tpu.memory_space<vmem>>, vector<32x128xf32>,
    } else {
    }
    %c0 = arith.constant 0 : index
    %c0_1 = arith.constant 0 : index
    %3 = vector.load %arg7[%c0, %c0_1] : memref<32x128xf32, #tpu.memory_space<vmem>>, vector<32x128xf32>
    %c0_2 = arith.constant 0 : index
    %c0_3 = arith.constant 0 : index
    %4 = vector.load %arg3[%c0_2, %c0_3] : memref<32x192xbf16, #tpu.memory_space<vmem>>, vector<32x192xbf16>
    %c0_4 = arith.constant 0 : index
    %c0_5 = arith.constant 0 : index
    %5 = vector.load %arg4[%c0_4, %c0_5] : memref<192x128xbf16, #tpu.memory_space<vmem>>, vector<192x128xbf16>
    %cst = arith.constant dense<0.000000e+00> : vector<32x128xf32>
    %6 = tpu.matmul %4, %5, %cst {dimension_numbers = #tpu.dot_dimension_numbers<[1], [0], [0], [1], [0, 0, 1, 1], [], []>} : vector<32x192xbf16>, vector<192x128xbf16>, vector<32x128xf32> -> vector<32x128xf32>
    %7 = arith.addf %3, %6 : vector<32x128xf32>
    %c0_6 = arith.constant 0 : index
    %c0_7 = arith.constant 0 : index
    %8 = vector.load %arg7[%c0_6, %c0_7] : memref<32x128xf32, #tpu.memory_space<vmem>>, vector<32x128xf32>
    tpu.vector_store %arg7[%c0_6, %c0_7], %7 {strides = array<i32>} : memref<32x128xf32, #tpu.memory_space<vmem>>, vector<32x128xf32>,
    %c0_i32_8 = arith.constant 0 : i32
    %9 = arith.cmpi eq, %arg2, %c0_i32_8 : i32
    %10 = arith.extui %9 : i1 to i32
    %c0_i32_9 = arith.constant 0 : i32
    %11 = arith.cmpi ne, %10, %c0_i32_9 : i32
    scf.if %11 {
      %c0_10 = arith.constant 0 : index
      %c0_11 = arith.constant 0 : index
      %12 = vector.load %arg7[%c0_10, %c0_11] : memref<32x128xf32, #tpu.memory_space<vmem>>, vector<32x128xf32>
      %c0_12 = arith.constant 0 : index
      %c0_13 = arith.constant 0 : index
      %13 = vector.load %arg5[%c0_12, %c0_13] : memref<1x128xf32, #tpu.memory_space<vmem>>, vector<1x128xf32>
      %14 = vector.broadcast %13 : vector<1x128xf32> to vector<32x128xf32>
      %15 = arith.addf %12, %14 : vector<32x128xf32>
      %c0_14 = arith.constant 0 : index
      %c0_15 = arith.constant 0 : index
      %16 = vector.load %arg6[%c0_14, %c0_15] : memref<32x128xf32, #tpu.memory_space<vmem>>, vector<32x128xf32>
      tpu.vector_store %arg6[%c0_14, %c0_15], %15 {strides = array<i32>} : memref<32x128xf32, #tpu.memory_space<vmem>>, vector<32x128xf32>,
    } else {
    }
    return
  }
  func.func @transform_0(%arg0: i32, %arg1: i32, %arg2: i32) -> (i32, i32) {
    %c0_i32 = arith.constant 0 : i32
    return %arg0, %arg2 : i32, i32
  }
  func.func @transform_1(%arg0: i32, %arg1: i32, %arg2: i32) -> (i32, i32) {
    %c0_i32 = arith.constant 0 : i32
    return %arg2, %arg1 : i32, i32
  }
  func.func @transform_2(%arg0: i32, %arg1: i32, %arg2: i32) -> (i32, i32) {
    %c0_i32 = arith.constant 0 : i32
    %c0_i32_0 = arith.constant 0 : i32
    return %c0_i32, %arg1 : i32, i32
  }
  func.func @transform_3(%arg0: i32, %arg1: i32, %arg2: i32) -> (i32, i32) {
    %c0_i32 = arith.constant 0 : i32
    return %arg0, %arg1 : i32, i32
  }
}

module attributes {stable_mosaic.version = 11 : i64} {
  func.func @_layernorm_kernel(%arg0: i32, %arg1: memref<34x128xbf16, #tpu.memory_space<vmem>>, %arg2: memref<1x128xf32, #tpu.memory_space<vmem>>, %arg3: memref<1x128xf32, #tpu.memory_space<vmem>>, %arg4: memref<34x128xbf16, #tpu.memory_space<vmem>>) attributes {dimension_semantics = [#tpu.dimension_semantics<parallel>], iteration_bounds = array<i64: 1>, scalar_prefetch = 0 : i64, scratch_operands = 0 : i64, tpu.core_type = #tpu.core_type<tc>, window_params = [{transform_indices = @transform_0, window_bounds = array<i64: 34, 128>}, {pipeline_mode = #tpu.pipeline_mode<synchronous>, transform_indices = @transform_1, window_bounds = array<i64: 1, 128>}, {pipeline_mode = #tpu.pipeline_mode<synchronous>, transform_indices = @transform_2, window_bounds = array<i64: 1, 128>}, {transform_indices = @transform_3, window_bounds = array<i64: 34, 128>}]} {
    %c0 = arith.constant 0 : index
    %c0_0 = arith.constant 0 : index
    %0 = vector.load %arg1[%c0, %c0_0] : memref<34x128xbf16, #tpu.memory_space<vmem>>, vector<34x128xbf16>
    %1 = arith.extf %0 : vector<34x128xbf16> to vector<34x128xf32>
    %cst = arith.constant dense<0.000000e+00> : vector<34xf32>
    %2 = vector.multi_reduction <add>, %1, %cst [1] : vector<34x128xf32> to vector<34xf32>
    %3 = vector.shape_cast %2 : vector<34xf32> to vector<34x1xf32>
    %cst_1 = arith.constant 1.280000e+02 : f32
    %4 = vector.broadcast %cst_1 : f32 to vector<34x1xf32>
    %5 = arith.divf %3, %4 : vector<34x1xf32>
    %6 = vector.broadcast %5 : vector<34x1xf32> to vector<34x128xf32>
    %7 = arith.subf %1, %6 : vector<34x128xf32>
    %8 = arith.mulf %7, %7 : vector<34x128xf32>
    %cst_2 = arith.constant dense<0.000000e+00> : vector<34xf32>
    %9 = vector.multi_reduction <add>, %8, %cst_2 [1] : vector<34x128xf32> to vector<34xf32>
    %10 = vector.shape_cast %9 : vector<34xf32> to vector<34x1xf32>
    %cst_3 = arith.constant 1.280000e+02 : f32
    %11 = vector.broadcast %cst_3 : f32 to vector<34x1xf32>
    %12 = arith.divf %10, %11 : vector<34x1xf32>
    %cst_4 = arith.constant 9.99999974E-6 : f32
    %13 = vector.broadcast %cst_4 : f32 to vector<34x1xf32>
    %14 = arith.addf %12, %13 : vector<34x1xf32>
    %15 = math.rsqrt %14 : vector<34x1xf32>
    %16 = vector.broadcast %15 : vector<34x1xf32> to vector<34x128xf32>
    %17 = arith.mulf %7, %16 : vector<34x128xf32>
    %c0_5 = arith.constant 0 : index
    %c0_6 = arith.constant 0 : index
    %18 = vector.load %arg2[%c0_5, %c0_6] : memref<1x128xf32, #tpu.memory_space<vmem>>, vector<1x128xf32>
    %19 = vector.broadcast %18 : vector<1x128xf32> to vector<34x128xf32>
    %20 = arith.mulf %17, %19 : vector<34x128xf32>
    %c0_7 = arith.constant 0 : index
    %c0_8 = arith.constant 0 : index
    %21 = vector.load %arg3[%c0_7, %c0_8] : memref<1x128xf32, #tpu.memory_space<vmem>>, vector<1x128xf32>
    %22 = vector.broadcast %21 : vector<1x128xf32> to vector<34x128xf32>
    %23 = arith.addf %20, %22 : vector<34x128xf32>
    %24 = arith.truncf %23 : vector<34x128xf32> to vector<34x128xbf16>
    %c0_9 = arith.constant 0 : index
    %c0_10 = arith.constant 0 : index
    %25 = vector.load %arg4[%c0_9, %c0_10] : memref<34x128xbf16, #tpu.memory_space<vmem>>, vector<34x128xbf16>
    tpu.vector_store %arg4[%c0_9, %c0_10], %24 {strides = array<i32>} : memref<34x128xbf16, #tpu.memory_space<vmem>>, vector<34x128xbf16>,
    return
  }
  func.func @transform_0(%arg0: i32) -> (i32, i32) {
    %c0_i32 = arith.constant 0 : i32
    %c0_i32_0 = arith.constant 0 : i32
    return %arg0, %c0_i32 : i32, i32
  }
  func.func @transform_1(%arg0: i32) -> (i32, i32) {
    %c0_i32 = arith.constant 0 : i32
    %c0_i32_0 = arith.constant 0 : i32
    %c0_i32_1 = arith.constant 0 : i32
    return %c0_i32, %c0_i32_0 : i32, i32
  }
  func.func @transform_2(%arg0: i32) -> (i32, i32) {
    %c0_i32 = arith.constant 0 : i32
    %c0_i32_0 = arith.constant 0 : i32
    %c0_i32_1 = arith.constant 0 : i32
    return %c0_i32, %c0_i32_0 : i32, i32
  }
  func.func @transform_3(%arg0: i32) -> (i32, i32) {
    %c0_i32 = arith.constant 0 : i32
    %c0_i32_0 = arith.constant 0 : i32
    return %arg0, %c0_i32 : i32, i32
  }
}

module attributes {stable_mosaic.version = 11 : i64} {
  func.func @_ln_matmul_kernel(%arg0: i32, %arg1: i32, %arg2: memref<34x128xbf16, #tpu.memory_space<vmem>>, %arg3: memref<1x128xf32, #tpu.memory_space<vmem>>, %arg4: memref<1x128xf32, #tpu.memory_space<vmem>>, %arg5: memref<128x384xbf16, #tpu.memory_space<vmem>>, %arg6: memref<1x384xf32, #tpu.memory_space<vmem>>, %arg7: memref<34x384xbf16, #tpu.memory_space<vmem>>, %arg8: memref<34x128xf32, #tpu.memory_space<vmem>>) attributes {dimension_semantics = [#tpu.dimension_semantics<parallel>, #tpu.dimension_semantics<arbitrary>], iteration_bounds = array<i64: 1, 1>, scalar_prefetch = 0 : i64, scratch_operands = 1 : i64, tpu.core_type = #tpu.core_type<tc>, window_params = [{transform_indices = @transform_0, window_bounds = array<i64: 34, 128>}, {pipeline_mode = #tpu.pipeline_mode<synchronous>, transform_indices = @transform_1, window_bounds = array<i64: 1, 128>}, {pipeline_mode = #tpu.pipeline_mode<synchronous>, transform_indices = @transform_2, window_bounds = array<i64: 1, 128>}, {transform_indices = @transform_3, window_bounds = array<i64: 128, 384>}, {transform_indices = @transform_4, window_bounds = array<i64: 1, 384>}, {transform_indices = @transform_5, window_bounds = array<i64: 34, 384>}]} {
    %c0_i32 = arith.constant 0 : i32
    %0 = arith.cmpi eq, %arg1, %c0_i32 : i32
    %1 = arith.extui %0 : i1 to i32
    %c0_i32_0 = arith.constant 0 : i32
    %2 = arith.cmpi ne, %1, %c0_i32_0 : i32
    scf.if %2 {
      %c0_8 = arith.constant 0 : index
      %c0_9 = arith.constant 0 : index
      %12 = vector.load %arg2[%c0_8, %c0_9] : memref<34x128xbf16, #tpu.memory_space<vmem>>, vector<34x128xbf16>
      %13 = arith.extf %12 : vector<34x128xbf16> to vector<34x128xf32>
      %cst_10 = arith.constant dense<0.000000e+00> : vector<34xf32>
      %14 = vector.multi_reduction <add>, %13, %cst_10 [1] : vector<34x128xf32> to vector<34xf32>
      %15 = vector.shape_cast %14 : vector<34xf32> to vector<34x1xf32>
      %cst_11 = arith.constant 1.280000e+02 : f32
      %16 = vector.broadcast %cst_11 : f32 to vector<34x1xf32>
      %17 = arith.divf %15, %16 : vector<34x1xf32>
      %18 = vector.broadcast %17 : vector<34x1xf32> to vector<34x128xf32>
      %19 = arith.subf %13, %18 : vector<34x128xf32>
      %20 = arith.mulf %19, %19 : vector<34x128xf32>
      %cst_12 = arith.constant dense<0.000000e+00> : vector<34xf32>
      %21 = vector.multi_reduction <add>, %20, %cst_12 [1] : vector<34x128xf32> to vector<34xf32>
      %22 = vector.shape_cast %21 : vector<34xf32> to vector<34x1xf32>
      %cst_13 = arith.constant 1.280000e+02 : f32
      %23 = vector.broadcast %cst_13 : f32 to vector<34x1xf32>
      %24 = arith.divf %22, %23 : vector<34x1xf32>
      %cst_14 = arith.constant 9.99999974E-6 : f32
      %25 = vector.broadcast %cst_14 : f32 to vector<34x1xf32>
      %26 = arith.addf %24, %25 : vector<34x1xf32>
      %27 = math.rsqrt %26 : vector<34x1xf32>
      %28 = vector.broadcast %27 : vector<34x1xf32> to vector<34x128xf32>
      %29 = arith.mulf %19, %28 : vector<34x128xf32>
      %c0_15 = arith.constant 0 : index
      %c0_16 = arith.constant 0 : index
      %30 = vector.load %arg3[%c0_15, %c0_16] : memref<1x128xf32, #tpu.memory_space<vmem>>, vector<1x128xf32>
      %31 = vector.broadcast %30 : vector<1x128xf32> to vector<34x128xf32>
      %32 = arith.mulf %29, %31 : vector<34x128xf32>
      %c0_17 = arith.constant 0 : index
      %c0_18 = arith.constant 0 : index
      %33 = vector.load %arg4[%c0_17, %c0_18] : memref<1x128xf32, #tpu.memory_space<vmem>>, vector<1x128xf32>
      %34 = vector.broadcast %33 : vector<1x128xf32> to vector<34x128xf32>
      %35 = arith.addf %32, %34 : vector<34x128xf32>
      %c0_19 = arith.constant 0 : index
      %c0_20 = arith.constant 0 : index
      %36 = vector.load %arg8[%c0_19, %c0_20] : memref<34x128xf32, #tpu.memory_space<vmem>>, vector<34x128xf32>
      tpu.vector_store %arg8[%c0_19, %c0_20], %35 {strides = array<i32>} : memref<34x128xf32, #tpu.memory_space<vmem>>, vector<34x128xf32>,
    } else {
    }
    %c0 = arith.constant 0 : index
    %c0_1 = arith.constant 0 : index
    %3 = vector.load %arg8[%c0, %c0_1] : memref<34x128xf32, #tpu.memory_space<vmem>>, vector<34x128xf32>
    %4 = arith.truncf %3 : vector<34x128xf32> to vector<34x128xbf16>
    %c0_2 = arith.constant 0 : index
    %c0_3 = arith.constant 0 : index
    %5 = vector.load %arg5[%c0_2, %c0_3] : memref<128x384xbf16, #tpu.memory_space<vmem>>, vector<128x384xbf16>
    %cst = arith.constant dense<0.000000e+00> : vector<34x384xf32>
    %6 = tpu.matmul %4, %5, %cst {dimension_numbers = #tpu.dot_dimension_numbers<[1], [0], [0], [1], [0, 0, 1, 1], [], []>} : vector<34x128xbf16>, vector<128x384xbf16>, vector<34x384xf32> -> vector<34x384xf32>
    %c0_4 = arith.constant 0 : index
    %c0_5 = arith.constant 0 : index
    %7 = vector.load %arg6[%c0_4, %c0_5] : memref<1x384xf32, #tpu.memory_space<vmem>>, vector<1x384xf32>
    %8 = vector.broadcast %7 : vector<1x384xf32> to vector<34x384xf32>
    %9 = arith.addf %6, %8 : vector<34x384xf32>
    %10 = arith.truncf %9 : vector<34x384xf32> to vector<34x384xbf16>
    %c0_6 = arith.constant 0 : index
    %c0_7 = arith.constant 0 : index
    %11 = vector.load %arg7[%c0_6, %c0_7] : memref<34x384xbf16, #tpu.memory_space<vmem>>, vector<34x384xbf16>
    tpu.vector_store %arg7[%c0_6, %c0_7], %10 {strides = array<i32>} : memref<34x384xbf16, #tpu.memory_space<vmem>>, vector<34x384xbf16>,
    return
  }
  func.func @transform_0(%arg0: i32, %arg1: i32) -> (i32, i32) {
    %c0_i32 = arith.constant 0 : i32
    %c0_i32_0 = arith.constant 0 : i32
    return %arg0, %c0_i32 : i32, i32
  }
  func.func @transform_1(%arg0: i32, %arg1: i32) -> (i32, i32) {
    %c0_i32 = arith.constant 0 : i32
    %c0_i32_0 = arith.constant 0 : i32
    %c0_i32_1 = arith.constant 0 : i32
    return %c0_i32, %c0_i32_0 : i32, i32
  }
  func.func @transform_2(%arg0: i32, %arg1: i32) -> (i32, i32) {
    %c0_i32 = arith.constant 0 : i32
    %c0_i32_0 = arith.constant 0 : i32
    %c0_i32_1 = arith.constant 0 : i32
    return %c0_i32, %c0_i32_0 : i32, i32
  }
  func.func @transform_3(%arg0: i32, %arg1: i32) -> (i32, i32) {
    %c0_i32 = arith.constant 0 : i32
    %c0_i32_0 = arith.constant 0 : i32
    return %c0_i32, %arg1 : i32, i32
  }
  func.func @transform_4(%arg0: i32, %arg1: i32) -> (i32, i32) {
    %c0_i32 = arith.constant 0 : i32
    %c0_i32_0 = arith.constant 0 : i32
    return %c0_i32, %arg1 : i32, i32
  }
  func.func @transform_5(%arg0: i32, %arg1: i32) -> (i32, i32) {
    %c0_i32 = arith.constant 0 : i32
    return %arg0, %arg1 : i32, i32
  }
}

module attributes {stable_mosaic.version = 11 : i64} {
  func.func @_attn_block_kernel(%arg0: i32, %arg1: memref<1x17x384xbf16, #tpu.memory_space<vmem>>, %arg2: memref<128x128xbf16, #tpu.memory_space<vmem>>, %arg3: memref<1x128xf32, #tpu.memory_space<vmem>>, %arg4: memref<1x17x128xbf16, #tpu.memory_space<vmem>>, %arg5: memref<1x17x128xbf16, #tpu.memory_space<vmem>>) attributes {dimension_semantics = [#tpu.dimension_semantics<parallel>], iteration_bounds = array<i64: 2>, scalar_prefetch = 0 : i64, scratch_operands = 0 : i64, tpu.core_type = #tpu.core_type<tc>, window_params = [{transform_indices = @transform_0, window_bounds = array<i64: 1, 17, 384>}, {pipeline_mode = #tpu.pipeline_mode<synchronous>, transform_indices = @transform_1, window_bounds = array<i64: 128, 128>}, {pipeline_mode = #tpu.pipeline_mode<synchronous>, transform_indices = @transform_2, window_bounds = array<i64: 1, 128>}, {transform_indices = @transform_3, window_bounds = array<i64: 1, 17, 128>}, {transform_indices = @transform_4, window_bounds = array<i64: 1, 17, 128>}]} {
    %c0 = arith.constant 0 : index
    %c0_0 = arith.constant 0 : index
    %c0_1 = arith.constant 0 : index
    %0 = vector.load %arg1[%c0, %c0_0, %c0_1] : memref<1x17x384xbf16, #tpu.memory_space<vmem>>, vector<1x17x384xbf16>
    %1 = vector.shape_cast %0 : vector<1x17x384xbf16> to vector<17x384xbf16>
    %2 = vector.extract_strided_slice %1 {offsets = [0, 0], sizes = [17, 32], strides = [1, 1]} : vector<17x384xbf16> to vector<17x32xbf16>
    %3 = vector.extract_strided_slice %1 {offsets = [0, 128], sizes = [17, 32], strides = [1, 1]} : vector<17x384xbf16> to vector<17x32xbf16>
    %4 = vector.extract_strided_slice %1 {offsets = [0, 256], sizes = [17, 32], strides = [1, 1]} : vector<17x384xbf16> to vector<17x32xbf16>
    %cst = arith.constant dense<0.000000e+00> : vector<17x17xf32>
    %5 = tpu.matmul %2, %3, %cst {dimension_numbers = #tpu.dot_dimension_numbers<[1], [1], [0], [0], [0, 0, 1, 0], [], []>} : vector<17x32xbf16>, vector<17x32xbf16>, vector<17x17xf32> -> vector<17x17xf32>
    %cst_2 = arith.constant 0.176776692 : f32
    %6 = vector.broadcast %cst_2 : f32 to vector<17x17xf32>
    %7 = arith.mulf %5, %6 : vector<17x17xf32>
    %cst_3 = arith.constant dense<0xFF800000> : vector<17xf32>
    %8 = vector.multi_reduction <maximumf>, %7, %cst_3 [1] : vector<17x17xf32> to vector<17xf32>
    %9 = vector.shape_cast %8 : vector<17xf32> to vector<17x1xf32>
    %10 = vector.broadcast %9 : vector<17x1xf32> to vector<17x17xf32>
    %11 = arith.subf %7, %10 : vector<17x17xf32>
    %12 = math.exp %11 : vector<17x17xf32>
    %cst_4 = arith.constant dense<0.000000e+00> : vector<17xf32>
    %13 = vector.multi_reduction <add>, %12, %cst_4 [1] : vector<17x17xf32> to vector<17xf32>
    %14 = vector.shape_cast %13 : vector<17xf32> to vector<17x1xf32>
    %15 = tpu.reciprocal %14 {approx = true} : vector<17x1xf32> -> vector<17x1xf32>
    %16 = vector.broadcast %15 : vector<17x1xf32> to vector<17x17xf32>
    %17 = arith.mulf %12, %16 : vector<17x17xf32>
    %18 = arith.truncf %17 : vector<17x17xf32> to vector<17x17xbf16>
    %cst_5 = arith.constant dense<0.000000e+00> : vector<17x32xf32>
    %19 = tpu.matmul %18, %4, %cst_5 {dimension_numbers = #tpu.dot_dimension_numbers<[1], [0], [0], [1], [0, 0, 1, 1], [], []>} : vector<17x17xbf16>, vector<17x32xbf16>, vector<17x32xf32> -> vector<17x32xf32>
    %20 = vector.extract_strided_slice %1 {offsets = [0, 32], sizes = [17, 32], strides = [1, 1]} : vector<17x384xbf16> to vector<17x32xbf16>
    %21 = vector.extract_strided_slice %1 {offsets = [0, 160], sizes = [17, 32], strides = [1, 1]} : vector<17x384xbf16> to vector<17x32xbf16>
    %22 = vector.extract_strided_slice %1 {offsets = [0, 288], sizes = [17, 32], strides = [1, 1]} : vector<17x384xbf16> to vector<17x32xbf16>
    %cst_6 = arith.constant dense<0.000000e+00> : vector<17x17xf32>
    %23 = tpu.matmul %20, %21, %cst_6 {dimension_numbers = #tpu.dot_dimension_numbers<[1], [1], [0], [0], [0, 0, 1, 0], [], []>} : vector<17x32xbf16>, vector<17x32xbf16>, vector<17x17xf32> -> vector<17x17xf32>
    %cst_7 = arith.constant 0.176776692 : f32
    %24 = vector.broadcast %cst_7 : f32 to vector<17x17xf32>
    %25 = arith.mulf %23, %24 : vector<17x17xf32>
    %cst_8 = arith.constant dense<0xFF800000> : vector<17xf32>
    %26 = vector.multi_reduction <maximumf>, %25, %cst_8 [1] : vector<17x17xf32> to vector<17xf32>
    %27 = vector.shape_cast %26 : vector<17xf32> to vector<17x1xf32>
    %28 = vector.broadcast %27 : vector<17x1xf32> to vector<17x17xf32>
    %29 = arith.subf %25, %28 : vector<17x17xf32>
    %30 = math.exp %29 : vector<17x17xf32>
    %cst_9 = arith.constant dense<0.000000e+00> : vector<17xf32>
    %31 = vector.multi_reduction <add>, %30, %cst_9 [1] : vector<17x17xf32> to vector<17xf32>
    %32 = vector.shape_cast %31 : vector<17xf32> to vector<17x1xf32>
    %33 = tpu.reciprocal %32 {approx = true} : vector<17x1xf32> -> vector<17x1xf32>
    %34 = vector.broadcast %33 : vector<17x1xf32> to vector<17x17xf32>
    %35 = arith.mulf %30, %34 : vector<17x17xf32>
    %36 = arith.truncf %35 : vector<17x17xf32> to vector<17x17xbf16>
    %cst_10 = arith.constant dense<0.000000e+00> : vector<17x32xf32>
    %37 = tpu.matmul %36, %22, %cst_10 {dimension_numbers = #tpu.dot_dimension_numbers<[1], [0], [0], [1], [0, 0, 1, 1], [], []>} : vector<17x17xbf16>, vector<17x32xbf16>, vector<17x32xf32> -> vector<17x32xf32>
    %38 = vector.extract_strided_slice %1 {offsets = [0, 64], sizes = [17, 32], strides = [1, 1]} : vector<17x384xbf16> to vector<17x32xbf16>
    %39 = vector.extract_strided_slice %1 {offsets = [0, 192], sizes = [17, 32], strides = [1, 1]} : vector<17x384xbf16> to vector<17x32xbf16>
    %40 = vector.extract_strided_slice %1 {offsets = [0, 320], sizes = [17, 32], strides = [1, 1]} : vector<17x384xbf16> to vector<17x32xbf16>
    %cst_11 = arith.constant dense<0.000000e+00> : vector<17x17xf32>
    %41 = tpu.matmul %38, %39, %cst_11 {dimension_numbers = #tpu.dot_dimension_numbers<[1], [1], [0], [0], [0, 0, 1, 0], [], []>} : vector<17x32xbf16>, vector<17x32xbf16>, vector<17x17xf32> -> vector<17x17xf32>
    %cst_12 = arith.constant 0.176776692 : f32
    %42 = vector.broadcast %cst_12 : f32 to vector<17x17xf32>
    %43 = arith.mulf %41, %42 : vector<17x17xf32>
    %cst_13 = arith.constant dense<0xFF800000> : vector<17xf32>
    %44 = vector.multi_reduction <maximumf>, %43, %cst_13 [1] : vector<17x17xf32> to vector<17xf32>
    %45 = vector.shape_cast %44 : vector<17xf32> to vector<17x1xf32>
    %46 = vector.broadcast %45 : vector<17x1xf32> to vector<17x17xf32>
    %47 = arith.subf %43, %46 : vector<17x17xf32>
    %48 = math.exp %47 : vector<17x17xf32>
    %cst_14 = arith.constant dense<0.000000e+00> : vector<17xf32>
    %49 = vector.multi_reduction <add>, %48, %cst_14 [1] : vector<17x17xf32> to vector<17xf32>
    %50 = vector.shape_cast %49 : vector<17xf32> to vector<17x1xf32>
    %51 = tpu.reciprocal %50 {approx = true} : vector<17x1xf32> -> vector<17x1xf32>
    %52 = vector.broadcast %51 : vector<17x1xf32> to vector<17x17xf32>
    %53 = arith.mulf %48, %52 : vector<17x17xf32>
    %54 = arith.truncf %53 : vector<17x17xf32> to vector<17x17xbf16>
    %cst_15 = arith.constant dense<0.000000e+00> : vector<17x32xf32>
    %55 = tpu.matmul %54, %40, %cst_15 {dimension_numbers = #tpu.dot_dimension_numbers<[1], [0], [0], [1], [0, 0, 1, 1], [], []>} : vector<17x17xbf16>, vector<17x32xbf16>, vector<17x32xf32> -> vector<17x32xf32>
    %56 = vector.extract_strided_slice %1 {offsets = [0, 96], sizes = [17, 32], strides = [1, 1]} : vector<17x384xbf16> to vector<17x32xbf16>
    %57 = vector.extract_strided_slice %1 {offsets = [0, 224], sizes = [17, 32], strides = [1, 1]} : vector<17x384xbf16> to vector<17x32xbf16>
    %58 = vector.extract_strided_slice %1 {offsets = [0, 352], sizes = [17, 32], strides = [1, 1]} : vector<17x384xbf16> to vector<17x32xbf16>
    %cst_16 = arith.constant dense<0.000000e+00> : vector<17x17xf32>
    %59 = tpu.matmul %56, %57, %cst_16 {dimension_numbers = #tpu.dot_dimension_numbers<[1], [1], [0], [0], [0, 0, 1, 0], [], []>} : vector<17x32xbf16>, vector<17x32xbf16>, vector<17x17xf32> -> vector<17x17xf32>
    %cst_17 = arith.constant 0.176776692 : f32
    %60 = vector.broadcast %cst_17 : f32 to vector<17x17xf32>
    %61 = arith.mulf %59, %60 : vector<17x17xf32>
    %cst_18 = arith.constant dense<0xFF800000> : vector<17xf32>
    %62 = vector.multi_reduction <maximumf>, %61, %cst_18 [1] : vector<17x17xf32> to vector<17xf32>
    %63 = vector.shape_cast %62 : vector<17xf32> to vector<17x1xf32>
    %64 = vector.broadcast %63 : vector<17x1xf32> to vector<17x17xf32>
    %65 = arith.subf %61, %64 : vector<17x17xf32>
    %66 = math.exp %65 : vector<17x17xf32>
    %cst_19 = arith.constant dense<0.000000e+00> : vector<17xf32>
    %67 = vector.multi_reduction <add>, %66, %cst_19 [1] : vector<17x17xf32> to vector<17xf32>
    %68 = vector.shape_cast %67 : vector<17xf32> to vector<17x1xf32>
    %69 = tpu.reciprocal %68 {approx = true} : vector<17x1xf32> -> vector<17x1xf32>
    %70 = vector.broadcast %69 : vector<17x1xf32> to vector<17x17xf32>
    %71 = arith.mulf %66, %70 : vector<17x17xf32>
    %72 = arith.truncf %71 : vector<17x17xf32> to vector<17x17xbf16>
    %cst_20 = arith.constant dense<0.000000e+00> : vector<17x32xf32>
    %73 = tpu.matmul %72, %58, %cst_20 {dimension_numbers = #tpu.dot_dimension_numbers<[1], [0], [0], [1], [0, 0, 1, 1], [], []>} : vector<17x17xbf16>, vector<17x32xbf16>, vector<17x32xf32> -> vector<17x32xf32>
    %74 = tpu.concatenate %19, %37, %55, %73 in 1 : vector<17x32xf32>, vector<17x32xf32>, vector<17x32xf32>, vector<17x32xf32> -> vector<17x128xf32>
    %75 = arith.truncf %74 : vector<17x128xf32> to vector<17x128xbf16>
    %c0_21 = arith.constant 0 : index
    %c0_22 = arith.constant 0 : index
    %76 = vector.load %arg2[%c0_21, %c0_22] : memref<128x128xbf16, #tpu.memory_space<vmem>>, vector<128x128xbf16>
    %cst_23 = arith.constant dense<0.000000e+00> : vector<17x128xf32>
    %77 = tpu.matmul %75, %76, %cst_23 {dimension_numbers = #tpu.dot_dimension_numbers<[1], [0], [0], [1], [0, 0, 1, 1], [], []>} : vector<17x128xbf16>, vector<128x128xbf16>, vector<17x128xf32> -> vector<17x128xf32>
    %c0_24 = arith.constant 0 : index
    %c0_25 = arith.constant 0 : index
    %78 = vector.load %arg3[%c0_24, %c0_25] : memref<1x128xf32, #tpu.memory_space<vmem>>, vector<1x128xf32>
    %79 = vector.broadcast %78 : vector<1x128xf32> to vector<17x128xf32>
    %80 = arith.addf %77, %79 : vector<17x128xf32>
    %c0_26 = arith.constant 0 : index
    %c0_27 = arith.constant 0 : index
    %c0_28 = arith.constant 0 : index
    %81 = vector.load %arg4[%c0_26, %c0_27, %c0_28] : memref<1x17x128xbf16, #tpu.memory_space<vmem>>, vector<1x17x128xbf16>
    %82 = vector.shape_cast %81 : vector<1x17x128xbf16> to vector<17x128xbf16>
    %83 = arith.extf %82 : vector<17x128xbf16> to vector<17x128xf32>
    %84 = arith.addf %80, %83 : vector<17x128xf32>
    %85 = arith.truncf %84 : vector<17x128xf32> to vector<17x128xbf16>
    %c0_29 = arith.constant 0 : index
    %c0_30 = arith.constant 0 : index
    %c0_31 = arith.constant 0 : index
    %86 = vector.load %arg5[%c0_29, %c0_30, %c0_31] : memref<1x17x128xbf16, #tpu.memory_space<vmem>>, vector<1x17x128xbf16>
    %87 = vector.shape_cast %86 : vector<1x17x128xbf16> to vector<17x128xbf16>
    %88 = vector.shape_cast %85 : vector<17x128xbf16> to vector<1x17x128xbf16>
    tpu.vector_store %arg5[%c0_29, %c0_30, %c0_31], %88 {strides = array<i32>} : memref<1x17x128xbf16, #tpu.memory_space<vmem>>, vector<1x17x128xbf16>,
    return
  }
  func.func @transform_0(%arg0: i32) -> (i32, i32, i32) {
    %c0_i32 = arith.constant 0 : i32
    %c0_i32_0 = arith.constant 0 : i32
    %c0_i32_1 = arith.constant 0 : i32
    return %arg0, %c0_i32, %c0_i32_0 : i32, i32, i32
  }
  func.func @transform_1(%arg0: i32) -> (i32, i32) {
    %c0_i32 = arith.constant 0 : i32
    %c0_i32_0 = arith.constant 0 : i32
    %c0_i32_1 = arith.constant 0 : i32
    return %c0_i32, %c0_i32_0 : i32, i32
  }
  func.func @transform_2(%arg0: i32) -> (i32, i32) {
    %c0_i32 = arith.constant 0 : i32
    %c0_i32_0 = arith.constant 0 : i32
    %c0_i32_1 = arith.constant 0 : i32
    return %c0_i32, %c0_i32_0 : i32, i32
  }
  func.func @transform_3(%arg0: i32) -> (i32, i32, i32) {
    %c0_i32 = arith.constant 0 : i32
    %c0_i32_0 = arith.constant 0 : i32
    %c0_i32_1 = arith.constant 0 : i32
    return %arg0, %c0_i32, %c0_i32_0 : i32, i32, i32
  }
  func.func @transform_4(%arg0: i32) -> (i32, i32, i32) {
    %c0_i32 = arith.constant 0 : i32
    %c0_i32_0 = arith.constant 0 : i32
    %c0_i32_1 = arith.constant 0 : i32
    return %arg0, %c0_i32, %c0_i32_0 : i32, i32, i32
  }
}

module attributes {stable_mosaic.version = 11 : i64} {
  func.func @_ln_matmul_kernel(%arg0: i32, %arg1: i32, %arg2: memref<34x128xbf16, #tpu.memory_space<vmem>>, %arg3: memref<1x128xf32, #tpu.memory_space<vmem>>, %arg4: memref<1x128xf32, #tpu.memory_space<vmem>>, %arg5: memref<128x512xbf16, #tpu.memory_space<vmem>>, %arg6: memref<1x512xf32, #tpu.memory_space<vmem>>, %arg7: memref<34x512xbf16, #tpu.memory_space<vmem>>, %arg8: memref<34x128xf32, #tpu.memory_space<vmem>>, %arg9: memref<34x128xf32, #tpu.memory_space<vmem>>) attributes {dimension_semantics = [#tpu.dimension_semantics<parallel>, #tpu.dimension_semantics<arbitrary>], iteration_bounds = array<i64: 1, 1>, scalar_prefetch = 0 : i64, scratch_operands = 1 : i64, tpu.core_type = #tpu.core_type<tc>, window_params = [{transform_indices = @transform_0, window_bounds = array<i64: 34, 128>}, {pipeline_mode = #tpu.pipeline_mode<synchronous>, transform_indices = @transform_1, window_bounds = array<i64: 1, 128>}, {pipeline_mode = #tpu.pipeline_mode<synchronous>, transform_indices = @transform_2, window_bounds = array<i64: 1, 128>}, {transform_indices = @transform_3, window_bounds = array<i64: 128, 512>}, {transform_indices = @transform_4, window_bounds = array<i64: 1, 512>}, {transform_indices = @transform_5, window_bounds = array<i64: 34, 512>}, {transform_indices = @transform_6, window_bounds = array<i64: 34, 128>}]} {
    %c0_i32 = arith.constant 0 : i32
    %0 = arith.cmpi eq, %arg1, %c0_i32 : i32
    %1 = arith.extui %0 : i1 to i32
    %c0_i32_0 = arith.constant 0 : i32
    %2 = arith.cmpi ne, %1, %c0_i32_0 : i32
    scf.if %2 {
      %c0_10 = arith.constant 0 : index
      %c0_11 = arith.constant 0 : index
      %20 = vector.load %arg2[%c0_10, %c0_11] : memref<34x128xbf16, #tpu.memory_space<vmem>>, vector<34x128xbf16>
      %21 = arith.extf %20 : vector<34x128xbf16> to vector<34x128xf32>
      %cst_12 = arith.constant dense<0.000000e+00> : vector<34xf32>
      %22 = vector.multi_reduction <add>, %21, %cst_12 [1] : vector<34x128xf32> to vector<34xf32>
      %23 = vector.shape_cast %22 : vector<34xf32> to vector<34x1xf32>
      %cst_13 = arith.constant 1.280000e+02 : f32
      %24 = vector.broadcast %cst_13 : f32 to vector<34x1xf32>
      %25 = arith.divf %23, %24 : vector<34x1xf32>
      %26 = vector.broadcast %25 : vector<34x1xf32> to vector<34x128xf32>
      %27 = arith.subf %21, %26 : vector<34x128xf32>
      %28 = arith.mulf %27, %27 : vector<34x128xf32>
      %cst_14 = arith.constant dense<0.000000e+00> : vector<34xf32>
      %29 = vector.multi_reduction <add>, %28, %cst_14 [1] : vector<34x128xf32> to vector<34xf32>
      %30 = vector.shape_cast %29 : vector<34xf32> to vector<34x1xf32>
      %cst_15 = arith.constant 1.280000e+02 : f32
      %31 = vector.broadcast %cst_15 : f32 to vector<34x1xf32>
      %32 = arith.divf %30, %31 : vector<34x1xf32>
      %cst_16 = arith.constant 9.99999974E-6 : f32
      %33 = vector.broadcast %cst_16 : f32 to vector<34x1xf32>
      %34 = arith.addf %32, %33 : vector<34x1xf32>
      %35 = math.rsqrt %34 : vector<34x1xf32>
      %36 = vector.broadcast %35 : vector<34x1xf32> to vector<34x128xf32>
      %37 = arith.mulf %27, %36 : vector<34x128xf32>
      %c0_17 = arith.constant 0 : index
      %c0_18 = arith.constant 0 : index
      %38 = vector.load %arg3[%c0_17, %c0_18] : memref<1x128xf32, #tpu.memory_space<vmem>>, vector<1x128xf32>
      %39 = vector.broadcast %38 : vector<1x128xf32> to vector<34x128xf32>
      %40 = arith.mulf %37, %39 : vector<34x128xf32>
      %c0_19 = arith.constant 0 : index
      %c0_20 = arith.constant 0 : index
      %41 = vector.load %arg4[%c0_19, %c0_20] : memref<1x128xf32, #tpu.memory_space<vmem>>, vector<1x128xf32>
      %42 = vector.broadcast %41 : vector<1x128xf32> to vector<34x128xf32>
      %43 = arith.addf %40, %42 : vector<34x128xf32>
      %c0_21 = arith.constant 0 : index
      %c0_22 = arith.constant 0 : index
      %44 = vector.load %arg9[%c0_21, %c0_22] : memref<34x128xf32, #tpu.memory_space<vmem>>, vector<34x128xf32>
      tpu.vector_store %arg9[%c0_21, %c0_22], %43 {strides = array<i32>} : memref<34x128xf32, #tpu.memory_space<vmem>>, vector<34x128xf32>,
      %c0_23 = arith.constant 0 : index
      %c0_24 = arith.constant 0 : index
      %45 = vector.load %arg8[%c0_23, %c0_24] : memref<34x128xf32, #tpu.memory_space<vmem>>, vector<34x128xf32>
      tpu.vector_store %arg8[%c0_23, %c0_24], %43 {strides = array<i32>} : memref<34x128xf32, #tpu.memory_space<vmem>>, vector<34x128xf32>,
    } else {
    }
    %c0 = arith.constant 0 : index
    %c0_1 = arith.constant 0 : index
    %3 = vector.load %arg9[%c0, %c0_1] : memref<34x128xf32, #tpu.memory_space<vmem>>, vector<34x128xf32>
    %4 = arith.truncf %3 : vector<34x128xf32> to vector<34x128xbf16>
    %c0_2 = arith.constant 0 : index
    %c0_3 = arith.constant 0 : index
    %5 = vector.load %arg5[%c0_2, %c0_3] : memref<128x512xbf16, #tpu.memory_space<vmem>>, vector<128x512xbf16>
    %cst = arith.constant dense<0.000000e+00> : vector<34x512xf32>
    %6 = tpu.matmul %4, %5, %cst {dimension_numbers = #tpu.dot_dimension_numbers<[1], [0], [0], [1], [0, 0, 1, 1], [], []>} : vector<34x128xbf16>, vector<128x512xbf16>, vector<34x512xf32> -> vector<34x512xf32>
    %c0_4 = arith.constant 0 : index
    %c0_5 = arith.constant 0 : index
    %7 = vector.load %arg6[%c0_4, %c0_5] : memref<1x512xf32, #tpu.memory_space<vmem>>, vector<1x512xf32>
    %8 = vector.broadcast %7 : vector<1x512xf32> to vector<34x512xf32>
    %9 = arith.addf %6, %8 : vector<34x512xf32>
    %cst_6 = arith.constant 1.702000e+00 : f32
    %10 = vector.broadcast %cst_6 : f32 to vector<34x512xf32>
    %11 = arith.mulf %10, %9 : vector<34x512xf32>
    %12 = arith.negf %11 : vector<34x512xf32>
    %13 = math.exp %12 : vector<34x512xf32>
    %cst_7 = arith.constant 1.000000e+00 : f32
    %14 = vector.broadcast %cst_7 : f32 to vector<34x512xf32>
    %15 = arith.addf %14, %13 : vector<34x512xf32>
    %16 = arith.divf %14, %15 : vector<34x512xf32>
    %17 = arith.mulf %9, %16 : vector<34x512xf32>
    %18 = arith.truncf %17 : vector<34x512xf32> to vector<34x512xbf16>
    %c0_8 = arith.constant 0 : index
    %c0_9 = arith.constant 0 : index
    %19 = vector.load %arg7[%c0_8, %c0_9] : memref<34x512xbf16, #tpu.memory_space<vmem>>, vector<34x512xbf16>
    tpu.vector_store %arg7[%c0_8, %c0_9], %18 {strides = array<i32>} : memref<34x512xbf16, #tpu.memory_space<vmem>>, vector<34x512xbf16>,
    return
  }
  func.func @transform_0(%arg0: i32, %arg1: i32) -> (i32, i32) {
    %c0_i32 = arith.constant 0 : i32
    %c0_i32_0 = arith.constant 0 : i32
    return %arg0, %c0_i32 : i32, i32
  }
  func.func @transform_1(%arg0: i32, %arg1: i32) -> (i32, i32) {
    %c0_i32 = arith.constant 0 : i32
    %c0_i32_0 = arith.constant 0 : i32
    %c0_i32_1 = arith.constant 0 : i32
    return %c0_i32, %c0_i32_0 : i32, i32
  }
  func.func @transform_2(%arg0: i32, %arg1: i32) -> (i32, i32) {
    %c0_i32 = arith.constant 0 : i32
    %c0_i32_0 = arith.constant 0 : i32
    %c0_i32_1 = arith.constant 0 : i32
    return %c0_i32, %c0_i32_0 : i32, i32
  }
  func.func @transform_3(%arg0: i32, %arg1: i32) -> (i32, i32) {
    %c0_i32 = arith.constant 0 : i32
    %c0_i32_0 = arith.constant 0 : i32
    return %c0_i32, %arg1 : i32, i32
  }
  func.func @transform_4(%arg0: i32, %arg1: i32) -> (i32, i32) {
    %c0_i32 = arith.constant 0 : i32
    %c0_i32_0 = arith.constant 0 : i32
    return %c0_i32, %arg1 : i32, i32
  }
  func.func @transform_5(%arg0: i32, %arg1: i32) -> (i32, i32) {
    %c0_i32 = arith.constant 0 : i32
    return %arg0, %arg1 : i32, i32
  }
  func.func @transform_6(%arg0: i32, %arg1: i32) -> (i32, i32) {
    %c0_i32 = arith.constant 0 : i32
    %c0_i32_0 = arith.constant 0 : i32
    return %arg0, %c0_i32 : i32, i32
  }
}

module attributes {stable_mosaic.version = 11 : i64} {
  func.func @_matmul_kernel(%arg0: i32, %arg1: i32, %arg2: i32, %arg3: memref<34x512xbf16, #tpu.memory_space<vmem>>, %arg4: memref<512x128xbf16, #tpu.memory_space<vmem>>, %arg5: memref<1x128xf32, #tpu.memory_space<vmem>>, %arg6: memref<34x128xbf16, #tpu.memory_space<vmem>>, %arg7: memref<34x128xbf16, #tpu.memory_space<vmem>>, %arg8: memref<34x128xf32, #tpu.memory_space<vmem>>) attributes {dimension_semantics = [#tpu.dimension_semantics<parallel>, #tpu.dimension_semantics<parallel>, #tpu.dimension_semantics<arbitrary>], iteration_bounds = array<i64: 1, 1, 1>, scalar_prefetch = 0 : i64, scratch_operands = 1 : i64, tpu.core_type = #tpu.core_type<tc>, window_params = [{transform_indices = @transform_0, window_bounds = array<i64: 34, 512>}, {transform_indices = @transform_1, window_bounds = array<i64: 512, 128>}, {transform_indices = @transform_2, window_bounds = array<i64: 1, 128>}, {transform_indices = @transform_3, window_bounds = array<i64: 34, 128>}, {transform_indices = @transform_4, window_bounds = array<i64: 34, 128>}]} {
    %c0_i32 = arith.constant 0 : i32
    %0 = arith.cmpi eq, %arg2, %c0_i32 : i32
    %1 = arith.extui %0 : i1 to i32
    %c0_i32_0 = arith.constant 0 : i32
    %2 = arith.cmpi ne, %1, %c0_i32_0 : i32
    scf.if %2 {
      %cst_10 = arith.constant 0.000000e+00 : f32
      %12 = vector.broadcast %cst_10 : f32 to vector<34x128xf32>
      %c0_11 = arith.constant 0 : index
      %c0_12 = arith.constant 0 : index
      %13 = vector.load %arg8[%c0_11, %c0_12] : memref<34x128xf32, #tpu.memory_space<vmem>>, vector<34x128xf32>
      tpu.vector_store %arg8[%c0_11, %c0_12], %12 {strides = array<i32>} : memref<34x128xf32, #tpu.memory_space<vmem>>, vector<34x128xf32>,
    } else {
    }
    %c0 = arith.constant 0 : index
    %c0_1 = arith.constant 0 : index
    %3 = vector.load %arg8[%c0, %c0_1] : memref<34x128xf32, #tpu.memory_space<vmem>>, vector<34x128xf32>
    %c0_2 = arith.constant 0 : index
    %c0_3 = arith.constant 0 : index
    %4 = vector.load %arg3[%c0_2, %c0_3] : memref<34x512xbf16, #tpu.memory_space<vmem>>, vector<34x512xbf16>
    %c0_4 = arith.constant 0 : index
    %c0_5 = arith.constant 0 : index
    %5 = vector.load %arg4[%c0_4, %c0_5] : memref<512x128xbf16, #tpu.memory_space<vmem>>, vector<512x128xbf16>
    %cst = arith.constant dense<0.000000e+00> : vector<34x128xf32>
    %6 = tpu.matmul %4, %5, %cst {dimension_numbers = #tpu.dot_dimension_numbers<[1], [0], [0], [1], [0, 0, 1, 1], [], []>} : vector<34x512xbf16>, vector<512x128xbf16>, vector<34x128xf32> -> vector<34x128xf32>
    %7 = arith.addf %3, %6 : vector<34x128xf32>
    %c0_6 = arith.constant 0 : index
    %c0_7 = arith.constant 0 : index
    %8 = vector.load %arg8[%c0_6, %c0_7] : memref<34x128xf32, #tpu.memory_space<vmem>>, vector<34x128xf32>
    tpu.vector_store %arg8[%c0_6, %c0_7], %7 {strides = array<i32>} : memref<34x128xf32, #tpu.memory_space<vmem>>, vector<34x128xf32>,
    %c0_i32_8 = arith.constant 0 : i32
    %9 = arith.cmpi eq, %arg2, %c0_i32_8 : i32
    %10 = arith.extui %9 : i1 to i32
    %c0_i32_9 = arith.constant 0 : i32
    %11 = arith.cmpi ne, %10, %c0_i32_9 : i32
    scf.if %11 {
      %c0_10 = arith.constant 0 : index
      %c0_11 = arith.constant 0 : index
      %12 = vector.load %arg8[%c0_10, %c0_11] : memref<34x128xf32, #tpu.memory_space<vmem>>, vector<34x128xf32>
      %c0_12 = arith.constant 0 : index
      %c0_13 = arith.constant 0 : index
      %13 = vector.load %arg5[%c0_12, %c0_13] : memref<1x128xf32, #tpu.memory_space<vmem>>, vector<1x128xf32>
      %14 = vector.broadcast %13 : vector<1x128xf32> to vector<34x128xf32>
      %15 = arith.addf %12, %14 : vector<34x128xf32>
      %c0_14 = arith.constant 0 : index
      %c0_15 = arith.constant 0 : index
      %16 = vector.load %arg6[%c0_14, %c0_15] : memref<34x128xbf16, #tpu.memory_space<vmem>>, vector<34x128xbf16>
      %17 = arith.extf %16 : vector<34x128xbf16> to vector<34x128xf32>
      %18 = arith.addf %15, %17 : vector<34x128xf32>
      %19 = arith.truncf %18 : vector<34x128xf32> to vector<34x128xbf16>
      %c0_16 = arith.constant 0 : index
      %c0_17 = arith.constant 0 : index
      %20 = vector.load %arg7[%c0_16, %c0_17] : memref<34x128xbf16, #tpu.memory_space<vmem>>, vector<34x128xbf16>
      tpu.vector_store %arg7[%c0_16, %c0_17], %19 {strides = array<i32>} : memref<34x128xbf16, #tpu.memory_space<vmem>>, vector<34x128xbf16>,
    } else {
    }
    return
  }
  func.func @transform_0(%arg0: i32, %arg1: i32, %arg2: i32) -> (i32, i32) {
    %c0_i32 = arith.constant 0 : i32
    return %arg0, %arg2 : i32, i32
  }
  func.func @transform_1(%arg0: i32, %arg1: i32, %arg2: i32) -> (i32, i32) {
    %c0_i32 = arith.constant 0 : i32
    return %arg2, %arg1 : i32, i32
  }
  func.func @transform_2(%arg0: i32, %arg1: i32, %arg2: i32) -> (i32, i32) {
    %c0_i32 = arith.constant 0 : i32
    %c0_i32_0 = arith.constant 0 : i32
    return %c0_i32, %arg1 : i32, i32
  }
  func.func @transform_3(%arg0: i32, %arg1: i32, %arg2: i32) -> (i32, i32) {
    %c0_i32 = arith.constant 0 : i32
    return %arg0, %arg1 : i32, i32
  }
  func.func @transform_4(%arg0: i32, %arg1: i32, %arg2: i32) -> (i32, i32) {
    %c0_i32 = arith.constant 0 : i32
    return %arg0, %arg1 : i32, i32
  }
}

module attributes {stable_mosaic.version = 11 : i64} {
  func.func @_ln_matmul_kernel(%arg0: i32, %arg1: i32, %arg2: memref<34x128xbf16, #tpu.memory_space<vmem>>, %arg3: memref<1x128xf32, #tpu.memory_space<vmem>>, %arg4: memref<1x128xf32, #tpu.memory_space<vmem>>, %arg5: memref<128x512xbf16, #tpu.memory_space<vmem>>, %arg6: memref<1x512xf32, #tpu.memory_space<vmem>>, %arg7: memref<34x512xbf16, #tpu.memory_space<vmem>>, %arg8: memref<34x128xf32, #tpu.memory_space<vmem>>, %arg9: memref<34x128xf32, #tpu.memory_space<vmem>>) attributes {dimension_semantics = [#tpu.dimension_semantics<parallel>, #tpu.dimension_semantics<arbitrary>], iteration_bounds = array<i64: 1, 1>, scalar_prefetch = 0 : i64, scratch_operands = 1 : i64, tpu.core_type = #tpu.core_type<tc>, window_params = [{transform_indices = @transform_0, window_bounds = array<i64: 34, 128>}, {pipeline_mode = #tpu.pipeline_mode<synchronous>, transform_indices = @transform_1, window_bounds = array<i64: 1, 128>}, {pipeline_mode = #tpu.pipeline_mode<synchronous>, transform_indices = @transform_2, window_bounds = array<i64: 1, 128>}, {transform_indices = @transform_3, window_bounds = array<i64: 128, 512>}, {transform_indices = @transform_4, window_bounds = array<i64: 1, 512>}, {transform_indices = @transform_5, window_bounds = array<i64: 34, 512>}, {transform_indices = @transform_6, window_bounds = array<i64: 34, 128>}]} {
    %c0_i32 = arith.constant 0 : i32
    %0 = arith.cmpi eq, %arg1, %c0_i32 : i32
    %1 = arith.extui %0 : i1 to i32
    %c0_i32_0 = arith.constant 0 : i32
    %2 = arith.cmpi ne, %1, %c0_i32_0 : i32
    scf.if %2 {
      %c0_10 = arith.constant 0 : index
      %c0_11 = arith.constant 0 : index
      %20 = vector.load %arg2[%c0_10, %c0_11] : memref<34x128xbf16, #tpu.memory_space<vmem>>, vector<34x128xbf16>
      %21 = arith.extf %20 : vector<34x128xbf16> to vector<34x128xf32>
      %cst_12 = arith.constant dense<0.000000e+00> : vector<34xf32>
      %22 = vector.multi_reduction <add>, %21, %cst_12 [1] : vector<34x128xf32> to vector<34xf32>
      %23 = vector.shape_cast %22 : vector<34xf32> to vector<34x1xf32>
      %cst_13 = arith.constant 1.280000e+02 : f32
      %24 = vector.broadcast %cst_13 : f32 to vector<34x1xf32>
      %25 = arith.divf %23, %24 : vector<34x1xf32>
      %26 = vector.broadcast %25 : vector<34x1xf32> to vector<34x128xf32>
      %27 = arith.subf %21, %26 : vector<34x128xf32>
      %28 = arith.mulf %27, %27 : vector<34x128xf32>
      %cst_14 = arith.constant dense<0.000000e+00> : vector<34xf32>
      %29 = vector.multi_reduction <add>, %28, %cst_14 [1] : vector<34x128xf32> to vector<34xf32>
      %30 = vector.shape_cast %29 : vector<34xf32> to vector<34x1xf32>
      %cst_15 = arith.constant 1.280000e+02 : f32
      %31 = vector.broadcast %cst_15 : f32 to vector<34x1xf32>
      %32 = arith.divf %30, %31 : vector<34x1xf32>
      %cst_16 = arith.constant 9.99999974E-6 : f32
      %33 = vector.broadcast %cst_16 : f32 to vector<34x1xf32>
      %34 = arith.addf %32, %33 : vector<34x1xf32>
      %35 = math.rsqrt %34 : vector<34x1xf32>
      %36 = vector.broadcast %35 : vector<34x1xf32> to vector<34x128xf32>
      %37 = arith.mulf %27, %36 : vector<34x128xf32>
      %c0_17 = arith.constant 0 : index
      %c0_18 = arith.constant 0 : index
      %38 = vector.load %arg3[%c0_17, %c0_18] : memref<1x128xf32, #tpu.memory_space<vmem>>, vector<1x128xf32>
      %39 = vector.broadcast %38 : vector<1x128xf32> to vector<34x128xf32>
      %40 = arith.mulf %37, %39 : vector<34x128xf32>
      %c0_19 = arith.constant 0 : index
      %c0_20 = arith.constant 0 : index
      %41 = vector.load %arg4[%c0_19, %c0_20] : memref<1x128xf32, #tpu.memory_space<vmem>>, vector<1x128xf32>
      %42 = vector.broadcast %41 : vector<1x128xf32> to vector<34x128xf32>
      %43 = arith.addf %40, %42 : vector<34x128xf32>
      %c0_21 = arith.constant 0 : index
      %c0_22 = arith.constant 0 : index
      %44 = vector.load %arg9[%c0_21, %c0_22] : memref<34x128xf32, #tpu.memory_space<vmem>>, vector<34x128xf32>
      tpu.vector_store %arg9[%c0_21, %c0_22], %43 {strides = array<i32>} : memref<34x128xf32, #tpu.memory_space<vmem>>, vector<34x128xf32>,
      %c0_23 = arith.constant 0 : index
      %c0_24 = arith.constant 0 : index
      %45 = vector.load %arg8[%c0_23, %c0_24] : memref<34x128xf32, #tpu.memory_space<vmem>>, vector<34x128xf32>
      tpu.vector_store %arg8[%c0_23, %c0_24], %43 {strides = array<i32>} : memref<34x128xf32, #tpu.memory_space<vmem>>, vector<34x128xf32>,
    } else {
    }
    %c0 = arith.constant 0 : index
    %c0_1 = arith.constant 0 : index
    %3 = vector.load %arg9[%c0, %c0_1] : memref<34x128xf32, #tpu.memory_space<vmem>>, vector<34x128xf32>
    %4 = arith.truncf %3 : vector<34x128xf32> to vector<34x128xbf16>
    %c0_2 = arith.constant 0 : index
    %c0_3 = arith.constant 0 : index
    %5 = vector.load %arg5[%c0_2, %c0_3] : memref<128x512xbf16, #tpu.memory_space<vmem>>, vector<128x512xbf16>
    %cst = arith.constant dense<0.000000e+00> : vector<34x512xf32>
    %6 = tpu.matmul %4, %5, %cst {dimension_numbers = #tpu.dot_dimension_numbers<[1], [0], [0], [1], [0, 0, 1, 1], [], []>} : vector<34x128xbf16>, vector<128x512xbf16>, vector<34x512xf32> -> vector<34x512xf32>
    %c0_4 = arith.constant 0 : index
    %c0_5 = arith.constant 0 : index
    %7 = vector.load %arg6[%c0_4, %c0_5] : memref<1x512xf32, #tpu.memory_space<vmem>>, vector<1x512xf32>
    %8 = vector.broadcast %7 : vector<1x512xf32> to vector<34x512xf32>
    %9 = arith.addf %6, %8 : vector<34x512xf32>
    %cst_6 = arith.constant 1.702000e+00 : f32
    %10 = vector.broadcast %cst_6 : f32 to vector<34x512xf32>
    %11 = arith.mulf %10, %9 : vector<34x512xf32>
    %12 = arith.negf %11 : vector<34x512xf32>
    %13 = math.exp %12 : vector<34x512xf32>
    %cst_7 = arith.constant 1.000000e+00 : f32
    %14 = vector.broadcast %cst_7 : f32 to vector<34x512xf32>
    %15 = arith.addf %14, %13 : vector<34x512xf32>
    %16 = arith.divf %14, %15 : vector<34x512xf32>
    %17 = arith.mulf %9, %16 : vector<34x512xf32>
    %18 = arith.truncf %17 : vector<34x512xf32> to vector<34x512xbf16>
    %c0_8 = arith.constant 0 : index
    %c0_9 = arith.constant 0 : index
    %19 = vector.load %arg7[%c0_8, %c0_9] : memref<34x512xbf16, #tpu.memory_space<vmem>>, vector<34x512xbf16>
    tpu.vector_store %arg7[%c0_8, %c0_9], %18 {strides = array<i32>} : memref<34x512xbf16, #tpu.memory_space<vmem>>, vector<34x512xbf16>,
    return
  }
  func.func @transform_0(%arg0: i32, %arg1: i32) -> (i32, i32) {
    %c0_i32 = arith.constant 0 : i32
    %c0_i32_0 = arith.constant 0 : i32
    return %arg0, %c0_i32 : i32, i32
  }
  func.func @transform_1(%arg0: i32, %arg1: i32) -> (i32, i32) {
    %c0_i32 = arith.constant 0 : i32
    %c0_i32_0 = arith.constant 0 : i32
    %c0_i32_1 = arith.constant 0 : i32
    return %c0_i32, %c0_i32_0 : i32, i32
  }
  func.func @transform_2(%arg0: i32, %arg1: i32) -> (i32, i32) {
    %c0_i32 = arith.constant 0 : i32
    %c0_i32_0 = arith.constant 0 : i32
    %c0_i32_1 = arith.constant 0 : i32
    return %c0_i32, %c0_i32_0 : i32, i32
  }
  func.func @transform_3(%arg0: i32, %arg1: i32) -> (i32, i32) {
    %c0_i32 = arith.constant 0 : i32
    %c0_i32_0 = arith.constant 0 : i32
    return %c0_i32, %arg1 : i32, i32
  }
  func.func @transform_4(%arg0: i32, %arg1: i32) -> (i32, i32) {
    %c0_i32 = arith.constant 0 : i32
    %c0_i32_0 = arith.constant 0 : i32
    return %c0_i32, %arg1 : i32, i32
  }
  func.func @transform_5(%arg0: i32, %arg1: i32) -> (i32, i32) {
    %c0_i32 = arith.constant 0 : i32
    return %arg0, %arg1 : i32, i32
  }
  func.func @transform_6(%arg0: i32, %arg1: i32) -> (i32, i32) {
    %c0_i32 = arith.constant 0 : i32
    %c0_i32_0 = arith.constant 0 : i32
    return %arg0, %c0_i32 : i32, i32
  }
}

</mosaic_0001>

<llo_original>
// kernel: clip_backbone_forward.14
$region0: #{clip_backbone_forward.14}
  #allocation0 [shape = 'u32[]', space=smem, size = 0x4, offset = 0x4, fixed_abs, tag = 'smem constant byte address 0x4 - core index']
  #allocation1 [shape = 'u32[72,128]{1,0:T(1,128)}', space=vmem, size = 0x9000, scoped, tag = 'internal scratch']
  %s0 = inlined_call_operand.vmem [shape: bf16[34,128], index: 0, kind: input, shape index: {}]
  %s1 = inlined_call_operand.vmem [shape: f32[1,128], index: 1, kind: input, shape index: {}]
  %s2 = inlined_call_operand.vmem [shape: f32[1,128], index: 2, kind: input, shape index: {}]
  %s3 = inlined_call_operand.vmem [shape: bf16[34,128], index: 3, kind: output, shape index: {}]
  %s4 = sld [smem:[#allocation0]]
  $region22: #{clip_backbone_forward.14} parent=0
    _
  %s6 = ssub.s32 1, %s4
  %s7 = scalar_select 0, %s6, %s4
  // Predicated region
  $region2: #{clip_backbone_forward.14} parent=0 // pred_check
    _
  $region3: #{clip_backbone_forward.14} parent=0 // pred_check_branch
    %9 = sbr.rel (0) target = $region5
  $region4: #{clip_backbone_forward.14} parent=0 // pred_region
    _
  $region5: #{clip_backbone_forward.14} parent=0 // pred_fallthru
    _
  // Predicated region
  $region6: #{clip_backbone_forward.14} parent=0 // pred_check
    _
  $region7: #{clip_backbone_forward.14} parent=0 // pred_check_branch
    %11 = sbr.rel (0) target = $region9
  $region8: #{clip_backbone_forward.14} parent=0 // pred_region
    _
  $region9: #{clip_backbone_forward.14} parent=0 // pred_fallthru
    _
  // Predicated region
  $region10: #{clip_backbone_forward.14} parent=0 // pred_check
    _
  $region11: #{clip_backbone_forward.14} parent=0 // pred_check_branch
    %13 = sbr.rel (0) target = $region13
  $region12: #{clip_backbone_forward.14} parent=0 // pred_region
    _
  $region13: #{clip_backbone_forward.14} parent=0 // pred_fallthru
    _
  %v14 = vld [vmem:[%s0] sm:$0xf]
  %v15 = vld [vmem:[%s0 + $0x4] sm:$0xf]
  %v16 = vld [vmem:[%s0 + $0x8] sm:$0xf]
  %v17 = vld [vmem:[%s0 + $0xc] sm:$0xf]
  %v18 = vld [vmem:[%s0 + $0x10] sm:$0x1]
  %v19 = vunpack.c.l.bf16 %v14
  %v20 = vunpack.c.l.bf16 %v15
  %v21 = vunpack.c.l.bf16 %v16
  %v22 = vunpack.c.l.bf16 %v17
  %v23 = vunpack.c.l.bf16 %v18
  %24 = vadd.xlane.f32.xlu0 %v19
  %v25 = vpop.xlane.xlu0 %24
  %26 = vadd.xlane.f32.xlu0 %v20
  %v27 = vpop.xlane.xlu0 %26
  %28 = vadd.xlane.f32.xlu0 %v21
  %v29 = vpop.xlane.xlu0 %28
  %30 = vadd.xlane.f32.xlu0 %v22
  %v31 = vpop.xlane.xlu0 %30
  %vm32 = vcmask 1041408
  %v33 = vsel %vm32, %v23, 0.0
  %34 = vadd.xlane.f32.xlu0 %v33
  %v35 = vpop.xlane.xlu0 %34
  %v36 = vrcp.pop 128.0
  %v37 = vmul.f32 128.0, %v36
  %v38 = vsub.f32 1.0, %v37
  %v39 = vmul.f32 %v36, %v38
  %v40 = vadd.f32 %v36, %v39
  %vm41 = vweird.f32 %v36
  %v42 = vsel %vm41, %v36, %v40
  %v43 = vmul.f32 %v25, %v42
  %v44 = vmul.f32 %v27, %v42
  %v45 = vmul.f32 %v29, %v42
  %v46 = vmul.f32 %v31, %v42
  %v47 = vmul.f32 %v35, %v42
  %v48 = vsub.f32 %v19, %v43
  %v49 = vsub.f32 %v20, %v44
  %v50 = vsub.f32 %v21, %v45
  %v51 = vsub.f32 %v22, %v46
  %v52 = vsub.f32 %v23, %v47
  %v53 = vmul.f32 %v48, %v48
  %v54 = vmul.f32 %v49, %v49
  %v55 = vmul.f32 %v50, %v50
  %v56 = vmul.f32 %v51, %v51
  %v57 = vmul.f32 %v52, %v52
  %58 = vadd.xlane.f32.xlu0 %v53
  %v59 = vpop.xlane.xlu0 %58
  %60 = vadd.xlane.f32.xlu0 %v54
  %v61 = vpop.xlane.xlu0 %60
  %62 = vadd.xlane.f32.xlu0 %v55
  %v63 = vpop.xlane.xlu0 %62
  %64 = vadd.xlane.f32.xlu0 %v56
  %v65 = vpop.xlane.xlu0 %64
  %v66 = vsel %vm32, %v57, 0.0
  %67 = vadd.xlane.f32.xlu0 %v66
  %v68 = vpop.xlane.xlu0 %67
  %v69 = vmul.f32 %v59, %v42
  %v70 = vmul.f32 %v61, %v42
  %v71 = vmul.f32 %v63, %v42
  %v72 = vmul.f32 %v65, %v42
  %v73 = vmul.f32 %v68, %v42
  %v74 = vadd.f32 %v69, 1e-05
  %v75 = vadd.f32 %v70, 1e-05
  %v76 = vadd.f32 %v71, 1e-05
  %v77 = vadd.f32 %v72, 1e-05
  %v78 = vadd.f32 %v73, 1e-05
  %v79 = vrsqrt.pop %v74
  %v80 = vmul.f32 %v79, %v74
  %v81 = vmul.f32 %v80, %v79
  %v82 = vmul.f32 0.5, %v81
  %v83 = vsub.f32 1.5, %v82
  %v84 = vmul.f32 %v79, %v83
  %vm85 = vweird.f32 %v74
  %vm86 = vweird.f32 %v79
  %vm87 = vmor %vm85, %vm86
  %v88 = vsel %vm87, %v79, %v84
  %v89 = vrsqrt.pop %v75
  %v90 = vmul.f32 %v89, %v75
  %v91 = vmul.f32 %v90, %v89
  %v92 = vmul.f32 0.5, %v91
  %v93 = vsub.f32 1.5, %v92
  %v94 = vmul.f32 %v89, %v93
  %vm95 = vweird.f32 %v75
  %vm96 = vweird.f32 %v89
  %vm97 = vmor %vm95, %vm96
  %v98 = vsel %vm97, %v89, %v94
  %v99 = vrsqrt.pop %v76
  %v100 = vmul.f32 %v99, %v76
  %v101 = vmul.f32 %v100, %v99
  %v102 = vmul.f32 0.5, %v101
  %v103 = vsub.f32 1.5, %v102
  %v104 = vmul.f32 %v99, %v103
  %vm105 = vweird.f32 %v76
  %vm106 = vweird.f32 %v99
  %vm107 = vmor %vm105, %vm106
  %v108 = vsel %vm107, %v99, %v104
  %v109 = vrsqrt.pop %v77
  %v110 = vmul.f32 %v109, %v77
  %v111 = vmul.f32 %v110, %v109
  %v112 = vmul.f32 0.5, %v111
  %v113 = vsub.f32 1.5, %v112
  %v114 = vmul.f32 %v109, %v113
  %vm115 = vweird.f32 %v77
  %vm116 = vweird.f32 %v109
  %vm117 = vmor %vm115, %vm116
  %v118 = vsel %vm117, %v109, %v114
  %v119 = vrsqrt.pop %v78
  %v120 = vmul.f32 %v119, %v78
  %v121 = vmul.f32 %v120, %v119
  %v122 = vmul.f32 0.5, %v121
  %v123 = vsub.f32 1.5, %v122
  %v124 = vmul.f32 %v119, %v123
  %vm125 = vweird.f32 %v78
  %vm126 = vweird.f32 %v119
  %vm127 = vmor %vm125, %vm126
  %v128 = vsel %vm127, %v119, %v124
  %v129 = vmul.f32 %v48, %v88
  %v130 = vmul.f32 %v49, %v98
  %v131 = vmul.f32 %v50, %v108
  %v132 = vmul.f32 %v51, %v118
  %v133 = vmul.f32 %v52, %v128
  %v134 = vld [vmem:[%s1] sm:$0x1]
  %v136 = vperm.slane %v134, 0
  %v138 = vmul.f32 %v129, %v136
  %v139 = vmul.f32 %v130, %v136
  %v140 = vmul.f32 %v131, %v136
  %v141 = vmul.f32 %v132, %v136
  %v142 = vmul.f32 %v133, %v136
  %v143 = vld [vmem:[%s2] sm:$0x1]
  %v145 = vperm.slane %v143, 0
  %v147 = vadd.f32 %v138, %v145
  %v148 = vadd.f32 %v139, %v145
  %v149 = vadd.f32 %v140, %v145
  %v150 = vadd.f32 %v141, %v145
  %v151 = vadd.f32 %v142, %v145
  %v152 = vpack.c.bf16 %v147, %v147
  %v153 = vpack.c.bf16 %v148, %v148
  %v154 = vpack.c.bf16 %v149, %v149
  %v155 = vpack.c.bf16 %v150, %v150
  %v156 = vpack.c.bf16 %v151, %v151
  %157 = vst [vmem:[%s3] sm:$0xf] %v152
  %158 = vst [vmem:[%s3 + $0x4] sm:$0xf] %v153
  %159 = vst [vmem:[%s3 + $0x8] sm:$0xf] %v154
  %160 = vst [vmem:[%s3 + $0xc] sm:$0xf] %v155
  %161 = vst [vmem:[%s3 + $0x10] sm:$0x1] %v156
  // Predicated region
  $region14: #{clip_backbone_forward.14} parent=0 // pred_check
    _
  $region15: #{clip_backbone_forward.14} parent=0 // pred_check_branch
    %163 = sbr.rel (0) target = $region17
  $region16: #{clip_backbone_forward.14} parent=0 // pred_region
    _
  $region17: #{clip_backbone_forward.14} parent=0 // pred_fallthru
    _
  // Predicated region
  $region18: #{clip_backbone_forward.14} parent=0 // pred_check
    _
  $region19: #{clip_backbone_forward.14} parent=0 // pred_check_branch
    %165 = sbr.rel (0) target = $region21
  $region20: #{clip_backbone_forward.14} parent=0 // pred_region
    _
  $region21: #{clip_backbone_forward.14} parent=0 // pred_fallthru
    _

// kernel: clip_backbone_forward.13
$region0: #{clip_backbone_forward.13}
  #allocation0 [shape = 'u32[]', space=smem, size = 0x4, offset = 0x4, fixed_abs, tag = 'smem constant byte address 0x4 - core index']
  #allocation1 [shape = 'u32[72,128]{1,0:T(1,128)}', space=vmem, size = 0x9000, scoped, tag = 'internal scratch']
  #allocation2 [shape = 'f32[32,128]{1,0:T(8,128)}', space=vmem, size = 0x4000, scoped, tag = 'scratch operand']
  %s0 = inlined_call_operand.vmem [shape: bf16[32,192], index: 0, kind: input, shape index: {}]
  %s1 = inlined_call_operand.vmem [shape: bf16[192,128], index: 1, kind: input, shape index: {}]
  %s2 = inlined_call_operand.vmem [shape: f32[1,128], index: 2, kind: input, shape index: {}]
  %s3 = inlined_call_operand.vmem [shape: f32[32,128], index: 3, kind: output, shape index: {}]
  %s4 = sld [smem:[#allocation0]]
  $region30: #{clip_backbone_forward.13} parent=0
    _
  %s6 = ssub.s32 1, %s4
  %s7 = scalar_select 0, %s6, %s4
  // Predicated region
  $region2: #{clip_backbone_forward.13} parent=0 // pred_check
    _
  $region3: #{clip_backbone_forward.13} parent=0 // pred_check_branch
    %9 = sbr.rel (0) target = $region5
  $region4: #{clip_backbone_forward.13} parent=0 // pred_region
    _
  $region5: #{clip_backbone_forward.13} parent=0 // pred_fallthru
    _
  // Predicated region
  $region6: #{clip_backbone_forward.13} parent=0 // pred_check
    _
  $region7: #{clip_backbone_forward.13} parent=0 // pred_check_branch
    %11 = sbr.rel (0) target = $region9
  $region8: #{clip_backbone_forward.13} parent=0 // pred_region
    _
  $region9: #{clip_backbone_forward.13} parent=0 // pred_fallthru
    _
  // Predicated region
  $region10: #{clip_backbone_forward.13} parent=0 // pred_check
    _
  $region11: #{clip_backbone_forward.13} parent=0 // pred_check_branch
    %13 = sbr.rel (0) target = $region13
  $region12: #{clip_backbone_forward.13} parent=0 // pred_region
    _
  $region13: #{clip_backbone_forward.13} parent=0 // pred_fallthru
    _
  %p15 = scmp.eq.s32.totalorder 0, 0
  // Predicated region
  $region14: #{clip_backbone_forward.13} parent=0 // pred_check
    %p16 = pneg %p15
  $region15: #{clip_backbone_forward.13} parent=0 // pred_check_branch
    %18 = sbr.rel (%p16) target = $region17
  $region16: #{clip_backbone_forward.13} parent=0 // pred_region
    %19 = vst [vmem:[#allocation2] sm:$0xff] 0.0
    %20 = vst [vmem:[#allocation2 + $0x8] sm:$0xff] 0.0
    %21 = vst [vmem:[#allocation2 + $0x10] sm:$0xff] 0.0
    %22 = vst [vmem:[#allocation2 + $0x18] sm:$0xff] 0.0
  $region17: #{clip_backbone_forward.13} parent=0 // pred_fallthru
    _
  %v23 = vld [vmem:[#allocation2] sm:$0xff]
  %v24 = vld [vmem:[#allocation2 + $0x8] sm:$0xff]
  %v25 = vld [vmem:[#allocation2 + $0x10] sm:$0xff]
  %v26 = vld [vmem:[#allocation2 + $0x18] sm:$0xff]
  %v27 = vld [vmem:[%s0] sm:$0xff]
  %v28 = vld [vmem:[%s0 + $0x8] sm:$0xff]
  %v29 = vld [vmem:[%s0 + $0x10] sm:$0xff]
  %v30 = vld [vmem:[%s0 + $0x18] sm:$0xff]
  %v31 = vld [vmem:[%s1] sm:$0xf]
  %v32 = vld [vmem:[%s1 + $0x4] sm:$0xf]
  %v33 = vld [vmem:[%s1 + $0x8] sm:$0xf]
  %v34 = vld [vmem:[%s1 + $0xc] sm:$0xf]
  %v35 = vld [vmem:[%s1 + $0x10] sm:$0xf]
  %v36 = vld [vmem:[%s1 + $0x14] sm:$0xf]
  %v37 = vld [vmem:[%s1 + $0x18] sm:$0xf]
  %v38 = vld [vmem:[%s1 + $0x1c] sm:$0xf]
  %v39 = vld [vmem:[%s1 + $0x20] sm:$0xf]
  %v40 = vld [vmem:[%s1 + $0x24] sm:$0xf]
  %v41 = vld [vmem:[%s1 + $0x28] sm:$0xf]
  %v42 = vld [vmem:[%s1 + $0x2c] sm:$0xf]
  %v43 = vld [vmem:[%s1 + $0x30] sm:$0xf]
  %v44 = vld [vmem:[%s1 + $0x34] sm:$0xf]
  %v45 = vld [vmem:[%s1 + $0x38] sm:$0xf]
  %v46 = vld [vmem:[%s1 + $0x3c] sm:$0xf]
  %v47 = vld [vmem:[%s1 + $0x40] sm:$0xf]
  %v48 = vld [vmem:[%s1 + $0x44] sm:$0xf]
  %v49 = vld [vmem:[%s1 + $0x48] sm:$0xf]
  %v50 = vld [vmem:[%s1 + $0x4c] sm:$0xf]
  %v51 = vld [vmem:[%s1 + $0x50] sm:$0xf]
  %v52 = vld [vmem:[%s1 + $0x54] sm:$0xf]
  %v53 = vld [vmem:[%s1 + $0x58] sm:$0xf]
  %v54 = vld [vmem:[%s1 + $0x5c] sm:$0xf]
  %v59 = vunpack.c.l.b16 %v27
  %v60 = vunpack.c.h.b16 %v27
  %v61 = vunpack.c.l.b16 %v28
  %v62 = vunpack.c.h.b16 %v28
  %v63 = vunpack.c.l.b16 %v29
  %v64 = vunpack.c.h.b16 %v29
  %v65 = vunpack.c.l.b16 %v30
  %v66 = vunpack.c.h.b16 %v30
  %v67 = vpack.c.b16 %v61, %v59
  %v68 = vpack.c.b16 %v62, %v60
  %v69 = vpack.c.b16 %v65, %v63
  %v70 = vpack.c.b16 %v66, %v64
  %v97 = vunpack.c.l.b16 %v31
  %v98 = vunpack.c.l.b16 %v32
  %v99 = vunpack.c.l.b16 %v33
  %v100 = vunpack.c.l.b16 %v34
  %v101 = vunpack.c.l.b16 %v35
  %v102 = vunpack.c.l.b16 %v36
  %v103 = vunpack.c.l.b16 %v37
  %v104 = vunpack.c.l.b16 %v38
  %v105 = vunpack.c.l.b16 %v39
  %v106 = vunpack.c.l.b16 %v40
  %v107 = vunpack.c.l.b16 %v41
  %v108 = vunpack.c.l.b16 %v42
  %v109 = vunpack.c.l.b16 %v43
  %v110 = vunpack.c.l.b16 %v44
  %v111 = vunpack.c.l.b16 %v45
  %v112 = vunpack.c.l.b16 %v46
  %v113 = vunpack.c.l.b16 %v47
  %v114 = vunpack.c.l.b16 %v48
  %v115 = vunpack.c.l.b16 %v49
  %v116 = vunpack.c.l.b16 %v50
  %v117 = vunpack.c.l.b16 %v51
  %v118 = vunpack.c.l.b16 %v52
  %v119 = vunpack.c.l.b16 %v53
  %v120 = vunpack.c.l.b16 %v54
  %v121 = vpack.c.b16 %v98, %v97
  %v122 = vpack.c.b16 %v100, %v99
  %v123 = vpack.c.b16 %v102, %v101
  %v124 = vpack.c.b16 %v104, %v103
  %v125 = vpack.c.b16 %v106, %v105
  %v126 = vpack.c.b16 %v108, %v107
  %v127 = vpack.c.b16 %v110, %v109
  %v128 = vpack.c.b16 %v112, %v111
  %v129 = vpack.c.b16 %v114, %v113
  %v130 = vpack.c.b16 %v116, %v115
  %v131 = vpack.c.b16 %v118, %v117
  %v132 = vpack.c.b16 %v120, %v119
  %vm145 = vcmask 523264
  %v147 = vsel %vm145, %v68, 0
  %v150 = vsel %vm145, %v70, 0
  %152 = vmatpush.bf16.msra.mxu0 %v128
  %153 = vmatpush.bf16.msra.mxu0 %v127
  %154 = vmatpush.bf16.msra.mxu0 %v126
  %155 = vmatpush.bf16.msra.mxu0 %v125
  %156 = vmatpush.bf16.msra.mxu0 %v124
  %157 = vmatpush.bf16.msra.mxu0 %v123
  %158 = vmatpush.bf16.msra.mxu0 %v122
  %159 = vmatpush.bf16.msra.mxu0 %v121
  %160 = vmatmul.bf16.gmra.mxu0 %v67
  %v161 = vpop.f32.mrf.mxu0
  %v162 = vadd.f32 0.0, %v161
  %v163 = vpop.f32.mrf.mxu0
  %v164 = vadd.f32 0.0, %v163
  %165 = vmatmul.bf16.gmra.mxu0 %v69
  %v166 = vpop.f32.mrf.mxu0
  %v167 = vadd.f32 0.0, %v166
  %v168 = vpop.f32.mrf.mxu0
  %v169 = vadd.f32 0.0, %v168
  %170 = vdwg.mxu0
  %171 = vmatpush.bf16.msra.mxu0 0
  %172 = vmatpush.bf16.msra.mxu0 0
  %173 = vmatpush.bf16.msra.mxu0 0
  %174 = vmatpush.bf16.msra.mxu0 0
  %175 = vmatpush.bf16.msra.mxu0 %v132
  %176 = vmatpush.bf16.msra.mxu0 %v131
  %177 = vmatpush.bf16.msra.mxu0 %v130
  %178 = vmatpush.bf16.msra.mxu0 %v129
  %179 = vmatmul.bf16.gmra.mxu0 %v147
  %v180 = vpop.f32.mrf.mxu0
  %v181 = vadd.f32 %v162, %v180
  %v182 = vpop.f32.mrf.mxu0
  %v183 = vadd.f32 %v164, %v182
  %184 = vmatmul.bf16.gmra.mxu0 %v150
  %v185 = vpop.f32.mrf.mxu0
  %v186 = vadd.f32 %v167, %v185
  %v187 = vpop.f32.mrf.mxu0
  %v188 = vadd.f32 %v169, %v187
  %189 = vdwg.mxu0
  %v190 = vadd.f32 %v23, %v181
  %v191 = vadd.f32 %v24, %v183
  %v192 = vadd.f32 %v25, %v186
  %v193 = vadd.f32 %v26, %v188
  %194 = vst [vmem:[#allocation2] sm:$0xff] %v190
  %195 = vst [vmem:[#allocation2 + $0x8] sm:$0xff] %v191
  %196 = vst [vmem:[#allocation2 + $0x10] sm:$0xff] %v192
  %197 = vst [vmem:[#allocation2 + $0x18] sm:$0xff] %v193
  // Predicated region
  $region18: #{clip_backbone_forward.13} parent=0 // pred_check
    %p198 = pneg %p15
  $region19: #{clip_backbone_forward.13} parent=0 // pred_check_branch
    %200 = sbr.rel (%p198) target = $region21
  $region20: #{clip_backbone_forward.13} parent=0 // pred_region
    %v201 = vld [vmem:[#allocation2] sm:$0xff]
    %v202 = vld [vmem:[#allocation2 + $0x8] sm:$0xff]
    %v203 = vld [vmem:[#allocation2 + $0x10] sm:$0xff]
    %v204 = vld [vmem:[#allocation2 + $0x18] sm:$0xff]
    %v205 = vld [vmem:[%s2] sm:$0x1]
    %v207 = vperm.slane %v205, 0
    %v209 = vadd.f32 %v201, %v207
    %v210 = vadd.f32 %v202, %v207
    %v211 = vadd.f32 %v203, %v207
    %v212 = vadd.f32 %v204, %v207
    %213 = vst [vmem:[%s3] sm:$0xff] %v209
    %214 = vst [vmem:[%s3 + $0x8] sm:$0xff] %v210
    %215 = vst [vmem:[%s3 + $0x10] sm:$0xff] %v211
    %216 = vst [vmem:[%s3 + $0x18] sm:$0xff] %v212
  $region21: #{clip_backbone_forward.13} parent=0 // pred_fallthru
    _
  // Predicated region
  $region22: #{clip_backbone_forward.13} parent=0 // pred_check
    _
  $region23: #{clip_backbone_forward.13} parent=0 // pred_check_branch
    %218 = sbr.rel (0) target = $region25
  $region24: #{clip_backbone_forward.13} parent=0 // pred_region
    _
  $region25: #{clip_backbone_forward.13} parent=0 // pred_fallthru
    _
  // Predicated region
  $region26: #{clip_backbone_forward.13} parent=0 // pred_check
    _
  $region27: #{clip_backbone_forward.13} parent=0 // pred_check_branch
    %220 = sbr.rel (0) target = $region29
  $region28: #{clip_backbone_forward.13} parent=0 // pred_region
    _
  $region29: #{clip_backbone_forward.13} parent=0 // pred_fallthru
    _

// kernel: clip_backbone_forward.15
$region0: #{clip_backbone_forward.15}
  #allocation0 [shape = 'u32[]', space=smem, size = 0x4, offset = 0x4, fixed_abs, tag = 'smem constant byte address 0x4 - core index']
  #allocation1 [shape = 'u32[72,128]{1,0:T(1,128)}', space=vmem, size = 0x9000, scoped, tag = 'internal scratch']
  #allocation2 [shape = 'f32[34,128]{1,0:T(8,128)}', space=vmem, size = 0x5000, scoped, tag = 'scratch operand']
  %s0 = inlined_call_operand.vmem [shape: bf16[34,128], index: 0, kind: input, shape index: {}]
  %s1 = inlined_call_operand.vmem [shape: f32[1,128], index: 1, kind: input, shape index: {}]
  %s2 = inlined_call_operand.vmem [shape: f32[1,128], index: 2, kind: input, shape index: {}]
  %s3 = inlined_call_operand.vmem [shape: bf16[128,384], index: 3, kind: input, shape index: {}]
  %s4 = inlined_call_operand.vmem [shape: f32[1,384], index: 4, kind: input, shape index: {}]
  %s5 = inlined_call_operand.vmem [shape: bf16[34,384], index: 5, kind: output, shape index: {}]
  %s6 = sld [smem:[#allocation0]]
  $region34: #{clip_backbone_forward.15} parent=0
    _
  %s8 = ssub.s32 1, %s6
  %s9 = scalar_select 0, %s8, %s6
  // Predicated region
  $region2: #{clip_backbone_forward.15} parent=0 // pred_check
    _
  $region3: #{clip_backbone_forward.15} parent=0 // pred_check_branch
    %11 = sbr.rel (0) target = $region5
  $region4: #{clip_backbone_forward.15} parent=0 // pred_region
    _
  $region5: #{clip_backbone_forward.15} parent=0 // pred_fallthru
    _
  // Predicated region
  $region6: #{clip_backbone_forward.15} parent=0 // pred_check
    _
  $region7: #{clip_backbone_forward.15} parent=0 // pred_check_branch
    %13 = sbr.rel (0) target = $region9
  $region8: #{clip_backbone_forward.15} parent=0 // pred_region
    _
  $region9: #{clip_backbone_forward.15} parent=0 // pred_fallthru
    _
  // Predicated region
  $region10: #{clip_backbone_forward.15} parent=0 // pred_check
    _
  $region11: #{clip_backbone_forward.15} parent=0 // pred_check_branch
    %15 = sbr.rel (0) target = $region13
  $region12: #{clip_backbone_forward.15} parent=0 // pred_region
    _
  $region13: #{clip_backbone_forward.15} parent=0 // pred_fallthru
    _
  // Predicated region
  $region14: #{clip_backbone_forward.15} parent=0 // pred_check
    _
  $region15: #{clip_backbone_forward.15} parent=0 // pred_check_branch
    %17 = sbr.rel (0) target = $region17
  $region16: #{clip_backbone_forward.15} parent=0 // pred_region
    _
  $region17: #{clip_backbone_forward.15} parent=0 // pred_fallthru
    _
  // Predicated region
  $region18: #{clip_backbone_forward.15} parent=0 // pred_check
    _
  $region19: #{clip_backbone_forward.15} parent=0 // pred_check_branch
    %19 = sbr.rel (0) target = $region21
  $region20: #{clip_backbone_forward.15} parent=0 // pred_region
    _
  $region21: #{clip_backbone_forward.15} parent=0 // pred_fallthru
    _
  %p20 = scmp.eq.s32.totalorder 0, 0
  // Predicated region
  $region22: #{clip_backbone_forward.15} parent=0 // pred_check
    %p21 = pneg %p20
  $region23: #{clip_backbone_forward.15} parent=0 // pred_check_branch
    %23 = sbr.rel (%p21) target = $region25
  $region24: #{clip_backbone_forward.15} parent=0 // pred_region
    %v24 = vld [vmem:[%s0] sm:$0xf]
    %v25 = vld [vmem:[%s0 + $0x4] sm:$0xf]
    %v26 = vld [vmem:[%s0 + $0x8] sm:$0xf]
    %v27 = vld [vmem:[%s0 + $0xc] sm:$0xf]
    %v28 = vld [vmem:[%s0 + $0x10] sm:$0x1]
    %v29 = vunpack.c.l.bf16 %v24
    %v30 = vunpack.c.l.bf16 %v25
    %v31 = vunpack.c.l.bf16 %v26
    %v32 = vunpack.c.l.bf16 %v27
    %v33 = vunpack.c.l.bf16 %v28
    %34 = vadd.xlane.f32.xlu0 %v29
    %v35 = vpop.xlane.xlu0 %34
    %36 = vadd.xlane.f32.xlu0 %v30
    %v37 = vpop.xlane.xlu0 %36
    %38 = vadd.xlane.f32.xlu0 %v31
    %v39 = vpop.xlane.xlu0 %38
    %40 = vadd.xlane.f32.xlu0 %v32
    %v41 = vpop.xlane.xlu0 %40
    %vm42 = vcmask 1041408
    %v43 = vsel %vm42, %v33, 0.0
    %44 = vadd.xlane.f32.xlu0 %v43
    %v45 = vpop.xlane.xlu0 %44
    %v46 = vrcp.pop 128.0
    %v47 = vmul.f32 128.0, %v46
    %v48 = vsub.f32 1.0, %v47
    %v49 = vmul.f32 %v46, %v48
    %v50 = vadd.f32 %v46, %v49
    %vm51 = vweird.f32 %v46
    %v52 = vsel %vm51, %v46, %v50
    %v53 = vmul.f32 %v35, %v52
    %v54 = vmul.f32 %v37, %v52
    %v55 = vmul.f32 %v39, %v52
    %v56 = vmul.f32 %v41, %v52
    %v57 = vmul.f32 %v45, %v52
    %v58 = vsub.f32 %v29, %v53
    %v59 = vsub.f32 %v30, %v54
    %v60 = vsub.f32 %v31, %v55
    %v61 = vsub.f32 %v32, %v56
    %v62 = vsub.f32 %v33, %v57
    %v63 = vmul.f32 %v58, %v58
    %v64 = vmul.f32 %v59, %v59
    %v65 = vmul.f32 %v60, %v60
    %v66 = vmul.f32 %v61, %v61
    %v67 = vmul.f32 %v62, %v62
    %68 = vadd.xlane.f32.xlu0 %v63
    %v69 = vpop.xlane.xlu0 %68
    %70 = vadd.xlane.f32.xlu0 %v64
    %v71 = vpop.xlane.xlu0 %70
    %72 = vadd.xlane.f32.xlu0 %v65
    %v73 = vpop.xlane.xlu0 %72
    %74 = vadd.xlane.f32.xlu0 %v66
    %v75 = vpop.xlane.xlu0 %74
    %v76 = vsel %vm42, %v67, 0.0
    %77 = vadd.xlane.f32.xlu0 %v76
    %v78 = vpop.xlane.xlu0 %77
    %v79 = vmul.f32 %v69, %v52
    %v80 = vmul.f32 %v71, %v52
    %v81 = vmul.f32 %v73, %v52
    %v82 = vmul.f32 %v75, %v52
    %v83 = vmul.f32 %v78, %v52
    %v84 = vadd.f32 %v79, 1e-05
    %v85 = vadd.f32 %v80, 1e-05
    %v86 = vadd.f32 %v81, 1e-05
    %v87 = vadd.f32 %v82, 1e-05
    %v88 = vadd.f32 %v83, 1e-05
    %v89 = vrsqrt.pop %v84
    %v90 = vmul.f32 %v89, %v84
    %v91 = vmul.f32 %v90, %v89
    %v92 = vmul.f32 0.5, %v91
    %v93 = vsub.f32 1.5, %v92
    %v94 = vmul.f32 %v89, %v93
    %vm95 = vweird.f32 %v84
    %vm96 = vweird.f32 %v89
    %vm97 = vmor %vm95, %vm96
    %v98 = vsel %vm97, %v89, %v94
    %v99 = vrsqrt.pop %v85
    %v100 = vmul.f32 %v99, %v85
    %v101 = vmul.f32 %v100, %v99
    %v102 = vmul.f32 0.5, %v101
    %v103 = vsub.f32 1.5, %v102
    %v104 = vmul.f32 %v99, %v103
    %vm105 = vweird.f32 %v85
    %vm106 = vweird.f32 %v99
    %vm107 = vmor %vm105, %vm106
    %v108 = vsel %vm107, %v99, %v104
    %v109 = vrsqrt.pop %v86
    %v110 = vmul.f32 %v109, %v86
    %v111 = vmul.f32 %v110, %v109
    %v112 = vmul.f32 0.5, %v111
    %v113 = vsub.f32 1.5, %v112
    %v114 = vmul.f32 %v109, %v113
    %vm115 = vweird.f32 %v86
    %vm116 = vweird.f32 %v109
    %vm117 = vmor %vm115, %vm116
    %v118 = vsel %vm117, %v109, %v114
    %v119 = vrsqrt.pop %v87
    %v120 = vmul.f32 %v119, %v87
    %v121 = vmul.f32 %v120, %v119
    %v122 = vmul.f32 0.5, %v121
    %v123 = vsub.f32 1.5, %v122
    %v124 = vmul.f32 %v119, %v123
    %vm125 = vweird.f32 %v87
    %vm126 = vweird.f32 %v119
    %vm127 = vmor %vm125, %vm126
    %v128 = vsel %vm127, %v119, %v124
    %v129 = vrsqrt.pop %v88
    %v130 = vmul.f32 %v129, %v88
    %v131 = vmul.f32 %v130, %v129
    %v132 = vmul.f32 0.5, %v131
    %v133 = vsub.f32 1.5, %v132
    %v134 = vmul.f32 %v129, %v133
    %vm135 = vweird.f32 %v88
    %vm136 = vweird.f32 %v129
    %vm137 = vmor %vm135, %vm136
    %v138 = vsel %vm137, %v129, %v134
    %v139 = vmul.f32 %v58, %v98
    %v140 = vmul.f32 %v59, %v108
    %v141 = vmul.f32 %v60, %v118
    %v142 = vmul.f32 %v61, %v128
    %v143 = vmul.f32 %v62, %v138
    %v144 = vld [vmem:[%s1] sm:$0x1]
    %v146 = vperm.slane %v144, 0
    %v148 = vmul.f32 %v139, %v146
    %v149 = vmul.f32 %v140, %v146
    %v150 = vmul.f32 %v141, %v146
    %v151 = vmul.f32 %v142, %v146
    %v152 = vmul.f32 %v143, %v146
    %v153 = vld [vmem:[%s2] sm:$0x1]
    %v155 = vperm.slane %v153, 0
    %v157 = vadd.f32 %v148, %v155
    %v158 = vadd.f32 %v149, %v155
    %v159 = vadd.f32 %v150, %v155
    %v160 = vadd.f32 %v151, %v155
    %v161 = vadd.f32 %v152, %v155
    %162 = vst [vmem:[#allocation2] sm:$0xff] %v157
    %163 = vst [vmem:[#allocation2 + $0x8] sm:$0xff] %v158
    %164 = vst [vmem:[#allocation2 + $0x10] sm:$0xff] %v159
    %165 = vst [vmem:[#allocation2 + $0x18] sm:$0xff] %v160
    %166 = vst [vmem:[#allocation2 + $0x20] sm:$0x3] %v161
  $region25: #{clip_backbone_forward.15} parent=0 // pred_fallthru
    _
  %v167 = vld [vmem:[#allocation2] sm:$0xff]
  %v168 = vld [vmem:[#allocation2 + $0x8] sm:$0xff]
  %v169 = vld [vmem:[#allocation2 + $0x10] sm:$0xff]
  %v170 = vld [vmem:[#allocation2 + $0x18] sm:$0xff]
  %v171 = vld [vmem:[#allocation2 + $0x20] sm:$0x3]
  %v172 = vpack.c.bf16 %v168, %v167
  %v173 = vpack.c.bf16 %v170, %v169
  %v174 = vpack.c.bf16 %v171, %v171
  %v175 = vld [vmem:[%s3] sm:$0xff]
  %v176 = vld [vmem:[%s3 + $0x8] sm:$0xf]
  %v177 = vld [vmem:[%s3 + $0xc] sm:$0xff]
  %v178 = vld [vmem:[%s3 + $0x14] sm:$0xf]
  %v179 = vld [vmem:[%s3 + $0x18] sm:$0xff]
  %v180 = vld [vmem:[%s3 + $0x20] sm:$0xf]
  %v181 = vld [vmem:[%s3 + $0x24] sm:$0xff]
  %v182 = vld [vmem:[%s3 + $0x2c] sm:$0xf]
  %v183 = vld [vmem:[%s3 + $0x30] sm:$0xff]
  %v184 = vld [vmem:[%s3 + $0x38] sm:$0xf]
  %v185 = vld [vmem:[%s3 + $0x3c] sm:$0xff]
  %v186 = vld [vmem:[%s3 + $0x44] sm:$0xf]
  %v187 = vld [vmem:[%s3 + $0x48] sm:$0xff]
  %v188 = vld [vmem:[%s3 + $0x50] sm:$0xf]
  %v189 = vld [vmem:[%s3 + $0x54] sm:$0xff]
  %v190 = vld [vmem:[%s3 + $0x5c] sm:$0xf]
  %v191 = vld [vmem:[%s3 + $0x60] sm:$0xff]
  %v192 = vld [vmem:[%s3 + $0x68] sm:$0xf]
  %v193 = vld [vmem:[%s3 + $0x6c] sm:$0xff]
  %v194 = vld [vmem:[%s3 + $0x74] sm:$0xf]
  %v195 = vld [vmem:[%s3 + $0x78] sm:$0xff]
  %v196 = vld [vmem:[%s3 + $0x80] sm:$0xf]
  %v197 = vld [vmem:[%s3 + $0x84] sm:$0xff]
  %v198 = vld [vmem:[%s3 + $0x8c] sm:$0xf]
  %v199 = vld [vmem:[%s3 + $0x90] sm:$0xff]
  %v200 = vld [vmem:[%s3 + $0x98] sm:$0xf]
  %v201 = vld [vmem:[%s3 + $0x9c] sm:$0xff]
  %v202 = vld [vmem:[%s3 + $0xa4] sm:$0xf]
  %v203 = vld [vmem:[%s3 + $0xa8] sm:$0xff]
  %v204 = vld [vmem:[%s3 + $0xb0] sm:$0xf]
  %v205 = vld [vmem:[%s3 + $0xb4] sm:$0xff]
  %v206 = vld [vmem:[%s3 + $0xbc] sm:$0xf]
  %v207 = vld [vmem:[%s4] sm:$0x7]
  %v209 = vperm.slane %v207, 0
  %v210 = vperm.slane %v207, 1
  %v211 = vperm.slane %v207, 2
  %v247 = vunpack.c.l.b16 %v175
  %v248 = vunpack.c.h.b16 %v175
  %v249 = vunpack.c.l.b16 %v176
  %v250 = vunpack.c.l.b16 %v177
  %v251 = vunpack.c.h.b16 %v177
  %v252 = vunpack.c.l.b16 %v178
  %v253 = vunpack.c.l.b16 %v179
  %v254 = vunpack.c.h.b16 %v179
  %v255 = vunpack.c.l.b16 %v180
  %v256 = vunpack.c.l.b16 %v181
  %v257 = vunpack.c.h.b16 %v181
  %v258 = vunpack.c.l.b16 %v182
  %v259 = vunpack.c.l.b16 %v183
  %v260 = vunpack.c.h.b16 %v183
  %v261 = vunpack.c.l.b16 %v184
  %v262 = vunpack.c.l.b16 %v185
  %v263 = vunpack.c.h.b16 %v185
  %v264 = vunpack.c.l.b16 %v186
  %v265 = vunpack.c.l.b16 %v187
  %v266 = vunpack.c.h.b16 %v187
  %v267 = vunpack.c.l.b16 %v188
  %v268 = vunpack.c.l.b16 %v189
  %v269 = vunpack.c.h.b16 %v189
  %v270 = vunpack.c.l.b16 %v190
  %v271 = vunpack.c.l.b16 %v191
  %v272 = vunpack.c.h.b16 %v191
  %v273 = vunpack.c.l.b16 %v192
  %v274 = vunpack.c.l.b16 %v193
  %v275 = vunpack.c.h.b16 %v193
  %v276 = vunpack.c.l.b16 %v194
  %v277 = vunpack.c.l.b16 %v195
  %v278 = vunpack.c.h.b16 %v195
  %v279 = vunpack.c.l.b16 %v196
  %v280 = vunpack.c.l.b16 %v197
  %v281 = vunpack.c.h.b16 %v197
  %v282 = vunpack.c.l.b16 %v198
  %v283 = vunpack.c.l.b16 %v199
  %v284 = vunpack.c.h.b16 %v199
  %v285 = vunpack.c.l.b16 %v200
  %v286 = vunpack.c.l.b16 %v201
  %v287 = vunpack.c.h.b16 %v201
  %v288 = vunpack.c.l.b16 %v202
  %v289 = vunpack.c.l.b16 %v203
  %v290 = vunpack.c.h.b16 %v203
  %v291 = vunpack.c.l.b16 %v204
  %v292 = vunpack.c.l.b16 %v205
  %v293 = vunpack.c.h.b16 %v205
  %v294 = vunpack.c.l.b16 %v206
  %v295 = vpack.c.b16 %v250, %v247
  %v296 = vpack.c.b16 %v251, %v248
  %v297 = vpack.c.b16 %v252, %v249
  %v298 = vpack.c.b16 %v256, %v253
  %v299 = vpack.c.b16 %v257, %v254
  %v300 = vpack.c.b16 %v258, %v255
  %v301 = vpack.c.b16 %v262, %v259
  %v302 = vpack.c.b16 %v263, %v260
  %v303 = vpack.c.b16 %v264, %v261
  %v304 = vpack.c.b16 %v268, %v265
  %v305 = vpack.c.b16 %v269, %v266
  %v306 = vpack.c.b16 %v270, %v267
  %v307 = vpack.c.b16 %v274, %v271
  %v308 = vpack.c.b16 %v275, %v272
  %v309 = vpack.c.b16 %v276, %v273
  %v310 = vpack.c.b16 %v280, %v277
  %v311 = vpack.c.b16 %v281, %v278
  %v312 = vpack.c.b16 %v282, %v279
  %v313 = vpack.c.b16 %v286, %v283
  %v314 = vpack.c.b16 %v287, %v284
  %v315 = vpack.c.b16 %v288, %v285
  %v316 = vpack.c.b16 %v292, %v289
  %v317 = vpack.c.b16 %v293, %v290
  %v318 = vpack.c.b16 %v294, %v291
  %343 = vmatpush.bf16.msra.mxu0 %v316
  %344 = vmatpush.bf16.msra.mxu0 %v313
  %345 = vmatpush.bf16.msra.mxu0 %v310
  %346 = vmatpush.bf16.msra.mxu0 %v307
  %347 = vmatpush.bf16.msra.mxu0 %v304
  %348 = vmatpush.bf16.msra.mxu0 %v301
  %349 = vmatpush.bf16.msra.mxu0 %v298
  %350 = vmatpush.bf16.msra.mxu0 %v295
  %351 = vmatmul.bf16.gmra.mxu0 %v172
  %v352 = vpop.f32.mrf.mxu0
  %v353 = vadd.f32 %v209, %v352
  %v354 = vpop.f32.mrf.mxu0
  %v355 = vadd.f32 %v209, %v354
  %356 = vmatmul.bf16.gmra.mxu0 %v173
  %v357 = vpop.f32.mrf.mxu0
  %v358 = vadd.f32 %v209, %v357
  %v359 = vpop.f32.mrf.mxu0
  %v360 = vadd.f32 %v209, %v359
  %361 = vmatmul.bf16.gmra.mxu0 %v174
  %v362 = vpop.f32.mrf.mxu0
  %v363 = vadd.f32 %v209, %v362
  %v364 = vpop.f32.mrf.mxu0
  %365 = vdwg.mxu0
  %366 = vmatpush.bf16.msra.mxu0 %v317
  %367 = vmatpush.bf16.msra.mxu0 %v314
  %368 = vmatpush.bf16.msra.mxu0 %v311
  %369 = vmatpush.bf16.msra.mxu0 %v308
  %370 = vmatpush.bf16.msra.mxu0 %v305
  %371 = vmatpush.bf16.msra.mxu0 %v302
  %372 = vmatpush.bf16.msra.mxu0 %v299
  %373 = vmatpush.bf16.msra.mxu0 %v296
  %374 = vmatmul.bf16.gmra.mxu0 %v172
  %v375 = vpop.f32.mrf.mxu0
  %v376 = vadd.f32 %v210, %v375
  %v377 = vpop.f32.mrf.mxu0
  %v378 = vadd.f32 %v210, %v377
  %379 = vmatmul.bf16.gmra.mxu0 %v173
  %v380 = vpop.f32.mrf.mxu0
  %v381 = vadd.f32 %v210, %v380
  %v382 = vpop.f32.mrf.mxu0
  %v383 = vadd.f32 %v210, %v382
  %384 = vmatmul.bf16.gmra.mxu0 %v174
  %v385 = vpop.f32.mrf.mxu0
  %v386 = vadd.f32 %v210, %v385
  %v387 = vpop.f32.mrf.mxu0
  %388 = vdwg.mxu0
  %389 = vmatpush.bf16.msra.mxu0 %v318
  %390 = vmatpush.bf16.msra.mxu0 %v315
  %391 = vmatpush.bf16.msra.mxu0 %v312
  %392 = vmatpush.bf16.msra.mxu0 %v309
  %393 = vmatpush.bf16.msra.mxu0 %v306
  %394 = vmatpush.bf16.msra.mxu0 %v303
  %395 = vmatpush.bf16.msra.mxu0 %v300
  %396 = vmatpush.bf16.msra.mxu0 %v297
  %397 = vmatmul.bf16.gmra.mxu0 %v172
  %v398 = vpop.f32.mrf.mxu0
  %v399 = vadd.f32 %v211, %v398
  %v400 = vpop.f32.mrf.mxu0
  %v401 = vadd.f32 %v211, %v400
  %402 = vmatmul.bf16.gmra.mxu0 %v173
  %v403 = vpop.f32.mrf.mxu0
  %v404 = vadd.f32 %v211, %v403
  %v405 = vpop.f32.mrf.mxu0
  %v406 = vadd.f32 %v211, %v405
  %407 = vmatmul.bf16.gmra.mxu0 %v174
  %v408 = vpop.f32.mrf.mxu0
  %v409 = vadd.f32 %v211, %v408
  %v410 = vpop.f32.mrf.mxu0
  %411 = vdwg.mxu0
  %v412 = vpack.c.bf16 %v376, %v353
  %v413 = vpack.c.bf16 %v399, %v399
  %v414 = vpack.c.bf16 %v378, %v355
  %v415 = vpack.c.bf16 %v401, %v401
  %v416 = vpack.c.bf16 %v381, %v358
  %v417 = vpack.c.bf16 %v404, %v404
  %v418 = vpack.c.bf16 %v383, %v360
  %v419 = vpack.c.bf16 %v406, %v406
  %v420 = vpack.c.bf16 %v386, %v363
  %v421 = vpack.c.bf16 %v409, %v409
  %422 = vst [vmem:[%s5] sm:$0xff] %v412
  %423 = vst [vmem:[%s5 + $0x8] sm:$0xf] %v413
  %424 = vst [vmem:[%s5 + $0xc] sm:$0xff] %v414
  %425 = vst [vmem:[%s5 + $0x14] sm:$0xf] %v415
  %426 = vst [vmem:[%s5 + $0x18] sm:$0xff] %v416
  %427 = vst [vmem:[%s5 + $0x20] sm:$0xf] %v417
  %428 = vst [vmem:[%s5 + $0x24] sm:$0xff] %v418
  %429 = vst [vmem:[%s5 + $0x2c] sm:$0xf] %v419
  %430 = vst [vmem:[%s5 + $0x30] sm:$0x11] %v420
  %431 = vst [vmem:[%s5 + $0x38] sm:$0x1] %v421
  // Predicated region
  $region26: #{clip_backbone_forward.15} parent=0 // pred_check
    _
  $region27: #{clip_backbone_forward.15} parent=0 // pred_check_branch
    %433 = sbr.rel (0) target = $region29
  $region28: #{clip_backbone_forward.15} parent=0 // pred_region
    _
  $region29: #{clip_backbone_forward.15} parent=0 // pred_fallthru
    _
  // Predicated region
  $region30: #{clip_backbone_forward.15} parent=0 // pred_check
    _
  $region31: #{clip_backbone_forward.15} parent=0 // pred_check_branch
    %435 = sbr.rel (0) target = $region33
  $region32: #{clip_backbone_forward.15} parent=0 // pred_region
    _
  $region33: #{clip_backbone_forward.15} parent=0 // pred_fallthru
    _

// kernel: clip_backbone_forward.16
$region0: #{clip_backbone_forward.16}
  #allocation0 [shape = 'u32[]', space=smem, size = 0x4, offset = 0x4, fixed_abs, tag = 'smem constant byte address 0x4 - core index']
  #allocation1 [shape = 'u32[72,128]{1,0:T(1,128)}', space=vmem, size = 0x9000, scoped, tag = 'internal scratch']
  %s0 = inlined_call_operand.vmem [shape: bf16[2,17,384], index: 0, kind: input, shape index: {}]
  %s1 = inlined_call_operand.vmem [shape: bf16[128,128], index: 1, kind: input, shape index: {}]
  %s2 = inlined_call_operand.vmem [shape: f32[1,128], index: 2, kind: input, shape index: {}]
  %s3 = inlined_call_operand.vmem [shape: bf16[2,17,128], index: 3, kind: input, shape index: {}]
  %s4 = inlined_call_operand.vmem [shape: bf16[2,17,128], index: 4, kind: output, shape index: {}]
  %s5 = sld [smem:[#allocation0]]
  $region49: #{clip_backbone_forward.16} parent=0
    _
  %s7 = ssub.s32 1, %s5
  %s8 = scalar_select 0, %s7, %s5
  loop: start=0, step=1, limit=4
  $region2: #{clip_backbone_forward.16} parent=0 // loop_pre_header
    _
  $region3: #{clip_backbone_forward.16} parent=0 // loop_header
    %s10 = sphi 0, %s14
    %p11 = scmp.ge.s32.totalorder %s10, 4
    %s20 = sphi 0, %s22
    %s23 = sphi 0, %s20
    %s24 = sphi 0, %s23
    %s40 = sphi 0, %s24
    %s44 = sphi 0, %s44
    %s46 = sphi 0, %s44
    %s47 = sphi 0, %s46
    %s61 = sphi 0, %s47
    %s65 = sphi 0, %s65
    %s67 = sphi 0, %s65
    %s68 = sphi 0, %s67
    %s82 = sphi 0, %s68
    %s88 = sphi 0, %s90
    %s91 = sphi 0, %s88
    %s92 = sphi 0, %s91
    %s108 = sphi 0, %s92
    %s114 = sphi 0, %s116
    %s117 = sphi 0, %s114
    %s118 = sphi 0, %s117
    %s134 = sphi 0, %s118
  $region4: #{clip_backbone_forward.16} parent=0 // loop_header_branch
    %13 = sbr.rel (%p11) target = $region8
  $region5: #{clip_backbone_forward.16} parent=0 // loop_body
    %s15 = ssub.s32 %s10, 1
    %s16 = ssub.s32 %s10, 2
    %s17 = sadd.s32 %s10, 1
    %s18 = ssub.s32 %s10, %s17
    %p19 = scmp.eq.s32.totalorder %s18, 0
    %s21 = sadd.s32 %s20, 1
    %s22 = scalar_select %p19, %s20, %s21
    %p25 = pneg %p19
    %p26 = scmp.eq.s32.totalorder %s10, 1
    %p27 = por %p25, %p26
    %p28 = scmp.ne.s32.totalorder %s20, %s23
    %p29 = scmp.eq.s32.totalorder %s10, 0
    %p30 = por %p28, %p29
    %p31 = scmp.ne.s32.totalorder %s20, %s23
    %p32 = scmp.eq.s32.totalorder %s15, 1
    %p33 = por %p31, %p32
    %p34 = scmp.ne.s32.totalorder %s23, %s24
    %p35 = scmp.eq.s32.totalorder %s15, 0
    %p36 = por %p34, %p35
    %p37 = scmp.ne.s32.totalorder %s23, %s24
    %p38 = scmp.eq.s32.totalorder %s16, 1
    %p39 = por %p37, %p38
    %p41 = scmp.ne.s32.totalorder %s24, %s40
    %p42 = scmp.eq.s32.totalorder %s16, 0
    %p43 = por %p41, %p42
    %s45 = sadd.s32 %s44, 1
    %p48 = scmp.eq.s32.totalorder %s10, 1
    %p49 = scmp.ne.s32.totalorder %s44, %s46
    %p50 = scmp.eq.s32.totalorder %s10, 0
    %p51 = por %p49, %p50
    %p52 = scmp.ne.s32.totalorder %s44, %s46
    %p53 = scmp.eq.s32.totalorder %s15, 1
    %p54 = por %p52, %p53
    %p55 = scmp.ne.s32.totalorder %s46, %s47
    %p56 = scmp.eq.s32.totalorder %s15, 0
    %p57 = por %p55, %p56
    %p58 = scmp.ne.s32.totalorder %s46, %s47
    %p59 = scmp.eq.s32.totalorder %s16, 1
    %p60 = por %p58, %p59
    %p62 = scmp.ne.s32.totalorder %s47, %s61
    %p63 = scmp.eq.s32.totalorder %s16, 0
    %p64 = por %p62, %p63
    %s66 = sadd.s32 %s65, 1
    %p69 = scmp.eq.s32.totalorder %s10, 1
    %p70 = scmp.ne.s32.totalorder %s65, %s67
    %p71 = scmp.eq.s32.totalorder %s10, 0
    %p72 = por %p70, %p71
    %p73 = scmp.ne.s32.totalorder %s65, %s67
    %p74 = scmp.eq.s32.totalorder %s15, 1
    %p75 = por %p73, %p74
    %p76 = scmp.ne.s32.totalorder %s67, %s68
    %p77 = scmp.eq.s32.totalorder %s15, 0
    %p78 = por %p76, %p77
    %p79 = scmp.ne.s32.totalorder %s67, %s68
    %p80 = scmp.eq.s32.totalorder %s16, 1
    %p81 = por %p79, %p80
    %p83 = scmp.ne.s32.totalorder %s68, %s82
    %p84 = scmp.eq.s32.totalorder %s16, 0
    %p85 = por %p83, %p84
    %s86 = ssub.s32 %s10, %s17
    %p87 = scmp.eq.s32.totalorder %s86, 0
    %s89 = sadd.s32 %s88, 1
    %s90 = scalar_select %p87, %s88, %s89
    %p93 = pneg %p87
    %p94 = scmp.eq.s32.totalorder %s10, 1
    %p95 = por %p93, %p94
    %p96 = scmp.ne.s32.totalorder %s88, %s91
    %p97 = scmp.eq.s32.totalorder %s10, 0
    %p98 = por %p96, %p97
    %p99 = scmp.ne.s32.totalorder %s88, %s91
    %p100 = scmp.eq.s32.totalorder %s15, 1
    %p101 = por %p99, %p100
    %p102 = scmp.ne.s32.totalorder %s91, %s92
    %p103 = scmp.eq.s32.totalorder %s15, 0
    %p104 = por %p102, %p103
    %p105 = scmp.ne.s32.totalorder %s91, %s92
    %p106 = scmp.eq.s32.totalorder %s16, 1
    %p107 = por %p105, %p106
    %p109 = scmp.ne.s32.totalorder %s92, %s108
    %p110 = scmp.eq.s32.totalorder %s16, 0
    %p111 = por %p109, %p110
    %s112 = ssub.s32 %s10, %s17
    %p113 = scmp.eq.s32.totalorder %s112, 0
    %s115 = sadd.s32 %s114, 1
    %s116 = scalar_select %p113, %s114, %s115
    %p119 = pneg %p113
    %p120 = scmp.eq.s32.totalorder %s10, 1
    %p121 = por %p119, %p120
    %p122 = scmp.ne.s32.totalorder %s114, %s117
    %p123 = scmp.eq.s32.totalorder %s10, 0
    %p124 = por %p122, %p123
    %p125 = scmp.ne.s32.totalorder %s114, %s117
    %p126 = scmp.eq.s32.totalorder %s15, 1
    %p127 = por %p125, %p126
    %p128 = scmp.ne.s32.totalorder %s117, %s118
    %p129 = scmp.eq.s32.totalorder %s15, 0
    %p130 = por %p128, %p129
    %p131 = scmp.ne.s32.totalorder %s117, %s118
    %p132 = scmp.eq.s32.totalorder %s16, 1
    %p133 = por %p131, %p132
    %p135 = scmp.ne.s32.totalorder %s118, %s134
    %p136 = scmp.eq.s32.totalorder %s16, 0
    %p137 = por %p135, %p136
    %p138 = scmp.le.s32.totalorder 1, %s10
    %p139 = scmp.lt.s32.totalorder %s10, 3
    %p140 = pnand %p138, %p139
    %p141 = pneg %p140
    // Predicated region
    $region9: #{clip_backbone_forward.16} parent=5 // pred_check
      _
    $region10: #{clip_backbone_forward.16} parent=5 // pred_check_branch
      %143 = sbr.rel (%p140) target = $region12
    $region11: #{clip_backbone_forward.16} parent=5 // pred_region
      %s144 = ssub.s32 %s10, 1
      // Predicated region
      $region13: #{clip_backbone_forward.16} parent=11 // pred_check
        %p145 = pneg %p57
      $region14: #{clip_backbone_forward.16} parent=11 // pred_check_branch
        %147 = sbr.rel (%p145) target = $region16
      $region15: #{clip_backbone_forward.16} parent=11 // pred_region
        _
      $region16: #{clip_backbone_forward.16} parent=11 // pred_fallthru
        _
      // Predicated region
      $region17: #{clip_backbone_forward.16} parent=11 // pred_check
        %p148 = pneg %p78
      $region18: #{clip_backbone_forward.16} parent=11 // pred_check_branch
        %150 = sbr.rel (%p148) target = $region20
      $region19: #{clip_backbone_forward.16} parent=11 // pred_region
        _
      $region20: #{clip_backbone_forward.16} parent=11 // pred_fallthru
        _
    $region12: #{clip_backbone_forward.16} parent=5 // pred_fallthru
      _
    %p151 = scmp.lt.s32.totalorder %s10, 2
    // Predicated region
    $region21: #{clip_backbone_forward.16} parent=5 // pred_check
      %p152 = pneg %p151
    $region22: #{clip_backbone_forward.16} parent=5 // pred_check_branch
      %154 = sbr.rel (%p152) target = $region24
    $region23: #{clip_backbone_forward.16} parent=5 // pred_region
      // Predicated region
      $region25: #{clip_backbone_forward.16} parent=23 // pred_check
        %p155 = pneg %p30
      $region26: #{clip_backbone_forward.16} parent=23 // pred_check_branch
        %157 = sbr.rel (%p155) target = $region28
      $region27: #{clip_backbone_forward.16} parent=23 // pred_region
        %p158 = scmp.lt.s32.totalorder %s10, 1
        %s159 = scalar_select %p158, %s10, 1
        %s160 = smul.addr %s159, 9
        %s161 = smul.addr %s160, 4
        %s162 = scalar_lea.vmem %s0, %s161
      $region28: #{clip_backbone_forward.16} parent=23 // pred_fallthru
        _
      // Predicated region
      $region29: #{clip_backbone_forward.16} parent=23 // pred_check
        %p163 = pneg %p98
      $region30: #{clip_backbone_forward.16} parent=23 // pred_check_branch
        %165 = sbr.rel (%p163) target = $region32
      $region31: #{clip_backbone_forward.16} parent=23 // pred_region
        %p166 = scmp.lt.s32.totalorder %s10, 1
        %s167 = scalar_select %p166, %s10, 1
        %s168 = smul.addr %s167, 3
        %s169 = smul.addr %s168, 4
        %s170 = scalar_lea.vmem %s3, %s169
      $region32: #{clip_backbone_forward.16} parent=23 // pred_fallthru
        _
    $region24: #{clip_backbone_forward.16} parent=5 // pred_fallthru
      _
    %p171 = scmp.le.s32.totalorder 1, %s10
    %p172 = scmp.lt.s32.totalorder %s10, 3
    %p173 = pnand %p171, %p172
    %p174 = pneg %p173
    // Predicated region
    $region33: #{clip_backbone_forward.16} parent=5 // pred_check
      _
    $region34: #{clip_backbone_forward.16} parent=5 // pred_check_branch
      %176 = sbr.rel (%p173) target = $region36
    $region35: #{clip_backbone_forward.16} parent=5 // pred_region
      %s177 = ssub.s32 %s10, 1
      %p178 = scmp.lt.s32.totalorder %s15, 1
      %s179 = scalar_select %p178, %s15, 1
      %s180 = smul.addr %s179, 9
      %s181 = smul.addr %s180, 4
      %s182 = scalar_lea.vmem %s0, %s181
      %p183 = pneg %p36
      %p184 = pneg %p33
      %p185 = pneg %p57
      %p186 = pneg %p54
      %p187 = pneg %p78
      %p188 = pneg %p75
      %p189 = scmp.lt.s32.totalorder %s15, 1
      %s190 = scalar_select %p189, %s15, 1
      %s191 = smul.addr %s190, 3
      %s192 = smul.addr %s191, 4
      %s193 = scalar_lea.vmem %s3, %s192
      %p194 = pneg %p104
      %p195 = pneg %p101
      %p196 = pneg %p130
      %p197 = pneg %p127
      %p198 = scmp.lt.s32.totalorder %s15, 1
      %s199 = scalar_select %p198, %s15, 1
      %s200 = smul.addr %s199, 3
      %s201 = smul.addr %s200, 4
      %s202 = scalar_lea.vmem %s4, %s201
      %p203 = scmp.lt.s32.totalorder %s15, 1
      %s204 = scalar_select %p203, %s15, 1
      %s205 = smul.addr %s204, 9
      %s206 = smul.addr %s205, 4
      %s207 = scalar_lea.vmem %s0, %s206
      %p208 = scmp.lt.s32.totalorder %s15, 1
      %s209 = scalar_select %p208, %s15, 1
      %s210 = smul.addr %s209, 3
      %s211 = smul.addr %s210, 4
      %s212 = scalar_lea.vmem %s3, %s211
      %p213 = scmp.lt.s32.totalorder %s15, 1
      %s214 = scalar_select %p213, %s15, 1
      %s215 = smul.addr %s214, 3
      %s216 = smul.addr %s215, 4
      %s217 = scalar_lea.vmem %s4, %s216
      %v219 = vld [vmem:[%s207] sm:$0xff]
      %v220 = vld [vmem:[%s207 + $0x8] sm:$0xf]
      %v221 = vld [vmem:[%s207 + $0xc] sm:$0xff]
      %v222 = vld [vmem:[%s207 + $0x14] sm:$0xf]
      %v223 = vld [vmem:[%s207 + $0x18] sm:$0x11]
      %v224 = vld [vmem:[%s207 + $0x20] sm:$0x1]
      %v228 = vunpack.c.l.b16 %v219
      %v229 = vunpack.c.l.b16 %v221
      %v230 = vunpack.c.l.b16 %v223
      %v231 = vpack.c.b16 %v229, %v228
      %v232 = vpack.c.b16 %v230, %v230
      %v233 = vunpack.c.h.b16 %v219
      %v234 = vunpack.c.h.b16 %v221
      %v235 = vunpack.c.h.b16 %v223
      %v236 = vpack.c.b16 %v234, %v233
      %v237 = vpack.c.b16 %v235, %v235
      %vm238 = vcmask 261120
      %v240 = vsel %vm238, %v231, 0
      %v243 = vsel %vm238, %v232, 0
      %v246 = vsel %vm238, %v236, 0
      %v249 = vsel %vm238, %v237, 0
      %251 = vmatpush.bf16.xpose.msra.mxu0 0
      %252 = vmatpush.bf16.xpose.msra.mxu0 0
      %253 = vmatpush.bf16.xpose.msra.mxu0 0
      %254 = vmatpush.bf16.xpose.msra.mxu0 0
      %255 = vmatpush.bf16.xpose.msra.mxu0 0
      %256 = vmatpush.bf16.xpose.msra.mxu0 0
      %257 = vmatpush.bf16.xpose.msra.mxu0 %v249
      %258 = vmatpush.bf16.xpose.msra.mxu0 %v246
      %259 = vmatmul.bf16.gmra.mxu0 %v240
      %v260 = vpop.f32.mrf.mxu0
      %v261 = vadd.f32 0.0, %v260
      %v262 = vpop.f32.mrf.mxu0
      %v263 = vadd.f32 0.0, %v262
      %264 = vmatmul.bf16.gmra.mxu0 %v243
      %v265 = vpop.f32.mrf.mxu0
      %v266 = vadd.f32 0.0, %v265
      %v267 = vpop.f32.mrf.mxu0
      %268 = vdwg.mxu0
      %v269 = vmul.f32 %v261, 0.17677669
      %v270 = vmul.f32 %v263, 0.17677669
      %v271 = vmul.f32 %v266, 0.17677669
      %vm272 = vcmask 138240
      %v273 = vsel %vm272, %v269, -inf
      %274 = vmax.xlane.f32.xlu0 %v273
      %v275 = vpop.xlane.xlu0 %274
      %v276 = vsel %vm272, %v270, -inf
      %277 = vmax.xlane.f32.xlu0 %v276
      %v278 = vpop.xlane.xlu0 %277
      %vm279 = vcmask 131072
      %v280 = vsel %vm279, %v271, -inf
      %281 = vmax.xlane.f32.xlu0 %v280
      %v282 = vpop.xlane.xlu0 %281
      %v283 = vsub.f32 %v269, %v275
      %v284 = vsub.f32 %v270, %v278
      %v285 = vsub.f32 %v271, %v282
      %v286 = vmul.f32 %v283, 1.442695
      %v287 = vpow.pop %v286
      %v288 = vmul.f32 %v284, 1.442695
      %v289 = vpow.pop %v288
      %v290 = vmul.f32 %v285, 1.442695
      %v291 = vpow.pop %v290
      %v292 = vsel %vm272, %v287, 0.0
      %293 = vadd.xlane.f32.xlu0 %v292
      %v294 = vpop.xlane.xlu0 %293
      %v295 = vsel %vm272, %v289, 0.0
      %296 = vadd.xlane.f32.xlu0 %v295
      %v297 = vpop.xlane.xlu0 %296
      %v298 = vsel %vm279, %v291, 0.0
      %299 = vadd.xlane.f32.xlu0 %v298
      %v300 = vpop.xlane.xlu0 %299
      %v301 = vrcp.pop %v294
      %v302 = vrcp.pop %v297
      %v303 = vrcp.pop %v300
      %v304 = vmul.f32 %v287, %v301
      %v305 = vmul.f32 %v289, %v302
      %v306 = vmul.f32 %v291, %v303
      %v307 = vpack.c.bf16 %v305, %v304
      %v308 = vpack.c.bf16 %v306, %v306
      %v312 = vunpack.c.l.b16 %v220
      %v313 = vunpack.c.l.b16 %v222
      %v314 = vunpack.c.l.b16 %v224
      %v315 = vpack.c.b16 %v313, %v312
      %v316 = vpack.c.b16 %v314, %v314
      %v319 = vsel %vm272, %v307, 0
      %v322 = vsel %vm272, %v308, 0
      %vm324 = vcmask 1040384
      %v325 = vsel 0, 4294967295, 65535
      %v326 = vsel %vm324, %v325, 0
      %v328 = vand.u32 %v316, %v326
      %330 = vmatpush.bf16.msra.mxu0 0
      %331 = vmatpush.bf16.msra.mxu0 0
      %332 = vmatpush.bf16.msra.mxu0 0
      %333 = vmatpush.bf16.msra.mxu0 0
      %334 = vmatpush.bf16.msra.mxu0 0
      %335 = vmatpush.bf16.msra.mxu0 0
      %336 = vmatpush.bf16.msra.mxu0 %v328
      %337 = vmatpush.bf16.msra.mxu0 %v315
      %338 = vmatmul.bf16.gmra.mxu0 %v319
      %v339 = vpop.f32.mrf.mxu0
      %v340 = vadd.f32 0.0, %v339
      %v341 = vpop.f32.mrf.mxu0
      %v342 = vadd.f32 0.0, %v341
      %343 = vmatmul.bf16.gmra.mxu0 %v322
      %v344 = vpop.f32.mrf.mxu0
      %v345 = vadd.f32 0.0, %v344
      %v346 = vpop.f32.mrf.mxu0
      %347 = vdwg.mxu0
      %348 = vrot.lane.b32.xlu0 %v231, 96
      %v349 = vpop.permute.xlu0 %348
      %350 = vrot.lane.b32.xlu0 %v232, 96
      %v351 = vpop.permute.xlu0 %350
      %352 = vrot.lane.b32.xlu0 %v236, 96
      %v353 = vpop.permute.xlu0 %352
      %354 = vrot.lane.b32.xlu0 %v237, 96
      %v355 = vpop.permute.xlu0 %354
      %v357 = vsel %vm238, %v349, 0
      %v360 = vsel %vm238, %v351, 0
      %v363 = vsel %vm238, %v353, 0
      %v366 = vsel %vm238, %v355, 0
      %368 = vmatpush.bf16.xpose.msra.mxu0 0
      %369 = vmatpush.bf16.xpose.msra.mxu0 0
      %370 = vmatpush.bf16.xpose.msra.mxu0 0
      %371 = vmatpush.bf16.xpose.msra.mxu0 0
      %372 = vmatpush.bf16.xpose.msra.mxu0 0
      %373 = vmatpush.bf16.xpose.msra.mxu0 0
      %374 = vmatpush.bf16.xpose.msra.mxu0 %v366
      %375 = vmatpush.bf16.xpose.msra.mxu0 %v363
      %376 = vmatmul.bf16.gmra.mxu0 %v357
      %v377 = vpop.f32.mrf.mxu0
      %v378 = vadd.f32 0.0, %v377
      %v379 = vpop.f32.mrf.mxu0
      %v380 = vadd.f32 0.0, %v379
      %381 = vmatmul.bf16.gmra.mxu0 %v360
      %v382 = vpop.f32.mrf.mxu0
      %v383 = vadd.f32 0.0, %v382
      %v384 = vpop.f32.mrf.mxu0
      %385 = vdwg.mxu0
      %v386 = vmul.f32 %v378, 0.17677669
      %v387 = vmul.f32 %v380, 0.17677669
      %v388 = vmul.f32 %v383, 0.17677669
      %v389 = vsel %vm272, %v386, -inf
      %390 = vmax.xlane.f32.xlu0 %v389
      %v391 = vpop.xlane.xlu0 %390
      %v392 = vsel %vm272, %v387, -inf
      %393 = vmax.xlane.f32.xlu0 %v392
      %v394 = vpop.xlane.xlu0 %393
      %v395 = vsel %vm279, %v388, -inf
      %396 = vmax.xlane.f32.xlu0 %v395
      %v397 = vpop.xlane.xlu0 %396
      %v398 = vsub.f32 %v386, %v391
      %v399 = vsub.f32 %v387, %v394
      %v400 = vsub.f32 %v388, %v397
      %v401 = vmul.f32 %v398, 1.442695
      %v402 = vpow.pop %v401
      %v403 = vmul.f32 %v399, 1.442695
      %v404 = vpow.pop %v403
      %v405 = vmul.f32 %v400, 1.442695
      %v406 = vpow.pop %v405
      %v407 = vsel %vm272, %v402, 0.0
      %408 = vadd.xlane.f32.xlu0 %v407
      %v409 = vpop.xlane.xlu0 %408
      %v410 = vsel %vm272, %v404, 0.0
      %411 = vadd.xlane.f32.xlu0 %v410
      %v412 = vpop.xlane.xlu0 %411
      %v413 = vsel %vm279, %v406, 0.0
      %414 = vadd.xlane.f32.xlu0 %v413
      %v415 = vpop.xlane.xlu0 %414
      %v416 = vrcp.pop %v409
      %v417 = vrcp.pop %v412
      %v418 = vrcp.pop %v415
      %v419 = vmul.f32 %v402, %v416
      %v420 = vmul.f32 %v404, %v417
      %v421 = vmul.f32 %v406, %v418
      %v422 = vpack.c.bf16 %v420, %v419
      %v423 = vpack.c.bf16 %v421, %v421
      %424 = vrot.lane.b32.xlu0 %v315, 96
      %v425 = vpop.permute.xlu0 %424
      %426 = vrot.lane.b32.xlu0 %v316, 96
      %v427 = vpop.permute.xlu0 %426
      %v430 = vsel %vm272, %v422, 0
      %v433 = vsel %vm272, %v423, 0
      %v436 = vand.u32 %v427, %v326
      %438 = vmatpush.bf16.msra.mxu0 0
      %439 = vmatpush.bf16.msra.mxu0 0
      %440 = vmatpush.bf16.msra.mxu0 0
      %441 = vmatpush.bf16.msra.mxu0 0
      %442 = vmatpush.bf16.msra.mxu0 0
      %443 = vmatpush.bf16.msra.mxu0 0
      %444 = vmatpush.bf16.msra.mxu0 %v436
      %445 = vmatpush.bf16.msra.mxu0 %v425
      %446 = vmatmul.bf16.gmra.mxu0 %v430
      %v447 = vpop.f32.mrf.mxu0
      %v448 = vadd.f32 0.0, %v447
      %v449 = vpop.f32.mrf.mxu0
      %v450 = vadd.f32 0.0, %v449
      %451 = vmatmul.bf16.gmra.mxu0 %v433
      %v452 = vpop.f32.mrf.mxu0
      %v453 = vadd.f32 0.0, %v452
      %v454 = vpop.f32.mrf.mxu0
      %455 = vdwg.mxu0
      %456 = vrot.lane.b32.xlu0 %v231, 64
      %v457 = vpop.permute.xlu0 %456
      %458 = vrot.lane.b32.xlu0 %v232, 64
      %v459 = vpop.permute.xlu0 %458
      %460 = vrot.lane.b32.xlu0 %v236, 64
      %v461 = vpop.permute.xlu0 %460
      %462 = vrot.lane.b32.xlu0 %v237, 64
      %v463 = vpop.permute.xlu0 %462
      %v465 = vsel %vm238, %v457, 0
      %v468 = vsel %vm238, %v459, 0
      %v471 = vsel %vm238, %v461, 0
      %v474 = vsel %vm238, %v463, 0
      %476 = vmatpush.bf16.xpose.msra.mxu0 0
      %477 = vmatpush.bf16.xpose.msra.mxu0 0
      %478 = vmatpush.bf16.xpose.msra.mxu0 0
      %479 = vmatpush.bf16.xpose.msra.mxu0 0
      %480 = vmatpush.bf16.xpose.msra.mxu0 0
      %481 = vmatpush.bf16.xpose.msra.mxu0 0
      %482 = vmatpush.bf16.xpose.msra.mxu0 %v474
      %483 = vmatpush.bf16.xpose.msra.mxu0 %v471
      %484 = vmatmul.bf16.gmra.mxu0 %v465
      %v485 = vpop.f32.mrf.mxu0
      %v486 = vadd.f32 0.0, %v485
      %v487 = vpop.f32.mrf.mxu0
      %v488 = vadd.f32 0.0, %v487
      %489 = vmatmul.bf16.gmra.mxu0 %v468
      %v490 = vpop.f32.mrf.mxu0
      %v491 = vadd.f32 0.0, %v490
      %v492 = vpop.f32.mrf.mxu0
      %493 = vdwg.mxu0
      %v494 = vmul.f32 %v486, 0.17677669
      %v495 = vmul.f32 %v488, 0.17677669
      %v496 = vmul.f32 %v491, 0.17677669
      %v497 = vsel %vm272, %v494, -inf
      %498 = vmax.xlane.f32.xlu0 %v497
      %v499 = vpop.xlane.xlu0 %498
      %v500 = vsel %vm272, %v495, -inf
      %501 = vmax.xlane.f32.xlu0 %v500
      %v502 = vpop.xlane.xlu0 %501
      %v503 = vsel %vm279, %v496, -inf
      %504 = vmax.xlane.f32.xlu0 %v503
      %v505 = vpop.xlane.xlu0 %504
      %v506 = vsub.f32 %v494, %v499
      %v507 = vsub.f32 %v495, %v502
      %v508 = vsub.f32 %v496, %v505
      %v509 = vmul.f32 %v506, 1.442695
      %v510 = vpow.pop %v509
      %v511 = vmul.f32 %v507, 1.442695
      %v512 = vpow.pop %v511
      %v513 = vmul.f32 %v508, 1.442695
      %v514 = vpow.pop %v513
      %v515 = vsel %vm272, %v510, 0.0
      %516 = vadd.xlane.f32.xlu0 %v515
      %v517 = vpop.xlane.xlu0 %516
      %v518 = vsel %vm272, %v512, 0.0
      %519 = vadd.xlane.f32.xlu0 %v518
      %v520 = vpop.xlane.xlu0 %519
      %v521 = vsel %vm279, %v514, 0.0
      %522 = vadd.xlane.f32.xlu0 %v521
      %v523 = vpop.xlane.xlu0 %522
      %v524 = vrcp.pop %v517
      %v525 = vrcp.pop %v520
      %v526 = vrcp.pop %v523
      %v527 = vmul.f32 %v510, %v524
      %v528 = vmul.f32 %v512, %v525
      %v529 = vmul.f32 %v514, %v526
      %v530 = vpack.c.bf16 %v528, %v527
      %v531 = vpack.c.bf16 %v529, %v529
      %532 = vrot.lane.b32.xlu0 %v315, 64
      %v533 = vpop.permute.xlu0 %532
      %534 = vrot.lane.b32.xlu0 %v316, 64
      %v535 = vpop.permute.xlu0 %534
      %v538 = vsel %vm272, %v530, 0
      %v541 = vsel %vm272, %v531, 0
      %v544 = vand.u32 %v535, %v326
      %546 = vmatpush.bf16.msra.mxu0 0
      %547 = vmatpush.bf16.msra.mxu0 0
      %548 = vmatpush.bf16.msra.mxu0 0
      %549 = vmatpush.bf16.msra.mxu0 0
      %550 = vmatpush.bf16.msra.mxu0 0
      %551 = vmatpush.bf16.msra.mxu0 0
      %552 = vmatpush.bf16.msra.mxu0 %v544
      %553 = vmatpush.bf16.msra.mxu0 %v533
      %554 = vmatmul.bf16.gmra.mxu0 %v538
      %v555 = vpop.f32.mrf.mxu0
      %v556 = vadd.f32 0.0, %v555
      %v557 = vpop.f32.mrf.mxu0
      %v558 = vadd.f32 0.0, %v557
      %559 = vmatmul.bf16.gmra.mxu0 %v541
      %v560 = vpop.f32.mrf.mxu0
      %v561 = vadd.f32 0.0, %v560
      %v562 = vpop.f32.mrf.mxu0
      %563 = vdwg.mxu0
      %564 = vrot.lane.b32.xlu0 %v231, 32
      %v565 = vpop.permute.xlu0 %564
      %566 = vrot.lane.b32.xlu0 %v232, 32
      %v567 = vpop.permute.xlu0 %566
      %568 = vrot.lane.b32.xlu0 %v236, 32
      %v569 = vpop.permute.xlu0 %568
      %570 = vrot.lane.b32.xlu0 %v237, 32
      %v571 = vpop.permute.xlu0 %570
      %v573 = vsel %vm238, %v565, 0
      %v576 = vsel %vm238, %v567, 0
      %v579 = vsel %vm238, %v569, 0
      %v582 = vsel %vm238, %v571, 0
      %584 = vmatpush.bf16.xpose.msra.mxu0 0
      %585 = vmatpush.bf16.xpose.msra.mxu0 0
      %586 = vmatpush.bf16.xpose.msra.mxu0 0
      %587 = vmatpush.bf16.xpose.msra.mxu0 0
      %588 = vmatpush.bf16.xpose.msra.mxu0 0
      %589 = vmatpush.bf16.xpose.msra.mxu0 0
      %590 = vmatpush.bf16.xpose.msra.mxu0 %v582
      %591 = vmatpush.bf16.xpose.msra.mxu0 %v579
      %592 = vmatmul.bf16.gmra.mxu0 %v573
      %v593 = vpop.f32.mrf.mxu0
      %v594 = vadd.f32 0.0, %v593
      %v595 = vpop.f32.mrf.mxu0
      %v596 = vadd.f32 0.0, %v595
      %597 = vmatmul.bf16.gmra.mxu0 %v576
      %v598 = vpop.f32.mrf.mxu0
      %v599 = vadd.f32 0.0, %v598
      %v600 = vpop.f32.mrf.mxu0
      %601 = vdwg.mxu0
      %v602 = vmul.f32 %v594, 0.17677669
      %v603 = vmul.f32 %v596, 0.17677669
      %v604 = vmul.f32 %v599, 0.17677669
      %v605 = vsel %vm272, %v602, -inf
      %606 = vmax.xlane.f32.xlu0 %v605
      %v607 = vpop.xlane.xlu0 %606
      %v608 = vsel %vm272, %v603, -inf
      %609 = vmax.xlane.f32.xlu0 %v608
      %v610 = vpop.xlane.xlu0 %609
      %v611 = vsel %vm279, %v604, -inf
      %612 = vmax.xlane.f32.xlu0 %v611
      %v613 = vpop.xlane.xlu0 %612
      %v614 = vsub.f32 %v602, %v607
      %v615 = vsub.f32 %v603, %v610
      %v616 = vsub.f32 %v604, %v613
      %v617 = vmul.f32 %v614, 1.442695
      %v618 = vpow.pop %v617
      %v619 = vmul.f32 %v615, 1.442695
      %v620 = vpow.pop %v619
      %v621 = vmul.f32 %v616, 1.442695
      %v622 = vpow.pop %v621
      %v623 = vsel %vm272, %v618, 0.0
      %624 = vadd.xlane.f32.xlu0 %v623
      %v625 = vpop.xlane.xlu0 %624
      %v626 = vsel %vm272, %v620, 0.0
      %627 = vadd.xlane.f32.xlu0 %v626
      %v628 = vpop.xlane.xlu0 %627
      %v629 = vsel %vm279, %v622, 0.0
      %630 = vadd.xlane.f32.xlu0 %v629
      %v631 = vpop.xlane.xlu0 %630
      %v632 = vrcp.pop %v625
      %v633 = vrcp.pop %v628
      %v634 = vrcp.pop %v631
      %v635 = vmul.f32 %v618, %v632
      %v636 = vmul.f32 %v620, %v633
      %v637 = vmul.f32 %v622, %v634
      %v638 = vpack.c.bf16 %v636, %v635
      %v639 = vpack.c.bf16 %v637, %v637
      %640 = vrot.lane.b32.xlu0 %v315, 32
      %v641 = vpop.permute.xlu0 %640
      %642 = vrot.lane.b32.xlu0 %v316, 32
      %v643 = vpop.permute.xlu0 %642
      %v646 = vsel %vm272, %v638, 0
      %v649 = vsel %vm272, %v639, 0
      %v652 = vand.u32 %v643, %v326
      %654 = vmatpush.bf16.msra.mxu0 0
      %655 = vmatpush.bf16.msra.mxu0 0
      %656 = vmatpush.bf16.msra.mxu0 0
      %657 = vmatpush.bf16.msra.mxu0 0
      %658 = vmatpush.bf16.msra.mxu0 0
      %659 = vmatpush.bf16.msra.mxu0 0
      %660 = vmatpush.bf16.msra.mxu0 %v652
      %661 = vmatpush.bf16.msra.mxu0 %v641
      %662 = vmatmul.bf16.gmra.mxu0 %v646
      %v663 = vpop.f32.mrf.mxu0
      %v664 = vadd.f32 0.0, %v663
      %v665 = vpop.f32.mrf.mxu0
      %v666 = vadd.f32 0.0, %v665
      %667 = vmatmul.bf16.gmra.mxu0 %v649
      %v668 = vpop.f32.mrf.mxu0
      %v669 = vadd.f32 0.0, %v668
      %v670 = vpop.f32.mrf.mxu0
      %671 = vdwg.mxu0
      %675 = vrot.lane.b32.xlu0 %v448, 32
      %v676 = vpop.permute.xlu0 %675
      %677 = vrot.lane.b32.xlu0 %v450, 32
      %v678 = vpop.permute.xlu0 %677
      %679 = vrot.lane.b32.xlu0 %v453, 32
      %v680 = vpop.permute.xlu0 %679
      %687 = vrot.lane.b32.xlu0 %v556, 64
      %v688 = vpop.permute.xlu0 %687
      %689 = vrot.lane.b32.xlu0 %v558, 64
      %v690 = vpop.permute.xlu0 %689
      %691 = vrot.lane.b32.xlu0 %v561, 64
      %v692 = vpop.permute.xlu0 %691
      %699 = vrot.lane.b32.xlu0 %v664, 96
      %v700 = vpop.permute.xlu0 %699
      %701 = vrot.lane.b32.xlu0 %v666, 96
      %v702 = vpop.permute.xlu0 %701
      %703 = vrot.lane.b32.xlu0 %v669, 96
      %v704 = vpop.permute.xlu0 %703
      %v708 = vsel %vm238, %v340, %v676
      %v709 = vsel %vm238, %v342, %v678
      %v710 = vsel %vm238, %v345, %v680
      %vm711 = vcmask 523264
      %v712 = vsel %vm711, %v708, %v688
      %v713 = vsel %vm711, %v709, %v690
      %v714 = vsel %vm711, %v710, %v692
      %vm715 = vcmask 785408
      %v716 = vsel %vm715, %v712, %v700
      %v717 = vsel %vm715, %v713, %v702
      %v718 = vsel %vm715, %v714, %v704
      %v719 = vpack.c.bf16 %v717, %v716
      %v720 = vpack.c.bf16 %v718, %v718
      %v721 = vld [vmem:[%s1] sm:$0xf]
      %v722 = vld [vmem:[%s1 + $0x4] sm:$0xf]
      %v723 = vld [vmem:[%s1 + $0x8] sm:$0xf]
      %v724 = vld [vmem:[%s1 + $0xc] sm:$0xf]
      %v725 = vld [vmem:[%s1 + $0x10] sm:$0xf]
      %v726 = vld [vmem:[%s1 + $0x14] sm:$0xf]
      %v727 = vld [vmem:[%s1 + $0x18] sm:$0xf]
      %v728 = vld [vmem:[%s1 + $0x1c] sm:$0xf]
      %v729 = vld [vmem:[%s1 + $0x20] sm:$0xf]
      %v730 = vld [vmem:[%s1 + $0x24] sm:$0xf]
      %v731 = vld [vmem:[%s1 + $0x28] sm:$0xf]
      %v732 = vld [vmem:[%s1 + $0x2c] sm:$0xf]
      %v733 = vld [vmem:[%s1 + $0x30] sm:$0xf]
      %v734 = vld [vmem:[%s1 + $0x34] sm:$0xf]
      %v735 = vld [vmem:[%s1 + $0x38] sm:$0xf]
      %v736 = vld [vmem:[%s1 + $0x3c] sm:$0xf]
      %v737 = vld [vmem:[%s2] sm:$0x1]
      %v739 = vperm.slane %v737, 0
      %v757 = vunpack.c.l.b16 %v721
      %v758 = vunpack.c.l.b16 %v722
      %v759 = vunpack.c.l.b16 %v723
      %v760 = vunpack.c.l.b16 %v724
      %v761 = vunpack.c.l.b16 %v725
      %v762 = vunpack.c.l.b16 %v726
      %v763 = vunpack.c.l.b16 %v727
      %v764 = vunpack.c.l.b16 %v728
      %v765 = vunpack.c.l.b16 %v729
      %v766 = vunpack.c.l.b16 %v730
      %v767 = vunpack.c.l.b16 %v731
      %v768 = vunpack.c.l.b16 %v732
      %v769 = vunpack.c.l.b16 %v733
      %v770 = vunpack.c.l.b16 %v734
      %v771 = vunpack.c.l.b16 %v735
      %v772 = vunpack.c.l.b16 %v736
      %v773 = vpack.c.b16 %v758, %v757
      %v774 = vpack.c.b16 %v760, %v759
      %v775 = vpack.c.b16 %v762, %v761
      %v776 = vpack.c.b16 %v764, %v763
      %v777 = vpack.c.b16 %v766, %v765
      %v778 = vpack.c.b16 %v768, %v767
      %v779 = vpack.c.b16 %v770, %v769
      %v780 = vpack.c.b16 %v772, %v771
      %789 = vmatpush.bf16.msra.mxu0 %v780
      %790 = vmatpush.bf16.msra.mxu0 %v779
      %791 = vmatpush.bf16.msra.mxu0 %v778
      %792 = vmatpush.bf16.msra.mxu0 %v777
      %793 = vmatpush.bf16.msra.mxu0 %v776
      %794 = vmatpush.bf16.msra.mxu0 %v775
      %795 = vmatpush.bf16.msra.mxu0 %v774
      %796 = vmatpush.bf16.msra.mxu0 %v773
      %797 = vmatmul.bf16.gmra.mxu0 %v719
      %v798 = vpop.f32.mrf.mxu0
      %v799 = vadd.f32 %v739, %v798
      %v800 = vpop.f32.mrf.mxu0
      %v801 = vadd.f32 %v739, %v800
      %802 = vmatmul.bf16.gmra.mxu0 %v720
      %v803 = vpop.f32.mrf.mxu0
      %v804 = vadd.f32 %v739, %v803
      %v805 = vpop.f32.mrf.mxu0
      %806 = vdwg.mxu0
      %v807 = vld [vmem:[%s212] sm:$0xf]
      %v808 = vld [vmem:[%s212 + $0x4] sm:$0xf]
      %v809 = vld [vmem:[%s212 + $0x8] sm:$0x1]
      %v810 = vunpack.c.l.bf16 %v807
      %v811 = vunpack.c.l.bf16 %v808
      %v812 = vunpack.c.l.bf16 %v809
      %v813 = vadd.f32 %v799, %v810
      %v814 = vadd.f32 %v801, %v811
      %v815 = vadd.f32 %v804, %v812
      %v816 = vpack.c.bf16 %v813, %v813
      %v817 = vpack.c.bf16 %v814, %v814
      %v818 = vpack.c.bf16 %v815, %v815
      %819 = vst [vmem:[%s217] sm:$0xf] %v816
      %820 = vst [vmem:[%s217 + $0x4] sm:$0xf] %v817
      %vm821 = vcmask 1040384
      %vm822 = vsmask.f32 256
      %vm823 = vmand %vm821, %vm822
      %v824 = vld [vmem:[%s217 + $0x8] sm:$0x1]
      %v825 = vsel %vm823, %v818, %v824
      %826 = vst [vmem:[%s217 + $0x8] sm:$0x1] %v825
      %p827 = scmp.lt.s32.totalorder %s15, 1
      %s828 = scalar_select %p827, %s15, 1
      %s829 = smul.addr %s828, 3
      %s830 = smul.addr %s829, 4
      %s831 = scalar_lea.vmem %s4, %s830
      // Predicated region
      $region37: #{clip_backbone_forward.16} parent=35 // pred_check
        %p832 = pneg %p127
      $region38: #{clip_backbone_forward.16} parent=35 // pred_check_branch
        %834 = sbr.rel (%p832) target = $region40
      $region39: #{clip_backbone_forward.16} parent=35 // pred_region
        _
      $region40: #{clip_backbone_forward.16} parent=35 // pred_fallthru
        _
    $region36: #{clip_backbone_forward.16} parent=5 // pred_fallthru
      _
    %p835 = scmp.le.s32.totalorder 2, %s10
    // Predicated region
    $region41: #{clip_backbone_forward.16} parent=5 // pred_check
      %p836 = pneg %p835
    $region42: #{clip_backbone_forward.16} parent=5 // pred_check_branch
      %838 = sbr.rel (%p836) target = $region44
    $region43: #{clip_backbone_forward.16} parent=5 // pred_region
      %s839 = ssub.s32 %s10, 2
      // Predicated region
      $region45: #{clip_backbone_forward.16} parent=43 // pred_check
        %p840 = pneg %p133
      $region46: #{clip_backbone_forward.16} parent=43 // pred_check_branch
        %842 = sbr.rel (%p840) target = $region48
      $region47: #{clip_backbone_forward.16} parent=43 // pred_region
        %p843 = scmp.lt.s32.totalorder %s16, 1
        %s844 = scalar_select %p843, %s16, 1
        %s845 = smul.addr %s844, 3
        %s846 = smul.addr %s845, 4
        %s847 = scalar_lea.vmem %s4, %s846
      $region48: #{clip_backbone_forward.16} parent=43 // pred_fallthru
        _
    $region44: #{clip_backbone_forward.16} parent=5 // pred_fallthru
      _
  $region6: #{clip_backbone_forward.16} parent=0 // loop_footer
    %s14 = sadd.s32 1, %s10
  $region7: #{clip_backbone_forward.16} parent=0 // loop_footer_branch
    %9 = sbr.rel target = $region3
  $region8: #{clip_backbone_forward.16} parent=0 // loop_exit
    _

// kernel: clip_backbone_forward.18
$region0: #{clip_backbone_forward.18}
  #allocation0 [shape = 'u32[]', space=smem, size = 0x4, offset = 0x4, fixed_abs, tag = 'smem constant byte address 0x4 - core index']
  #allocation1 [shape = 'u32[72,128]{1,0:T(1,128)}', space=vmem, size = 0x9000, scoped, tag = 'internal scratch']
  #allocation2 [shape = 'f32[34,128]{1,0:T(8,128)}', space=vmem, size = 0x5000, scoped, tag = 'scratch operand']
  %s0 = inlined_call_operand.vmem [shape: bf16[34,512], index: 0, kind: input, shape index: {}]
  %s1 = inlined_call_operand.vmem [shape: bf16[512,128], index: 1, kind: input, shape index: {}]
  %s2 = inlined_call_operand.vmem [shape: f32[1,128], index: 2, kind: input, shape index: {}]
  %s3 = inlined_call_operand.vmem [shape: bf16[34,128], index: 3, kind: input, shape index: {}]
  %s4 = inlined_call_operand.vmem [shape: bf16[34,128], index: 4, kind: output, shape index: {}]
  %s5 = sld [smem:[#allocation0]]
  $region34: #{clip_backbone_forward.18} parent=0
    _
  %s7 = ssub.s32 1, %s5
  %s8 = scalar_select 0, %s7, %s5
  // Predicated region
  $region2: #{clip_backbone_forward.18} parent=0 // pred_check
    _
  $region3: #{clip_backbone_forward.18} parent=0 // pred_check_branch
    %10 = sbr.rel (0) target = $region5
  $region4: #{clip_backbone_forward.18} parent=0 // pred_region
    _
  $region5: #{clip_backbone_forward.18} parent=0 // pred_fallthru
    _
  // Predicated region
  $region6: #{clip_backbone_forward.18} parent=0 // pred_check
    _
  $region7: #{clip_backbone_forward.18} parent=0 // pred_check_branch
    %12 = sbr.rel (0) target = $region9
  $region8: #{clip_backbone_forward.18} parent=0 // pred_region
    _
  $region9: #{clip_backbone_forward.18} parent=0 // pred_fallthru
    _
  // Predicated region
  $region10: #{clip_backbone_forward.18} parent=0 // pred_check
    _
  $region11: #{clip_backbone_forward.18} parent=0 // pred_check_branch
    %14 = sbr.rel (0) target = $region13
  $region12: #{clip_backbone_forward.18} parent=0 // pred_region
    _
  $region13: #{clip_backbone_forward.18} parent=0 // pred_fallthru
    _
  // Predicated region
  $region14: #{clip_backbone_forward.18} parent=0 // pred_check
    _
  $region15: #{clip_backbone_forward.18} parent=0 // pred_check_branch
    %16 = sbr.rel (0) target = $region17
  $region16: #{clip_backbone_forward.18} parent=0 // pred_region
    _
  $region17: #{clip_backbone_forward.18} parent=0 // pred_fallthru
    _
  %p17 = scmp.eq.s32.totalorder 0, 0
  // Predicated region
  $region18: #{clip_backbone_forward.18} parent=0 // pred_check
    %p18 = pneg %p17
  $region19: #{clip_backbone_forward.18} parent=0 // pred_check_branch
    %20 = sbr.rel (%p18) target = $region21
  $region20: #{clip_backbone_forward.18} parent=0 // pred_region
    %21 = vst [vmem:[#allocation2] sm:$0xff] 0.0
    %22 = vst [vmem:[#allocation2 + $0x8] sm:$0xff] 0.0
    %23 = vst [vmem:[#allocation2 + $0x10] sm:$0xff] 0.0
    %24 = vst [vmem:[#allocation2 + $0x18] sm:$0xff] 0.0
    %25 = vst [vmem:[#allocation2 + $0x20] sm:$0x3] 0.0
  $region21: #{clip_backbone_forward.18} parent=0 // pred_fallthru
    _
  %v26 = vld [vmem:[#allocation2] sm:$0xff]
  %v27 = vld [vmem:[#allocation2 + $0x8] sm:$0xff]
  %v28 = vld [vmem:[#allocation2 + $0x10] sm:$0xff]
  %v29 = vld [vmem:[#allocation2 + $0x18] sm:$0xff]
  %v30 = vld [vmem:[#allocation2 + $0x20] sm:$0x3]
  %v31 = vld [vmem:[%s0] sm:$0xff]
  %v32 = vld [vmem:[%s0 + $0x8] sm:$0xff]
  %v33 = vld [vmem:[%s0 + $0x10] sm:$0xff]
  %v34 = vld [vmem:[%s0 + $0x18] sm:$0xff]
  %v35 = vld [vmem:[%s0 + $0x20] sm:$0xff]
  %v36 = vld [vmem:[%s0 + $0x28] sm:$0xff]
  %v37 = vld [vmem:[%s0 + $0x30] sm:$0xff]
  %v38 = vld [vmem:[%s0 + $0x38] sm:$0xff]
  %v39 = vld [vmem:[%s0 + $0x40] sm:$0x11]
  %v40 = vld [vmem:[%s0 + $0x48] sm:$0x11]
  %v41 = vld [vmem:[%s1] sm:$0xf]
  %v42 = vld [vmem:[%s1 + $0x4] sm:$0xf]
  %v43 = vld [vmem:[%s1 + $0x8] sm:$0xf]
  %v44 = vld [vmem:[%s1 + $0xc] sm:$0xf]
  %v45 = vld [vmem:[%s1 + $0x10] sm:$0xf]
  %v46 = vld [vmem:[%s1 + $0x14] sm:$0xf]
  %v47 = vld [vmem:[%s1 + $0x18] sm:$0xf]
  %v48 = vld [vmem:[%s1 + $0x1c] sm:$0xf]
  %v49 = vld [vmem:[%s1 + $0x20] sm:$0xf]
  %v50 = vld [vmem:[%s1 + $0x24] sm:$0xf]
  %v51 = vld [vmem:[%s1 + $0x28] sm:$0xf]
  %v52 = vld [vmem:[%s1 + $0x2c] sm:$0xf]
  %v53 = vld [vmem:[%s1 + $0x30] sm:$0xf]
  %v54 = vld [vmem:[%s1 + $0x34] sm:$0xf]
  %v55 = vld [vmem:[%s1 + $0x38] sm:$0xf]
  %v56 = vld [vmem:[%s1 + $0x3c] sm:$0xf]
  %v57 = vld [vmem:[%s1 + $0x40] sm:$0xf]
  %v58 = vld [vmem:[%s1 + $0x44] sm:$0xf]
  %v59 = vld [vmem:[%s1 + $0x48] sm:$0xf]
  %v60 = vld [vmem:[%s1 + $0x4c] sm:$0xf]
  %v61 = vld [vmem:[%s1 + $0x50] sm:$0xf]
  %v62 = vld [vmem:[%s1 + $0x54] sm:$0xf]
  %v63 = vld [vmem:[%s1 + $0x58] sm:$0xf]
  %v64 = vld [vmem:[%s1 + $0x5c] sm:$0xf]
  %v65 = vld [vmem:[%s1 + $0x60] sm:$0xf]
  %v66 = vld [vmem:[%s1 + $0x64] sm:$0xf]
  %v67 = vld [vmem:[%s1 + $0x68] sm:$0xf]
  %v68 = vld [vmem:[%s1 + $0x6c] sm:$0xf]
  %v69 = vld [vmem:[%s1 + $0x70] sm:$0xf]
  %v70 = vld [vmem:[%s1 + $0x74] sm:$0xf]
  %v71 = vld [vmem:[%s1 + $0x78] sm:$0xf]
  %v72 = vld [vmem:[%s1 + $0x7c] sm:$0xf]
  %v73 = vld [vmem:[%s1 + $0x80] sm:$0xf]
  %v74 = vld [vmem:[%s1 + $0x84] sm:$0xf]
  %v75 = vld [vmem:[%s1 + $0x88] sm:$0xf]
  %v76 = vld [vmem:[%s1 + $0x8c] sm:$0xf]
  %v77 = vld [vmem:[%s1 + $0x90] sm:$0xf]
  %v78 = vld [vmem:[%s1 + $0x94] sm:$0xf]
  %v79 = vld [vmem:[%s1 + $0x98] sm:$0xf]
  %v80 = vld [vmem:[%s1 + $0x9c] sm:$0xf]
  %v81 = vld [vmem:[%s1 + $0xa0] sm:$0xf]
  %v82 = vld [vmem:[%s1 + $0xa4] sm:$0xf]
  %v83 = vld [vmem:[%s1 + $0xa8] sm:$0xf]
  %v84 = vld [vmem:[%s1 + $0xac] sm:$0xf]
  %v85 = vld [vmem:[%s1 + $0xb0] sm:$0xf]
  %v86 = vld [vmem:[%s1 + $0xb4] sm:$0xf]
  %v87 = vld [vmem:[%s1 + $0xb8] sm:$0xf]
  %v88 = vld [vmem:[%s1 + $0xbc] sm:$0xf]
  %v89 = vld [vmem:[%s1 + $0xc0] sm:$0xf]
  %v90 = vld [vmem:[%s1 + $0xc4] sm:$0xf]
  %v91 = vld [vmem:[%s1 + $0xc8] sm:$0xf]
  %v92 = vld [vmem:[%s1 + $0xcc] sm:$0xf]
  %v93 = vld [vmem:[%s1 + $0xd0] sm:$0xf]
  %v94 = vld [vmem:[%s1 + $0xd4] sm:$0xf]
  %v95 = vld [vmem:[%s1 + $0xd8] sm:$0xf]
  %v96 = vld [vmem:[%s1 + $0xdc] sm:$0xf]
  %v97 = vld [vmem:[%s1 + $0xe0] sm:$0xf]
  %v98 = vld [vmem:[%s1 + $0xe4] sm:$0xf]
  %v99 = vld [vmem:[%s1 + $0xe8] sm:$0xf]
  %v100 = vld [vmem:[%s1 + $0xec] sm:$0xf]
  %v101 = vld [vmem:[%s1 + $0xf0] sm:$0xf]
  %v102 = vld [vmem:[%s1 + $0xf4] sm:$0xf]
  %v103 = vld [vmem:[%s1 + $0xf8] sm:$0xf]
  %v104 = vld [vmem:[%s1 + $0xfc] sm:$0xf]
  %v115 = vunpack.c.l.b16 %v31
  %v116 = vunpack.c.h.b16 %v31
  %v117 = vunpack.c.l.b16 %v32
  %v118 = vunpack.c.h.b16 %v32
  %v119 = vunpack.c.l.b16 %v33
  %v120 = vunpack.c.h.b16 %v33
  %v121 = vunpack.c.l.b16 %v34
  %v122 = vunpack.c.h.b16 %v34
  %v123 = vunpack.c.l.b16 %v35
  %v124 = vunpack.c.h.b16 %v35
  %v125 = vunpack.c.l.b16 %v36
  %v126 = vunpack.c.h.b16 %v36
  %v127 = vunpack.c.l.b16 %v37
  %v128 = vunpack.c.h.b16 %v37
  %v129 = vunpack.c.l.b16 %v38
  %v130 = vunpack.c.h.b16 %v38
  %v131 = vunpack.c.l.b16 %v39
  %v132 = vunpack.c.h.b16 %v39
  %v133 = vunpack.c.l.b16 %v40
  %v134 = vunpack.c.h.b16 %v40
  %v135 = vpack.c.b16 %v119, %v115
  %v136 = vpack.c.b16 %v120, %v116
  %v137 = vpack.c.b16 %v121, %v117
  %v138 = vpack.c.b16 %v122, %v118
  %v139 = vpack.c.b16 %v127, %v123
  %v140 = vpack.c.b16 %v128, %v124
  %v141 = vpack.c.b16 %v129, %v125
  %v142 = vpack.c.b16 %v130, %v126
  %v143 = vpack.c.b16 %v131, %v131
  %v144 = vpack.c.b16 %v132, %v132
  %v145 = vpack.c.b16 %v133, %v133
  %v146 = vpack.c.b16 %v134, %v134
  %v223 = vunpack.c.l.b16 %v41
  %v224 = vunpack.c.l.b16 %v42
  %v225 = vunpack.c.l.b16 %v43
  %v226 = vunpack.c.l.b16 %v44
  %v227 = vunpack.c.l.b16 %v45
  %v228 = vunpack.c.l.b16 %v46
  %v229 = vunpack.c.l.b16 %v47
  %v230 = vunpack.c.l.b16 %v48
  %v231 = vunpack.c.l.b16 %v49
  %v232 = vunpack.c.l.b16 %v50
  %v233 = vunpack.c.l.b16 %v51
  %v234 = vunpack.c.l.b16 %v52
  %v235 = vunpack.c.l.b16 %v53
  %v236 = vunpack.c.l.b16 %v54
  %v237 = vunpack.c.l.b16 %v55
  %v238 = vunpack.c.l.b16 %v56
  %v239 = vunpack.c.l.b16 %v57
  %v240 = vunpack.c.l.b16 %v58
  %v241 = vunpack.c.l.b16 %v59
  %v242 = vunpack.c.l.b16 %v60
  %v243 = vunpack.c.l.b16 %v61
  %v244 = vunpack.c.l.b16 %v62
  %v245 = vunpack.c.l.b16 %v63
  %v246 = vunpack.c.l.b16 %v64
  %v247 = vunpack.c.l.b16 %v65
  %v248 = vunpack.c.l.b16 %v66
  %v249 = vunpack.c.l.b16 %v67
  %v250 = vunpack.c.l.b16 %v68
  %v251 = vunpack.c.l.b16 %v69
  %v252 = vunpack.c.l.b16 %v70
  %v253 = vunpack.c.l.b16 %v71
  %v254 = vunpack.c.l.b16 %v72
  %v255 = vunpack.c.l.b16 %v73
  %v256 = vunpack.c.l.b16 %v74
  %v257 = vunpack.c.l.b16 %v75
  %v258 = vunpack.c.l.b16 %v76
  %v259 = vunpack.c.l.b16 %v77
  %v260 = vunpack.c.l.b16 %v78
  %v261 = vunpack.c.l.b16 %v79
  %v262 = vunpack.c.l.b16 %v80
  %v263 = vunpack.c.l.b16 %v81
  %v264 = vunpack.c.l.b16 %v82
  %v265 = vunpack.c.l.b16 %v83
  %v266 = vunpack.c.l.b16 %v84
  %v267 = vunpack.c.l.b16 %v85
  %v268 = vunpack.c.l.b16 %v86
  %v269 = vunpack.c.l.b16 %v87
  %v270 = vunpack.c.l.b16 %v88
  %v271 = vunpack.c.l.b16 %v89
  %v272 = vunpack.c.l.b16 %v90
  %v273 = vunpack.c.l.b16 %v91
  %v274 = vunpack.c.l.b16 %v92
  %v275 = vunpack.c.l.b16 %v93
  %v276 = vunpack.c.l.b16 %v94
  %v277 = vunpack.c.l.b16 %v95
  %v278 = vunpack.c.l.b16 %v96
  %v279 = vunpack.c.l.b16 %v97
  %v280 = vunpack.c.l.b16 %v98
  %v281 = vunpack.c.l.b16 %v99
  %v282 = vunpack.c.l.b16 %v100
  %v283 = vunpack.c.l.b16 %v101
  %v284 = vunpack.c.l.b16 %v102
  %v285 = vunpack.c.l.b16 %v103
  %v286 = vunpack.c.l.b16 %v104
  %v287 = vpack.c.b16 %v224, %v223
  %v288 = vpack.c.b16 %v226, %v225
  %v289 = vpack.c.b16 %v228, %v227
  %v290 = vpack.c.b16 %v230, %v229
  %v291 = vpack.c.b16 %v232, %v231
  %v292 = vpack.c.b16 %v234, %v233
  %v293 = vpack.c.b16 %v236, %v235
  %v294 = vpack.c.b16 %v238, %v237
  %v295 = vpack.c.b16 %v240, %v239
  %v296 = vpack.c.b16 %v242, %v241
  %v297 = vpack.c.b16 %v244, %v243
  %v298 = vpack.c.b16 %v246, %v245
  %v299 = vpack.c.b16 %v248, %v247
  %v300 = vpack.c.b16 %v250, %v249
  %v301 = vpack.c.b16 %v252, %v251
  %v302 = vpack.c.b16 %v254, %v253
  %v303 = vpack.c.b16 %v256, %v255
  %v304 = vpack.c.b16 %v258, %v257
  %v305 = vpack.c.b16 %v260, %v259
  %v306 = vpack.c.b16 %v262, %v261
  %v307 = vpack.c.b16 %v264, %v263
  %v308 = vpack.c.b16 %v266, %v265
  %v309 = vpack.c.b16 %v268, %v267
  %v310 = vpack.c.b16 %v270, %v269
  %v311 = vpack.c.b16 %v272, %v271
  %v312 = vpack.c.b16 %v274, %v273
  %v313 = vpack.c.b16 %v276, %v275
  %v314 = vpack.c.b16 %v278, %v277
  %v315 = vpack.c.b16 %v280, %v279
  %v316 = vpack.c.b16 %v282, %v281
  %v317 = vpack.c.b16 %v284, %v283
  %v318 = vpack.c.b16 %v286, %v285
  %351 = vmatpush.bf16.msra.mxu0 %v294
  %352 = vmatpush.bf16.msra.mxu0 %v293
  %353 = vmatpush.bf16.msra.mxu0 %v292
  %354 = vmatpush.bf16.msra.mxu0 %v291
  %355 = vmatpush.bf16.msra.mxu0 %v290
  %356 = vmatpush.bf16.msra.mxu0 %v289
  %357 = vmatpush.bf16.msra.mxu0 %v288
  %358 = vmatpush.bf16.msra.mxu0 %v287
  %359 = vmatmul.bf16.gmra.mxu0 %v135
  %v360 = vpop.f32.mrf.mxu0
  %v361 = vadd.f32 0.0, %v360
  %v362 = vpop.f32.mrf.mxu0
  %v363 = vadd.f32 0.0, %v362
  %364 = vmatmul.bf16.gmra.mxu0 %v139
  %v365 = vpop.f32.mrf.mxu0
  %v366 = vadd.f32 0.0, %v365
  %v367 = vpop.f32.mrf.mxu0
  %v368 = vadd.f32 0.0, %v367
  %369 = vmatmul.bf16.gmra.mxu0 %v143
  %v370 = vpop.f32.mrf.mxu0
  %v371 = vadd.f32 0.0, %v370
  %v372 = vpop.f32.mrf.mxu0
  %373 = vdwg.mxu0
  %374 = vmatpush.bf16.msra.mxu0 %v302
  %375 = vmatpush.bf16.msra.mxu0 %v301
  %376 = vmatpush.bf16.msra.mxu0 %v300
  %377 = vmatpush.bf16.msra.mxu0 %v299
  %378 = vmatpush.bf16.msra.mxu0 %v298
  %379 = vmatpush.bf16.msra.mxu0 %v297
  %380 = vmatpush.bf16.msra.mxu0 %v296
  %381 = vmatpush.bf16.msra.mxu0 %v295
  %382 = vmatmul.bf16.gmra.mxu0 %v136
  %v383 = vpop.f32.mrf.mxu0
  %v384 = vadd.f32 %v361, %v383
  %v385 = vpop.f32.mrf.mxu0
  %v386 = vadd.f32 %v363, %v385
  %387 = vmatmul.bf16.gmra.mxu0 %v140
  %v388 = vpop.f32.mrf.mxu0
  %v389 = vadd.f32 %v366, %v388
  %v390 = vpop.f32.mrf.mxu0
  %v391 = vadd.f32 %v368, %v390
  %392 = vmatmul.bf16.gmra.mxu0 %v144
  %v393 = vpop.f32.mrf.mxu0
  %v394 = vadd.f32 %v371, %v393
  %v395 = vpop.f32.mrf.mxu0
  %396 = vdwg.mxu0
  %397 = vmatpush.bf16.msra.mxu0 %v310
  %398 = vmatpush.bf16.msra.mxu0 %v309
  %399 = vmatpush.bf16.msra.mxu0 %v308
  %400 = vmatpush.bf16.msra.mxu0 %v307
  %401 = vmatpush.bf16.msra.mxu0 %v306
  %402 = vmatpush.bf16.msra.mxu0 %v305
  %403 = vmatpush.bf16.msra.mxu0 %v304
  %404 = vmatpush.bf16.msra.mxu0 %v303
  %405 = vmatmul.bf16.gmra.mxu0 %v137
  %v406 = vpop.f32.mrf.mxu0
  %v407 = vadd.f32 %v384, %v406
  %v408 = vpop.f32.mrf.mxu0
  %v409 = vadd.f32 %v386, %v408
  %410 = vmatmul.bf16.gmra.mxu0 %v141
  %v411 = vpop.f32.mrf.mxu0
  %v412 = vadd.f32 %v389, %v411
  %v413 = vpop.f32.mrf.mxu0
  %v414 = vadd.f32 %v391, %v413
  %415 = vmatmul.bf16.gmra.mxu0 %v145
  %v416 = vpop.f32.mrf.mxu0
  %v417 = vadd.f32 %v394, %v416
  %v418 = vpop.f32.mrf.mxu0
  %419 = vdwg.mxu0
  %420 = vmatpush.bf16.msra.mxu0 %v318
  %421 = vmatpush.bf16.msra.mxu0 %v317
  %422 = vmatpush.bf16.msra.mxu0 %v316
  %423 = vmatpush.bf16.msra.mxu0 %v315
  %424 = vmatpush.bf16.msra.mxu0 %v314
  %425 = vmatpush.bf16.msra.mxu0 %v313
  %426 = vmatpush.bf16.msra.mxu0 %v312
  %427 = vmatpush.bf16.msra.mxu0 %v311
  %428 = vmatmul.bf16.gmra.mxu0 %v138
  %v429 = vpop.f32.mrf.mxu0
  %v430 = vadd.f32 %v407, %v429
  %v431 = vpop.f32.mrf.mxu0
  %v432 = vadd.f32 %v409, %v431
  %433 = vmatmul.bf16.gmra.mxu0 %v142
  %v434 = vpop.f32.mrf.mxu0
  %v435 = vadd.f32 %v412, %v434
  %v436 = vpop.f32.mrf.mxu0
  %v437 = vadd.f32 %v414, %v436
  %438 = vmatmul.bf16.gmra.mxu0 %v146
  %v439 = vpop.f32.mrf.mxu0
  %v440 = vadd.f32 %v417, %v439
  %v441 = vpop.f32.mrf.mxu0
  %442 = vdwg.mxu0
  %v443 = vadd.f32 %v26, %v430
  %v444 = vadd.f32 %v27, %v432
  %v445 = vadd.f32 %v28, %v435
  %v446 = vadd.f32 %v29, %v437
  %v447 = vadd.f32 %v30, %v440
  %448 = vst [vmem:[#allocation2] sm:$0xff] %v443
  %449 = vst [vmem:[#allocation2 + $0x8] sm:$0xff] %v444
  %450 = vst [vmem:[#allocation2 + $0x10] sm:$0xff] %v445
  %451 = vst [vmem:[#allocation2 + $0x18] sm:$0xff] %v446
  %452 = vst [vmem:[#allocation2 + $0x20] sm:$0x3] %v447
  // Predicated region
  $region22: #{clip_backbone_forward.18} parent=0 // pred_check
    %p453 = pneg %p17
  $region23: #{clip_backbone_forward.18} parent=0 // pred_check_branch
    %455 = sbr.rel (%p453) target = $region25
  $region24: #{clip_backbone_forward.18} parent=0 // pred_region
    %v456 = vld [vmem:[#allocation2] sm:$0xff]
    %v457 = vld [vmem:[#allocation2 + $0x8] sm:$0xff]
    %v458 = vld [vmem:[#allocation2 + $0x10] sm:$0xff]
    %v459 = vld [vmem:[#allocation2 + $0x18] sm:$0xff]
    %v460 = vld [vmem:[#allocation2 + $0x20] sm:$0x3]
    %v461 = vld [vmem:[%s2] sm:$0x1]
    %v463 = vperm.slane %v461, 0
    %v465 = vadd.f32 %v456, %v463
    %v466 = vadd.f32 %v457, %v463
    %v467 = vadd.f32 %v458, %v463
    %v468 = vadd.f32 %v459, %v463
    %v469 = vadd.f32 %v460, %v463
    %v470 = vld [vmem:[%s3] sm:$0xf]
    %v471 = vld [vmem:[%s3 + $0x4] sm:$0xf]
    %v472 = vld [vmem:[%s3 + $0x8] sm:$0xf]
    %v473 = vld [vmem:[%s3 + $0xc] sm:$0xf]
    %v474 = vld [vmem:[%s3 + $0x10] sm:$0x1]
    %v475 = vunpack.c.l.bf16 %v470
    %v476 = vunpack.c.l.bf16 %v471
    %v477 = vunpack.c.l.bf16 %v472
    %v478 = vunpack.c.l.bf16 %v473
    %v479 = vunpack.c.l.bf16 %v474
    %v480 = vadd.f32 %v465, %v475
    %v481 = vadd.f32 %v466, %v476
    %v482 = vadd.f32 %v467, %v477
    %v483 = vadd.f32 %v468, %v478
    %v484 = vadd.f32 %v469, %v479
    %v485 = vpack.c.bf16 %v480, %v480
    %v486 = vpack.c.bf16 %v481, %v481
    %v487 = vpack.c.bf16 %v482, %v482
    %v488 = vpack.c.bf16 %v483, %v483
    %v489 = vpack.c.bf16 %v484, %v484
    %490 = vst [vmem:[%s4] sm:$0xf] %v485
    %491 = vst [vmem:[%s4 + $0x4] sm:$0xf] %v486
    %492 = vst [vmem:[%s4 + $0x8] sm:$0xf] %v487
    %493 = vst [vmem:[%s4 + $0xc] sm:$0xf] %v488
    %494 = vst [vmem:[%s4 + $0x10] sm:$0x1] %v489
  $region25: #{clip_backbone_forward.18} parent=0 // pred_fallthru
    _
  // Predicated region
  $region26: #{clip_backbone_forward.18} parent=0 // pred_check
    _
  $region27: #{clip_backbone_forward.18} parent=0 // pred_check_branch
    %496 = sbr.rel (0) target = $region29
  $region28: #{clip_backbone_forward.18} parent=0 // pred_region
    _
  $region29: #{clip_backbone_forward.18} parent=0 // pred_fallthru
    _
  // Predicated region
  $region30: #{clip_backbone_forward.18} parent=0 // pred_check
    _
  $region31: #{clip_backbone_forward.18} parent=0 // pred_check_branch
    %498 = sbr.rel (0) target = $region33
  $region32: #{clip_backbone_forward.18} parent=0 // pred_region
    _
  $region33: #{clip_backbone_forward.18} parent=0 // pred_fallthru
    _

// kernel: clip_backbone_forward.17
$region0: #{clip_backbone_forward.17}
  #allocation0 [shape = 'u32[]', space=smem, size = 0x4, offset = 0x4, fixed_abs, tag = 'smem constant byte address 0x4 - core index']
  #allocation1 [shape = 'u32[72,128]{1,0:T(1,128)}', space=vmem, size = 0x9000, scoped, tag = 'internal scratch']
  #allocation2 [shape = 'f32[34,128]{1,0:T(8,128)}', space=vmem, size = 0x5000, scoped, tag = 'scratch operand']
  %s0 = inlined_call_operand.vmem [shape: bf16[34,128], index: 0, kind: input, shape index: {}]
  %s1 = inlined_call_operand.vmem [shape: f32[1,128], index: 1, kind: input, shape index: {}]
  %s2 = inlined_call_operand.vmem [shape: f32[1,128], index: 2, kind: input, shape index: {}]
  %s3 = inlined_call_operand.vmem [shape: bf16[128,512], index: 3, kind: input, shape index: {}]
  %s4 = inlined_call_operand.vmem [shape: f32[1,512], index: 4, kind: input, shape index: {}]
  %s5 = inlined_call_operand.vmem [shape: bf16[34,512], index: 5, kind: output, shape index: {0}]
  %s6 = inlined_call_operand.vmem [shape: f32[34,128], index: 6, kind: output, shape index: {1}]
  %7 = xla_tuple %s5, %s6
  %s8 = sld [smem:[#allocation0]]
  $region42: #{clip_backbone_forward.17} parent=0
    _
  %s10 = ssub.s32 1, %s8
  %s11 = scalar_select 0, %s10, %s8
  // Predicated region
  $region2: #{clip_backbone_forward.17} parent=0 // pred_check
    _
  $region3: #{clip_backbone_forward.17} parent=0 // pred_check_branch
    %13 = sbr.rel (0) target = $region5
  $region4: #{clip_backbone_forward.17} parent=0 // pred_region
    _
  $region5: #{clip_backbone_forward.17} parent=0 // pred_fallthru
    _
  // Predicated region
  $region6: #{clip_backbone_forward.17} parent=0 // pred_check
    _
  $region7: #{clip_backbone_forward.17} parent=0 // pred_check_branch
    %15 = sbr.rel (0) target = $region9
  $region8: #{clip_backbone_forward.17} parent=0 // pred_region
    _
  $region9: #{clip_backbone_forward.17} parent=0 // pred_fallthru
    _
  // Predicated region
  $region10: #{clip_backbone_forward.17} parent=0 // pred_check
    _
  $region11: #{clip_backbone_forward.17} parent=0 // pred_check_branch
    %17 = sbr.rel (0) target = $region13
  $region12: #{clip_backbone_forward.17} parent=0 // pred_region
    _
  $region13: #{clip_backbone_forward.17} parent=0 // pred_fallthru
    _
  // Predicated region
  $region14: #{clip_backbone_forward.17} parent=0 // pred_check
    _
  $region15: #{clip_backbone_forward.17} parent=0 // pred_check_branch
    %19 = sbr.rel (0) target = $region17
  $region16: #{clip_backbone_forward.17} parent=0 // pred_region
    _
  $region17: #{clip_backbone_forward.17} parent=0 // pred_fallthru
    _
  // Predicated region
  $region18: #{clip_backbone_forward.17} parent=0 // pred_check
    _
  $region19: #{clip_backbone_forward.17} parent=0 // pred_check_branch
    %21 = sbr.rel (0) target = $region21
  $region20: #{clip_backbone_forward.17} parent=0 // pred_region
    _
  $region21: #{clip_backbone_forward.17} parent=0 // pred_fallthru
    _
  %p22 = scmp.eq.s32.totalorder 0, 0
  // Predicated region
  $region22: #{clip_backbone_forward.17} parent=0 // pred_check
    %p23 = pneg %p22
  $region23: #{clip_backbone_forward.17} parent=0 // pred_check_branch
    %25 = sbr.rel (%p23) target = $region25
  $region24: #{clip_backbone_forward.17} parent=0 // pred_region
    %v26 = vld [vmem:[%s0] sm:$0xf]
    %v27 = vld [vmem:[%s0 + $0x4] sm:$0xf]
    %v28 = vld [vmem:[%s0 + $0x8] sm:$0xf]
    %v29 = vld [vmem:[%s0 + $0xc] sm:$0xf]
    %v30 = vld [vmem:[%s0 + $0x10] sm:$0x1]
    %v31 = vunpack.c.l.bf16 %v26
    %v32 = vunpack.c.l.bf16 %v27
    %v33 = vunpack.c.l.bf16 %v28
    %v34 = vunpack.c.l.bf16 %v29
    %v35 = vunpack.c.l.bf16 %v30
    %36 = vadd.xlane.f32.xlu0 %v31
    %v37 = vpop.xlane.xlu0 %36
    %38 = vadd.xlane.f32.xlu0 %v32
    %v39 = vpop.xlane.xlu0 %38
    %40 = vadd.xlane.f32.xlu0 %v33
    %v41 = vpop.xlane.xlu0 %40
    %42 = vadd.xlane.f32.xlu0 %v34
    %v43 = vpop.xlane.xlu0 %42
    %vm44 = vcmask 1041408
    %v45 = vsel %vm44, %v35, 0.0
    %46 = vadd.xlane.f32.xlu0 %v45
    %v47 = vpop.xlane.xlu0 %46
    %v48 = vrcp.pop 128.0
    %v49 = vmul.f32 128.0, %v48
    %v50 = vsub.f32 1.0, %v49
    %v51 = vmul.f32 %v48, %v50
    %v52 = vadd.f32 %v48, %v51
    %vm53 = vweird.f32 %v48
    %v54 = vsel %vm53, %v48, %v52
    %v55 = vmul.f32 %v37, %v54
    %v56 = vmul.f32 %v39, %v54
    %v57 = vmul.f32 %v41, %v54
    %v58 = vmul.f32 %v43, %v54
    %v59 = vmul.f32 %v47, %v54
    %v60 = vsub.f32 %v31, %v55
    %v61 = vsub.f32 %v32, %v56
    %v62 = vsub.f32 %v33, %v57
    %v63 = vsub.f32 %v34, %v58
    %v64 = vsub.f32 %v35, %v59
    %v65 = vmul.f32 %v60, %v60
    %v66 = vmul.f32 %v61, %v61
    %v67 = vmul.f32 %v62, %v62
    %v68 = vmul.f32 %v63, %v63
    %v69 = vmul.f32 %v64, %v64
    %70 = vadd.xlane.f32.xlu0 %v65
    %v71 = vpop.xlane.xlu0 %70
    %72 = vadd.xlane.f32.xlu0 %v66
    %v73 = vpop.xlane.xlu0 %72
    %74 = vadd.xlane.f32.xlu0 %v67
    %v75 = vpop.xlane.xlu0 %74
    %76 = vadd.xlane.f32.xlu0 %v68
    %v77 = vpop.xlane.xlu0 %76
    %v78 = vsel %vm44, %v69, 0.0
    %79 = vadd.xlane.f32.xlu0 %v78
    %v80 = vpop.xlane.xlu0 %79
    %v81 = vmul.f32 %v71, %v54
    %v82 = vmul.f32 %v73, %v54
    %v83 = vmul.f32 %v75, %v54
    %v84 = vmul.f32 %v77, %v54
    %v85 = vmul.f32 %v80, %v54
    %v86 = vadd.f32 %v81, 1e-05
    %v87 = vadd.f32 %v82, 1e-05
    %v88 = vadd.f32 %v83, 1e-05
    %v89 = vadd.f32 %v84, 1e-05
    %v90 = vadd.f32 %v85, 1e-05
    %v91 = vrsqrt.pop %v86
    %v92 = vmul.f32 %v91, %v86
    %v93 = vmul.f32 %v92, %v91
    %v94 = vmul.f32 0.5, %v93
    %v95 = vsub.f32 1.5, %v94
    %v96 = vmul.f32 %v91, %v95
    %vm97 = vweird.f32 %v86
    %vm98 = vweird.f32 %v91
    %vm99 = vmor %vm97, %vm98
    %v100 = vsel %vm99, %v91, %v96
    %v101 = vrsqrt.pop %v87
    %v102 = vmul.f32 %v101, %v87
    %v103 = vmul.f32 %v102, %v101
    %v104 = vmul.f32 0.5, %v103
    %v105 = vsub.f32 1.5, %v104
    %v106 = vmul.f32 %v101, %v105
    %vm107 = vweird.f32 %v87
    %vm108 = vweird.f32 %v101
    %vm109 = vmor %vm107, %vm108
    %v110 = vsel %vm109, %v101, %v106
    %v111 = vrsqrt.pop %v88
    %v112 = vmul.f32 %v111, %v88
    %v113 = vmul.f32 %v112, %v111
    %v114 = vmul.f32 0.5, %v113
    %v115 = vsub.f32 1.5, %v114
    %v116 = vmul.f32 %v111, %v115
    %vm117 = vweird.f32 %v88
    %vm118 = vweird.f32 %v111
    %vm119 = vmor %vm117, %vm118
    %v120 = vsel %vm119, %v111, %v116
    %v121 = vrsqrt.pop %v89
    %v122 = vmul.f32 %v121, %v89
    %v123 = vmul.f32 %v122, %v121
    %v124 = vmul.f32 0.5, %v123
    %v125 = vsub.f32 1.5, %v124
    %v126 = vmul.f32 %v121, %v125
    %vm127 = vweird.f32 %v89
    %vm128 = vweird.f32 %v121
    %vm129 = vmor %vm127, %vm128
    %v130 = vsel %vm129, %v121, %v126
    %v131 = vrsqrt.pop %v90
    %v132 = vmul.f32 %v131, %v90
    %v133 = vmul.f32 %v132, %v131
    %v134 = vmul.f32 0.5, %v133
    %v135 = vsub.f32 1.5, %v134
    %v136 = vmul.f32 %v131, %v135
    %vm137 = vweird.f32 %v90
    %vm138 = vweird.f32 %v131
    %vm139 = vmor %vm137, %vm138
    %v140 = vsel %vm139, %v131, %v136
    %v141 = vmul.f32 %v60, %v100
    %v142 = vmul.f32 %v61, %v110
    %v143 = vmul.f32 %v62, %v120
    %v144 = vmul.f32 %v63, %v130
    %v145 = vmul.f32 %v64, %v140
    %v146 = vld [vmem:[%s1] sm:$0x1]
    %v148 = vperm.slane %v146, 0
    %v150 = vmul.f32 %v141, %v148
    %v151 = vmul.f32 %v142, %v148
    %v152 = vmul.f32 %v143, %v148
    %v153 = vmul.f32 %v144, %v148
    %v154 = vmul.f32 %v145, %v148
    %v155 = vld [vmem:[%s2] sm:$0x1]
    %v157 = vperm.slane %v155, 0
    %v159 = vadd.f32 %v150, %v157
    %v160 = vadd.f32 %v151, %v157
    %v161 = vadd.f32 %v152, %v157
    %v162 = vadd.f32 %v153, %v157
    %v163 = vadd.f32 %v154, %v157
    %164 = vst [vmem:[#allocation2] sm:$0xff] %v159
    %165 = vst [vmem:[#allocation2 + $0x8] sm:$0xff] %v160
    %166 = vst [vmem:[#allocation2 + $0x10] sm:$0xff] %v161
    %167 = vst [vmem:[#allocation2 + $0x18] sm:$0xff] %v162
    %168 = vst [vmem:[#allocation2 + $0x20] sm:$0x3] %v163
    %169 = vst [vmem:[%s6] sm:$0xff] %v159
    %170 = vst [vmem:[%s6 + $0x8] sm:$0xff] %v160
    %171 = vst [vmem:[%s6 + $0x10] sm:$0xff] %v161
    %172 = vst [vmem:[%s6 + $0x18] sm:$0xff] %v162
    %173 = vst [vmem:[%s6 + $0x20] sm:$0x3] %v163
  $region25: #{clip_backbone_forward.17} parent=0 // pred_fallthru
    _
  %v174 = vld [vmem:[#allocation2] sm:$0xff]
  %v175 = vld [vmem:[#allocation2 + $0x8] sm:$0xff]
  %v176 = vld [vmem:[#allocation2 + $0x10] sm:$0xff]
  %v177 = vld [vmem:[#allocation2 + $0x18] sm:$0xff]
  %v178 = vld [vmem:[#allocation2 + $0x20] sm:$0x3]
  %v179 = vpack.c.bf16 %v175, %v174
  %v180 = vpack.c.bf16 %v177, %v176
  %v181 = vpack.c.bf16 %v178, %v178
  %v182 = vld [vmem:[%s3] sm:$0xff]
  %v183 = vld [vmem:[%s3 + $0x8] sm:$0xff]
  %v184 = vld [vmem:[%s3 + $0x10] sm:$0xff]
  %v185 = vld [vmem:[%s3 + $0x18] sm:$0xff]
  %v186 = vld [vmem:[%s3 + $0x20] sm:$0xff]
  %v187 = vld [vmem:[%s3 + $0x28] sm:$0xff]
  %v188 = vld [vmem:[%s3 + $0x30] sm:$0xff]
  %v189 = vld [vmem:[%s3 + $0x38] sm:$0xff]
  %v190 = vld [vmem:[%s3 + $0x40] sm:$0xff]
  %v191 = vld [vmem:[%s3 + $0x48] sm:$0xff]
  %v192 = vld [vmem:[%s3 + $0x50] sm:$0xff]
  %v193 = vld [vmem:[%s3 + $0x58] sm:$0xff]
  %v194 = vld [vmem:[%s3 + $0x60] sm:$0xff]
  %v195 = vld [vmem:[%s3 + $0x68] sm:$0xff]
  %v196 = vld [vmem:[%s3 + $0x70] sm:$0xff]
  %v197 = vld [vmem:[%s3 + $0x78] sm:$0xff]
  %v198 = vld [vmem:[%s3 + $0x80] sm:$0xff]
  %v199 = vld [vmem:[%s3 + $0x88] sm:$0xff]
  %v200 = vld [vmem:[%s3 + $0x90] sm:$0xff]
  %v201 = vld [vmem:[%s3 + $0x98] sm:$0xff]
  %v202 = vld [vmem:[%s3 + $0xa0] sm:$0xff]
  %v203 = vld [vmem:[%s3 + $0xa8] sm:$0xff]
  %v204 = vld [vmem:[%s3 + $0xb0] sm:$0xff]
  %v205 = vld [vmem:[%s3 + $0xb8] sm:$0xff]
  %v206 = vld [vmem:[%s3 + $0xc0] sm:$0xff]
  %v207 = vld [vmem:[%s3 + $0xc8] sm:$0xff]
  %v208 = vld [vmem:[%s3 + $0xd0] sm:$0xff]
  %v209 = vld [vmem:[%s3 + $0xd8] sm:$0xff]
  %v210 = vld [vmem:[%s3 + $0xe0] sm:$0xff]
  %v211 = vld [vmem:[%s3 + $0xe8] sm:$0xff]
  %v212 = vld [vmem:[%s3 + $0xf0] sm:$0xff]
  %v213 = vld [vmem:[%s3 + $0xf8] sm:$0xff]
  %v214 = vld [vmem:[%s4] sm:$0xf]
  %v216 = vperm.slane %v214, 0
  %v217 = vperm.slane %v214, 1
  %v218 = vperm.slane %v214, 2
  %v219 = vperm.slane %v214, 3
  %v256 = vunpack.c.l.b16 %v182
  %v257 = vunpack.c.h.b16 %v182
  %v258 = vunpack.c.l.b16 %v183
  %v259 = vunpack.c.h.b16 %v183
  %v260 = vunpack.c.l.b16 %v184
  %v261 = vunpack.c.h.b16 %v184
  %v262 = vunpack.c.l.b16 %v185
  %v263 = vunpack.c.h.b16 %v185
  %v264 = vunpack.c.l.b16 %v186
  %v265 = vunpack.c.h.b16 %v186
  %v266 = vunpack.c.l.b16 %v187
  %v267 = vunpack.c.h.b16 %v187
  %v268 = vunpack.c.l.b16 %v188
  %v269 = vunpack.c.h.b16 %v188
  %v270 = vunpack.c.l.b16 %v189
  %v271 = vunpack.c.h.b16 %v189
  %v272 = vunpack.c.l.b16 %v190
  %v273 = vunpack.c.h.b16 %v190
  %v274 = vunpack.c.l.b16 %v191
  %v275 = vunpack.c.h.b16 %v191
  %v276 = vunpack.c.l.b16 %v192
  %v277 = vunpack.c.h.b16 %v192
  %v278 = vunpack.c.l.b16 %v193
  %v279 = vunpack.c.h.b16 %v193
  %v280 = vunpack.c.l.b16 %v194
  %v281 = vunpack.c.h.b16 %v194
  %v282 = vunpack.c.l.b16 %v195
  %v283 = vunpack.c.h.b16 %v195
  %v284 = vunpack.c.l.b16 %v196
  %v285 = vunpack.c.h.b16 %v196
  %v286 = vunpack.c.l.b16 %v197
  %v287 = vunpack.c.h.b16 %v197
  %v288 = vunpack.c.l.b16 %v198
  %v289 = vunpack.c.h.b16 %v198
  %v290 = vunpack.c.l.b16 %v199
  %v291 = vunpack.c.h.b16 %v199
  %v292 = vunpack.c.l.b16 %v200
  %v293 = vunpack.c.h.b16 %v200
  %v294 = vunpack.c.l.b16 %v201
  %v295 = vunpack.c.h.b16 %v201
  %v296 = vunpack.c.l.b16 %v202
  %v297 = vunpack.c.h.b16 %v202
  %v298 = vunpack.c.l.b16 %v203
  %v299 = vunpack.c.h.b16 %v203
  %v300 = vunpack.c.l.b16 %v204
  %v301 = vunpack.c.h.b16 %v204
  %v302 = vunpack.c.l.b16 %v205
  %v303 = vunpack.c.h.b16 %v205
  %v304 = vunpack.c.l.b16 %v206
  %v305 = vunpack.c.h.b16 %v206
  %v306 = vunpack.c.l.b16 %v207
  %v307 = vunpack.c.h.b16 %v207
  %v308 = vunpack.c.l.b16 %v208
  %v309 = vunpack.c.h.b16 %v208
  %v310 = vunpack.c.l.b16 %v209
  %v311 = vunpack.c.h.b16 %v209
  %v312 = vunpack.c.l.b16 %v210
  %v313 = vunpack.c.h.b16 %v210
  %v314 = vunpack.c.l.b16 %v211
  %v315 = vunpack.c.h.b16 %v211
  %v316 = vunpack.c.l.b16 %v212
  %v317 = vunpack.c.h.b16 %v212
  %v318 = vunpack.c.l.b16 %v213
  %v319 = vunpack.c.h.b16 %v213
  %v320 = vpack.c.b16 %v260, %v256
  %v321 = vpack.c.b16 %v261, %v257
  %v322 = vpack.c.b16 %v262, %v258
  %v323 = vpack.c.b16 %v263, %v259
  %v324 = vpack.c.b16 %v268, %v264
  %v325 = vpack.c.b16 %v269, %v265
  %v326 = vpack.c.b16 %v270, %v266
  %v327 = vpack.c.b16 %v271, %v267
  %v328 = vpack.c.b16 %v276, %v272
  %v329 = vpack.c.b16 %v277, %v273
  %v330 = vpack.c.b16 %v278, %v274
  %v331 = vpack.c.b16 %v279, %v275
  %v332 = vpack.c.b16 %v284, %v280
  %v333 = vpack.c.b16 %v285, %v281
  %v334 = vpack.c.b16 %v286, %v282
  %v335 = vpack.c.b16 %v287, %v283
  %v336 = vpack.c.b16 %v292, %v288
  %v337 = vpack.c.b16 %v293, %v289
  %v338 = vpack.c.b16 %v294, %v290
  %v339 = vpack.c.b16 %v295, %v291
  %v340 = vpack.c.b16 %v300, %v296
  %v341 = vpack.c.b16 %v301, %v297
  %v342 = vpack.c.b16 %v302, %v298
  %v343 = vpack.c.b16 %v303, %v299
  %v344 = vpack.c.b16 %v308, %v304
  %v345 = vpack.c.b16 %v309, %v305
  %v346 = vpack.c.b16 %v310, %v306
  %v347 = vpack.c.b16 %v311, %v307
  %v348 = vpack.c.b16 %v316, %v312
  %v349 = vpack.c.b16 %v317, %v313
  %v350 = vpack.c.b16 %v318, %v314
  %v351 = vpack.c.b16 %v319, %v315
  %384 = vmatpush.bf16.msra.mxu0 %v348
  %385 = vmatpush.bf16.msra.mxu0 %v344
  %386 = vmatpush.bf16.msra.mxu0 %v340
  %387 = vmatpush.bf16.msra.mxu0 %v336
  %388 = vmatpush.bf16.msra.mxu0 %v332
  %389 = vmatpush.bf16.msra.mxu0 %v328
  %390 = vmatpush.bf16.msra.mxu0 %v324
  %391 = vmatpush.bf16.msra.mxu0 %v320
  %392 = vmatmul.bf16.gmra.mxu0 %v179
  %v393 = vpop.f32.mrf.mxu0
  %v394 = vadd.f32 %v216, %v393
  %v395 = vpop.f32.mrf.mxu0
  %v396 = vadd.f32 %v216, %v395
  %397 = vmatmul.bf16.gmra.mxu0 %v180
  %v398 = vpop.f32.mrf.mxu0
  %v399 = vadd.f32 %v216, %v398
  %v400 = vpop.f32.mrf.mxu0
  %v401 = vadd.f32 %v216, %v400
  %402 = vmatmul.bf16.gmra.mxu0 %v181
  %v403 = vpop.f32.mrf.mxu0
  %v404 = vadd.f32 %v216, %v403
  %v405 = vpop.f32.mrf.mxu0
  %406 = vdwg.mxu0
  %407 = vmatpush.bf16.msra.mxu0 %v349
  %408 = vmatpush.bf16.msra.mxu0 %v345
  %409 = vmatpush.bf16.msra.mxu0 %v341
  %410 = vmatpush.bf16.msra.mxu0 %v337
  %411 = vmatpush.bf16.msra.mxu0 %v333
  %412 = vmatpush.bf16.msra.mxu0 %v329
  %413 = vmatpush.bf16.msra.mxu0 %v325
  %414 = vmatpush.bf16.msra.mxu0 %v321
  %415 = vmatmul.bf16.gmra.mxu0 %v179
  %v416 = vpop.f32.mrf.mxu0
  %v417 = vadd.f32 %v217, %v416
  %v418 = vpop.f32.mrf.mxu0
  %v419 = vadd.f32 %v217, %v418
  %420 = vmatmul.bf16.gmra.mxu0 %v180
  %v421 = vpop.f32.mrf.mxu0
  %v422 = vadd.f32 %v217, %v421
  %v423 = vpop.f32.mrf.mxu0
  %v424 = vadd.f32 %v217, %v423
  %425 = vmatmul.bf16.gmra.mxu0 %v181
  %v426 = vpop.f32.mrf.mxu0
  %v427 = vadd.f32 %v217, %v426
  %v428 = vpop.f32.mrf.mxu0
  %429 = vdwg.mxu0
  %430 = vmatpush.bf16.msra.mxu0 %v350
  %431 = vmatpush.bf16.msra.mxu0 %v346
  %432 = vmatpush.bf16.msra.mxu0 %v342
  %433 = vmatpush.bf16.msra.mxu0 %v338
  %434 = vmatpush.bf16.msra.mxu0 %v334
  %435 = vmatpush.bf16.msra.mxu0 %v330
  %436 = vmatpush.bf16.msra.mxu0 %v326
  %437 = vmatpush.bf16.msra.mxu0 %v322
  %438 = vmatmul.bf16.gmra.mxu0 %v179
  %v439 = vpop.f32.mrf.mxu0
  %v440 = vadd.f32 %v218, %v439
  %v441 = vpop.f32.mrf.mxu0
  %v442 = vadd.f32 %v218, %v441
  %443 = vmatmul.bf16.gmra.mxu0 %v180
  %v444 = vpop.f32.mrf.mxu0
  %v445 = vadd.f32 %v218, %v444
  %v446 = vpop.f32.mrf.mxu0
  %v447 = vadd.f32 %v218, %v446
  %448 = vmatmul.bf16.gmra.mxu0 %v181
  %v449 = vpop.f32.mrf.mxu0
  %v450 = vadd.f32 %v218, %v449
  %v451 = vpop.f32.mrf.mxu0
  %452 = vdwg.mxu0
  %453 = vmatpush.bf16.msra.mxu0 %v351
  %454 = vmatpush.bf16.msra.mxu0 %v347
  %455 = vmatpush.bf16.msra.mxu0 %v343
  %456 = vmatpush.bf16.msra.mxu0 %v339
  %457 = vmatpush.bf16.msra.mxu0 %v335
  %458 = vmatpush.bf16.msra.mxu0 %v331
  %459 = vmatpush.bf16.msra.mxu0 %v327
  %460 = vmatpush.bf16.msra.mxu0 %v323
  %461 = vmatmul.bf16.gmra.mxu0 %v179
  %v462 = vpop.f32.mrf.mxu0
  %v463 = vadd.f32 %v219, %v462
  %v464 = vpop.f32.mrf.mxu0
  %v465 = vadd.f32 %v219, %v464
  %466 = vmatmul.bf16.gmra.mxu0 %v180
  %v467 = vpop.f32.mrf.mxu0
  %v468 = vadd.f32 %v219, %v467
  %v469 = vpop.f32.mrf.mxu0
  %v470 = vadd.f32 %v219, %v469
  %471 = vmatmul.bf16.gmra.mxu0 %v181
  %v472 = vpop.f32.mrf.mxu0
  %v473 = vadd.f32 %v219, %v472
  %v474 = vpop.f32.mrf.mxu0
  %475 = vdwg.mxu0
  %v476 = vmul.f32 %v394, 1.702
  %v477 = vmul.f32 %v417, 1.702
  %v478 = vmul.f32 %v440, 1.702
  %v479 = vmul.f32 %v463, 1.702
  %v480 = vmul.f32 %v396, 1.702
  %v481 = vmul.f32 %v419, 1.702
  %v482 = vmul.f32 %v442, 1.702
  %v483 = vmul.f32 %v465, 1.702
  %v484 = vmul.f32 %v399, 1.702
  %v485 = vmul.f32 %v422, 1.702
  %v486 = vmul.f32 %v445, 1.702
  %v487 = vmul.f32 %v468, 1.702
  %v488 = vmul.f32 %v401, 1.702
  %v489 = vmul.f32 %v424, 1.702
  %v490 = vmul.f32 %v447, 1.702
  %v491 = vmul.f32 %v470, 1.702
  %v492 = vmul.f32 %v404, 1.702
  %v493 = vmul.f32 %v427, 1.702
  %v494 = vmul.f32 %v450, 1.702
  %v495 = vmul.f32 %v473, 1.702
  %v496 = vxor.u32 %v476, 2147483648
  %v497 = vxor.u32 %v477, 2147483648
  %v498 = vxor.u32 %v478, 2147483648
  %v499 = vxor.u32 %v479, 2147483648
  %v500 = vxor.u32 %v480, 2147483648
  %v501 = vxor.u32 %v481, 2147483648
  %v502 = vxor.u32 %v482, 2147483648
  %v503 = vxor.u32 %v483, 2147483648
  %v504 = vxor.u32 %v484, 2147483648
  %v505 = vxor.u32 %v485, 2147483648
  %v506 = vxor.u32 %v486, 2147483648
  %v507 = vxor.u32 %v487, 2147483648
  %v508 = vxor.u32 %v488, 2147483648
  %v509 = vxor.u32 %v489, 2147483648
  %v510 = vxor.u32 %v490, 2147483648
  %v511 = vxor.u32 %v491, 2147483648
  %v512 = vxor.u32 %v492, 2147483648
  %v513 = vxor.u32 %v493, 2147483648
  %v514 = vxor.u32 %v494, 2147483648
  %v515 = vxor.u32 %v495, 2147483648
  %v516 = vmul.f32 %v496, 1.442695
  %v517 = vpow.pop %v516
  %v518 = vmul.f32 %v497, 1.442695
  %v519 = vpow.pop %v518
  %v520 = vmul.f32 %v498, 1.442695
  %v521 = vpow.pop %v520
  %v522 = vmul.f32 %v499, 1.442695
  %v523 = vpow.pop %v522
  %v524 = vmul.f32 %v500, 1.442695
  %v525 = vpow.pop %v524
  %v526 = vmul.f32 %v501, 1.442695
  %v527 = vpow.pop %v526
  %v528 = vmul.f32 %v502, 1.442695
  %v529 = vpow.pop %v528
  %v530 = vmul.f32 %v503, 1.442695
  %v531 = vpow.pop %v530
  %v532 = vmul.f32 %v504, 1.442695
  %v533 = vpow.pop %v532
  %v534 = vmul.f32 %v505, 1.442695
  %v535 = vpow.pop %v534
  %v536 = vmul.f32 %v506, 1.442695
  %v537 = vpow.pop %v536
  %v538 = vmul.f32 %v507, 1.442695
  %v539 = vpow.pop %v538
  %v540 = vmul.f32 %v508, 1.442695
  %v541 = vpow.pop %v540
  %v542 = vmul.f32 %v509, 1.442695
  %v543 = vpow.pop %v542
  %v544 = vmul.f32 %v510, 1.442695
  %v545 = vpow.pop %v544
  %v546 = vmul.f32 %v511, 1.442695
  %v547 = vpow.pop %v546
  %v548 = vmul.f32 %v512, 1.442695
  %v549 = vpow.pop %v548
  %v550 = vmul.f32 %v513, 1.442695
  %v551 = vpow.pop %v550
  %v552 = vmul.f32 %v514, 1.442695
  %v553 = vpow.pop %v552
  %v554 = vmul.f32 %v515, 1.442695
  %v555 = vpow.pop %v554
  %v556 = vadd.f32 %v517, 1.0
  %v557 = vadd.f32 %v519, 1.0
  %v558 = vadd.f32 %v521, 1.0
  %v559 = vadd.f32 %v523, 1.0
  %v560 = vadd.f32 %v525, 1.0
  %v561 = vadd.f32 %v527, 1.0
  %v562 = vadd.f32 %v529, 1.0
  %v563 = vadd.f32 %v531, 1.0
  %v564 = vadd.f32 %v533, 1.0
  %v565 = vadd.f32 %v535, 1.0
  %v566 = vadd.f32 %v537, 1.0
  %v567 = vadd.f32 %v539, 1.0
  %v568 = vadd.f32 %v541, 1.0
  %v569 = vadd.f32 %v543, 1.0
  %v570 = vadd.f32 %v545, 1.0
  %v571 = vadd.f32 %v547, 1.0
  %v572 = vadd.f32 %v549, 1.0
  %v573 = vadd.f32 %v551, 1.0
  %v574 = vadd.f32 %v553, 1.0
  %v575 = vadd.f32 %v555, 1.0
  %v576 = vrcp.pop %v556
  %v577 = vmul.f32 %v556, %v576
  %v578 = vsub.f32 1.0, %v577
  %v579 = vmul.f32 %v576, %v578
  %v580 = vadd.f32 %v576, %v579
  %vm581 = vweird.f32 %v556
  %vm582 = vweird.f32 %v576
  %vm583 = vmor %vm581, %vm582
  %v584 = vsel %vm583, %v576, %v580
  %v585 = vand.u32 2147483647, %v556
  %vm586 = vcmp.eq.f32.partialorder %v585, 8.507059e+37
  %v587 = vand.u32 %v556, 2147483648
  %v588 = vor.u32 1.1754944e-38, %v587
  %v589 = vsel %vm586, %v588, %v584
  %v590 = vmul.f32 1.0, %v589
  %v591 = vrcp.pop %v557
  %v592 = vmul.f32 %v557, %v591
  %v593 = vsub.f32 1.0, %v592
  %v594 = vmul.f32 %v591, %v593
  %v595 = vadd.f32 %v591, %v594
  %vm596 = vweird.f32 %v557
  %vm597 = vweird.f32 %v591
  %vm598 = vmor %vm596, %vm597
  %v599 = vsel %vm598, %v591, %v595
  %v600 = vand.u32 2147483647, %v557
  %vm601 = vcmp.eq.f32.partialorder %v600, 8.507059e+37
  %v602 = vand.u32 %v557, 2147483648
  %v603 = vor.u32 1.1754944e-38, %v602
  %v604 = vsel %vm601, %v603, %v599
  %v605 = vmul.f32 1.0, %v604
  %v606 = vrcp.pop %v558
  %v607 = vmul.f32 %v558, %v606
  %v608 = vsub.f32 1.0, %v607
  %v609 = vmul.f32 %v606, %v608
  %v610 = vadd.f32 %v606, %v609
  %vm611 = vweird.f32 %v558
  %vm612 = vweird.f32 %v606
  %vm613 = vmor %vm611, %vm612
  %v614 = vsel %vm613, %v606, %v610
  %v615 = vand.u32 2147483647, %v558
  %vm616 = vcmp.eq.f32.partialorder %v615, 8.507059e+37
  %v617 = vand.u32 %v558, 2147483648
  %v618 = vor.u32 1.1754944e-38, %v617
  %v619 = vsel %vm616, %v618, %v614
  %v620 = vmul.f32 1.0, %v619
  %v621 = vrcp.pop %v559
  %v622 = vmul.f32 %v559, %v621
  %v623 = vsub.f32 1.0, %v622
  %v624 = vmul.f32 %v621, %v623
  %v625 = vadd.f32 %v621, %v624
  %vm626 = vweird.f32 %v559
  %vm627 = vweird.f32 %v621
  %vm628 = vmor %vm626, %vm627
  %v629 = vsel %vm628, %v621, %v625
  %v630 = vand.u32 2147483647, %v559
  %vm631 = vcmp.eq.f32.partialorder %v630, 8.507059e+37
  %v632 = vand.u32 %v559, 2147483648
  %v633 = vor.u32 1.1754944e-38, %v632
  %v634 = vsel %vm631, %v633, %v629
  %v635 = vmul.f32 1.0, %v634
  %v636 = vrcp.pop %v560
  %v637 = vmul.f32 %v560, %v636
  %v638 = vsub.f32 1.0, %v637
  %v639 = vmul.f32 %v636, %v638
  %v640 = vadd.f32 %v636, %v639
  %vm641 = vweird.f32 %v560
  %vm642 = vweird.f32 %v636
  %vm643 = vmor %vm641, %vm642
  %v644 = vsel %vm643, %v636, %v640
  %v645 = vand.u32 2147483647, %v560
  %vm646 = vcmp.eq.f32.partialorder %v645, 8.507059e+37
  %v647 = vand.u32 %v560, 2147483648
  %v648 = vor.u32 1.1754944e-38, %v647
  %v649 = vsel %vm646, %v648, %v644
  %v650 = vmul.f32 1.0, %v649
  %v651 = vrcp.pop %v561
  %v652 = vmul.f32 %v561, %v651
  %v653 = vsub.f32 1.0, %v652
  %v654 = vmul.f32 %v651, %v653
  %v655 = vadd.f32 %v651, %v654
  %vm656 = vweird.f32 %v561
  %vm657 = vweird.f32 %v651
  %vm658 = vmor %vm656, %vm657
  %v659 = vsel %vm658, %v651, %v655
  %v660 = vand.u32 2147483647, %v561
  %vm661 = vcmp.eq.f32.partialorder %v660, 8.507059e+37
  %v662 = vand.u32 %v561, 2147483648
  %v663 = vor.u32 1.1754944e-38, %v662
  %v664 = vsel %vm661, %v663, %v659
  %v665 = vmul.f32 1.0, %v664
  %v666 = vrcp.pop %v562
  %v667 = vmul.f32 %v562, %v666
  %v668 = vsub.f32 1.0, %v667
  %v669 = vmul.f32 %v666, %v668
  %v670 = vadd.f32 %v666, %v669
  %vm671 = vweird.f32 %v562
  %vm672 = vweird.f32 %v666
  %vm673 = vmor %vm671, %vm672
  %v674 = vsel %vm673, %v666, %v670
  %v675 = vand.u32 2147483647, %v562
  %vm676 = vcmp.eq.f32.partialorder %v675, 8.507059e+37
  %v677 = vand.u32 %v562, 2147483648
  %v678 = vor.u32 1.1754944e-38, %v677
  %v679 = vsel %vm676, %v678, %v674
  %v680 = vmul.f32 1.0, %v679
  %v681 = vrcp.pop %v563
  %v682 = vmul.f32 %v563, %v681
  %v683 = vsub.f32 1.0, %v682
  %v684 = vmul.f32 %v681, %v683
  %v685 = vadd.f32 %v681, %v684
  %vm686 = vweird.f32 %v563
  %vm687 = vweird.f32 %v681
  %vm688 = vmor %vm686, %vm687
  %v689 = vsel %vm688, %v681, %v685
  %v690 = vand.u32 2147483647, %v563
  %vm691 = vcmp.eq.f32.partialorder %v690, 8.507059e+37
  %v692 = vand.u32 %v563, 2147483648
  %v693 = vor.u32 1.1754944e-38, %v692
  %v694 = vsel %vm691, %v693, %v689
  %v695 = vmul.f32 1.0, %v694
  %v696 = vrcp.pop %v564
  %v697 = vmul.f32 %v564, %v696
  %v698 = vsub.f32 1.0, %v697
  %v699 = vmul.f32 %v696, %v698
  %v700 = vadd.f32 %v696, %v699
  %vm701 = vweird.f32 %v564
  %vm702 = vweird.f32 %v696
  %vm703 = vmor %vm701, %vm702
  %v704 = vsel %vm703, %v696, %v700
  %v705 = vand.u32 2147483647, %v564
  %vm706 = vcmp.eq.f32.partialorder %v705, 8.507059e+37
  %v707 = vand.u32 %v564, 2147483648
  %v708 = vor.u32 1.1754944e-38, %v707
  %v709 = vsel %vm706, %v708, %v704
  %v710 = vmul.f32 1.0, %v709
  %v711 = vrcp.pop %v565
  %v712 = vmul.f32 %v565, %v711
  %v713 = vsub.f32 1.0, %v712
  %v714 = vmul.f32 %v711, %v713
  %v715 = vadd.f32 %v711, %v714
  %vm716 = vweird.f32 %v565
  %vm717 = vweird.f32 %v711
  %vm718 = vmor %vm716, %vm717
  %v719 = vsel %vm718, %v711, %v715
  %v720 = vand.u32 2147483647, %v565
  %vm721 = vcmp.eq.f32.partialorder %v720, 8.507059e+37
  %v722 = vand.u32 %v565, 2147483648
  %v723 = vor.u32 1.1754944e-38, %v722
  %v724 = vsel %vm721, %v723, %v719
  %v725 = vmul.f32 1.0, %v724
  %v726 = vrcp.pop %v566
  %v727 = vmul.f32 %v566, %v726
  %v728 = vsub.f32 1.0, %v727
  %v729 = vmul.f32 %v726, %v728
  %v730 = vadd.f32 %v726, %v729
  %vm731 = vweird.f32 %v566
  %vm732 = vweird.f32 %v726
  %vm733 = vmor %vm731, %vm732
  %v734 = vsel %vm733, %v726, %v730
  %v735 = vand.u32 2147483647, %v566
  %vm736 = vcmp.eq.f32.partialorder %v735, 8.507059e+37
  %v737 = vand.u32 %v566, 2147483648
  %v738 = vor.u32 1.1754944e-38, %v737
  %v739 = vsel %vm736, %v738, %v734
  %v740 = vmul.f32 1.0, %v739
  %v741 = vrcp.pop %v567
  %v742 = vmul.f32 %v567, %v741
  %v743 = vsub.f32 1.0, %v742
  %v744 = vmul.f32 %v741, %v743
  %v745 = vadd.f32 %v741, %v744
  %vm746 = vweird.f32 %v567
  %vm747 = vweird.f32 %v741
  %vm748 = vmor %vm746, %vm747
  %v749 = vsel %vm748, %v741, %v745
  %v750 = vand.u32 2147483647, %v567
  %vm751 = vcmp.eq.f32.partialorder %v750, 8.507059e+37
  %v752 = vand.u32 %v567, 2147483648
  %v753 = vor.u32 1.1754944e-38, %v752
  %v754 = vsel %vm751, %v753, %v749
  %v755 = vmul.f32 1.0, %v754
  %v756 = vrcp.pop %v568
  %v757 = vmul.f32 %v568, %v756
  %v758 = vsub.f32 1.0, %v757
  %v759 = vmul.f32 %v756, %v758
  %v760 = vadd.f32 %v756, %v759
  %vm761 = vweird.f32 %v568
  %vm762 = vweird.f32 %v756
  %vm763 = vmor %vm761, %vm762
  %v764 = vsel %vm763, %v756, %v760
  %v765 = vand.u32 2147483647, %v568
  %vm766 = vcmp.eq.f32.partialorder %v765, 8.507059e+37
  %v767 = vand.u32 %v568, 2147483648
  %v768 = vor.u32 1.1754944e-38, %v767
  %v769 = vsel %vm766, %v768, %v764
  %v770 = vmul.f32 1.0, %v769
  %v771 = vrcp.pop %v569
  %v772 = vmul.f32 %v569, %v771
  %v773 = vsub.f32 1.0, %v772
  %v774 = vmul.f32 %v771, %v773
  %v775 = vadd.f32 %v771, %v774
  %vm776 = vweird.f32 %v569
  %vm777 = vweird.f32 %v771
  %vm778 = vmor %vm776, %vm777
  %v779 = vsel %vm778, %v771, %v775
  %v780 = vand.u32 2147483647, %v569
  %vm781 = vcmp.eq.f32.partialorder %v780, 8.507059e+37
  %v782 = vand.u32 %v569, 2147483648
  %v783 = vor.u32 1.1754944e-38, %v782
  %v784 = vsel %vm781, %v783, %v779
  %v785 = vmul.f32 1.0, %v784
  %v786 = vrcp.pop %v570
  %v787 = vmul.f32 %v570, %v786
  %v788 = vsub.f32 1.0, %v787
  %v789 = vmul.f32 %v786, %v788
  %v790 = vadd.f32 %v786, %v789
  %vm791 = vweird.f32 %v570
  %vm792 = vweird.f32 %v786
  %vm793 = vmor %vm791, %vm792
  %v794 = vsel %vm793, %v786, %v790
  %v795 = vand.u32 2147483647, %v570
  %vm796 = vcmp.eq.f32.partialorder %v795, 8.507059e+37
  %v797 = vand.u32 %v570, 2147483648
  %v798 = vor.u32 1.1754944e-38, %v797
  %v799 = vsel %vm796, %v798, %v794
  %v800 = vmul.f32 1.0, %v799
  %v801 = vrcp.pop %v571
  %v802 = vmul.f32 %v571, %v801
  %v803 = vsub.f32 1.0, %v802
  %v804 = vmul.f32 %v801, %v803
  %v805 = vadd.f32 %v801, %v804
  %vm806 = vweird.f32 %v571
  %vm807 = vweird.f32 %v801
  %vm808 = vmor %vm806, %vm807
  %v809 = vsel %vm808, %v801, %v805
  %v810 = vand.u32 2147483647, %v571
  %vm811 = vcmp.eq.f32.partialorder %v810, 8.507059e+37
  %v812 = vand.u32 %v571, 2147483648
  %v813 = vor.u32 1.1754944e-38, %v812
  %v814 = vsel %vm811, %v813, %v809
  %v815 = vmul.f32 1.0, %v814
  %v816 = vrcp.pop %v572
  %v817 = vmul.f32 %v572, %v816
  %v818 = vsub.f32 1.0, %v817
  %v819 = vmul.f32 %v816, %v818
  %v820 = vadd.f32 %v816, %v819
  %vm821 = vweird.f32 %v572
  %vm822 = vweird.f32 %v816
  %vm823 = vmor %vm821, %vm822
  %v824 = vsel %vm823, %v816, %v820
  %v825 = vand.u32 2147483647, %v572
  %vm826 = vcmp.eq.f32.partialorder %v825, 8.507059e+37
  %v827 = vand.u32 %v572, 2147483648
  %v828 = vor.u32 1.1754944e-38, %v827
  %v829 = vsel %vm826, %v828, %v824
  %v830 = vmul.f32 1.0, %v829
  %v831 = vrcp.pop %v573
  %v832 = vmul.f32 %v573, %v831
  %v833 = vsub.f32 1.0, %v832
  %v834 = vmul.f32 %v831, %v833
  %v835 = vadd.f32 %v831, %v834
  %vm836 = vweird.f32 %v573
  %vm837 = vweird.f32 %v831
  %vm838 = vmor %vm836, %vm837
  %v839 = vsel %vm838, %v831, %v835
  %v840 = vand.u32 2147483647, %v573
  %vm841 = vcmp.eq.f32.partialorder %v840, 8.507059e+37
  %v842 = vand.u32 %v573, 2147483648
  %v843 = vor.u32 1.1754944e-38, %v842
  %v844 = vsel %vm841, %v843, %v839
  %v845 = vmul.f32 1.0, %v844
  %v846 = vrcp.pop %v574
  %v847 = vmul.f32 %v574, %v846
  %v848 = vsub.f32 1.0, %v847
  %v849 = vmul.f32 %v846, %v848
  %v850 = vadd.f32 %v846, %v849
  %vm851 = vweird.f32 %v574
  %vm852 = vweird.f32 %v846
  %vm853 = vmor %vm851, %vm852
  %v854 = vsel %vm853, %v846, %v850
  %v855 = vand.u32 2147483647, %v574
  %vm856 = vcmp.eq.f32.partialorder %v855, 8.507059e+37
  %v857 = vand.u32 %v574, 2147483648
  %v858 = vor.u32 1.1754944e-38, %v857
  %v859 = vsel %vm856, %v858, %v854
  %v860 = vmul.f32 1.0, %v859
  %v861 = vrcp.pop %v575
  %v862 = vmul.f32 %v575, %v861
  %v863 = vsub.f32 1.0, %v862
  %v864 = vmul.f32 %v861, %v863
  %v865 = vadd.f32 %v861, %v864
  %vm866 = vweird.f32 %v575
  %vm867 = vweird.f32 %v861
  %vm868 = vmor %vm866, %vm867
  %v869 = vsel %vm868, %v861, %v865
  %v870 = vand.u32 2147483647, %v575
  %vm871 = vcmp.eq.f32.partialorder %v870, 8.507059e+37
  %v872 = vand.u32 %v575, 2147483648
  %v873 = vor.u32 1.1754944e-38, %v872
  %v874 = vsel %vm871, %v873, %v869
  %v875 = vmul.f32 1.0, %v874
  %v876 = vmul.f32 %v394, %v590
  %v877 = vmul.f32 %v417, %v605
  %v878 = vmul.f32 %v440, %v620
  %v879 = vmul.f32 %v463, %v635
  %v880 = vmul.f32 %v396, %v650
  %v881 = vmul.f32 %v419, %v665
  %v882 = vmul.f32 %v442, %v680
  %v883 = vmul.f32 %v465, %v695
  %v884 = vmul.f32 %v399, %v710
  %v885 = vmul.f32 %v422, %v725
  %v886 = vmul.f32 %v445, %v740
  %v887 = vmul.f32 %v468, %v755
  %v888 = vmul.f32 %v401, %v770
  %v889 = vmul.f32 %v424, %v785
  %v890 = vmul.f32 %v447, %v800
  %v891 = vmul.f32 %v470, %v815
  %v892 = vmul.f32 %v404, %v830
  %v893 = vmul.f32 %v427, %v845
  %v894 = vmul.f32 %v450, %v860
  %v895 = vmul.f32 %v473, %v875
  %v896 = vpack.c.bf16 %v877, %v876
  %v897 = vpack.c.bf16 %v879, %v878
  %v898 = vpack.c.bf16 %v881, %v880
  %v899 = vpack.c.bf16 %v883, %v882
  %v900 = vpack.c.bf16 %v885, %v884
  %v901 = vpack.c.bf16 %v887, %v886
  %v902 = vpack.c.bf16 %v889, %v888
  %v903 = vpack.c.bf16 %v891, %v890
  %v904 = vpack.c.bf16 %v893, %v892
  %v905 = vpack.c.bf16 %v895, %v894
  %906 = vst [vmem:[%s5] sm:$0xff] %v896
  %907 = vst [vmem:[%s5 + $0x8] sm:$0xff] %v897
  %908 = vst [vmem:[%s5 + $0x10] sm:$0xff] %v898
  %909 = vst [vmem:[%s5 + $0x18] sm:$0xff] %v899
  %910 = vst [vmem:[%s5 + $0x20] sm:$0xff] %v900
  %911 = vst [vmem:[%s5 + $0x28] sm:$0xff] %v901
  %912 = vst [vmem:[%s5 + $0x30] sm:$0xff] %v902
  %913 = vst [vmem:[%s5 + $0x38] sm:$0xff] %v903
  %914 = vst [vmem:[%s5 + $0x40] sm:$0x11] %v904
  %915 = vst [vmem:[%s5 + $0x48] sm:$0x11] %v905
  // Predicated region
  $region26: #{clip_backbone_forward.17} parent=0 // pred_check
    _
  $region27: #{clip_backbone_forward.17} parent=0 // pred_check_branch
    %917 = sbr.rel (0) target = $region29
  $region28: #{clip_backbone_forward.17} parent=0 // pred_region
    _
  $region29: #{clip_backbone_forward.17} parent=0 // pred_fallthru
    _
  // Predicated region
  $region30: #{clip_backbone_forward.17} parent=0 // pred_check
    _
  $region31: #{clip_backbone_forward.17} parent=0 // pred_check_branch
    %919 = sbr.rel (0) target = $region33
  $region32: #{clip_backbone_forward.17} parent=0 // pred_region
    _
  $region33: #{clip_backbone_forward.17} parent=0 // pred_fallthru
    _
  // Predicated region
  $region34: #{clip_backbone_forward.17} parent=0 // pred_check
    _
  $region35: #{clip_backbone_forward.17} parent=0 // pred_check_branch
    %921 = sbr.rel (0) target = $region37
  $region36: #{clip_backbone_forward.17} parent=0 // pred_region
    _
  $region37: #{clip_backbone_forward.17} parent=0 // pred_fallthru
    _
  // Predicated region
  $region38: #{clip_backbone_forward.17} parent=0 // pred_check
    _
  $region39: #{clip_backbone_forward.17} parent=0 // pred_check_branch
    %923 = sbr.rel (0) target = $region41
  $region40: #{clip_backbone_forward.17} parent=0 // pred_region
    _
  $region41: #{clip_backbone_forward.17} parent=0 // pred_fallthru
    _

// kernel: clip_backbone_forward.25
$region0: #{clip_backbone_forward.25}
  #allocation0 [shape = 'u32[]', space=smem, size = 0x4, offset = 0x4, fixed_abs, tag = 'smem constant byte address 0x4 - core index']
  #allocation1 [shape = 'u32[72,128]{1,0:T(1,128)}', space=vmem, size = 0x9000, scoped, tag = 'internal scratch']
  #allocation2 [shape = 'f32[34,128]{1,0:T(8,128)}', space=vmem, size = 0x5000, scoped, tag = 'scratch operand']
  %s0 = inlined_call_operand.vmem [shape: bf16[34,128], index: 0, kind: input, shape index: {}]
  %s1 = inlined_call_operand.vmem [shape: f32[1,128], index: 1, kind: input, shape index: {}]
  %s2 = inlined_call_operand.vmem [shape: f32[1,128], index: 2, kind: input, shape index: {}]
  %s3 = inlined_call_operand.vmem [shape: bf16[128,512], index: 3, kind: input, shape index: {}]
  %s4 = inlined_call_operand.vmem [shape: f32[1,512], index: 4, kind: input, shape index: {}]
  %s5 = inlined_call_operand.hbm [shape: bf16[34,512], index: 5, kind: output, shape index: {0}]
  %s6 = inlined_call_operand.vmem [shape: f32[34,128], index: 6, kind: output, shape index: {1}]
  %7 = xla_tuple %s5, %s6
  %s8 = sld [smem:[#allocation0]]
  $region42: #{clip_backbone_forward.25} parent=0
    _
  %s10 = ssub.s32 1, %s8
  %s11 = scalar_select 0, %s10, %s8
  $region1: #{clip_backbone_forward.25} parent=0
    #allocation3 [shape = 'u8[40960]{0}', space=vmem, size = 0xa000, scoped, tag = 'output window, operand 0, single buffered']
    #allocation4 [shape = 's32[1]{0}', space=sflag, size = 0x4, scoped, tag = 'scoped memory for clip_backbone_forward.25']
    %12 = vsyncpa [#allocation4], 0
    // Predicated region
    $region2: #{clip_backbone_forward.25} parent=1 // pred_check
      _
    $region3: #{clip_backbone_forward.25} parent=1 // pred_check_branch
      %14 = sbr.rel (0) target = $region5
    $region4: #{clip_backbone_forward.25} parent=1 // pred_region
      _
    $region5: #{clip_backbone_forward.25} parent=1 // pred_fallthru
      _
    // Predicated region
    $region6: #{clip_backbone_forward.25} parent=1 // pred_check
      _
    $region7: #{clip_backbone_forward.25} parent=1 // pred_check_branch
      %16 = sbr.rel (0) target = $region9
    $region8: #{clip_backbone_forward.25} parent=1 // pred_region
      _
    $region9: #{clip_backbone_forward.25} parent=1 // pred_fallthru
      _
    // Predicated region
    $region10: #{clip_backbone_forward.25} parent=1 // pred_check
      _
    $region11: #{clip_backbone_forward.25} parent=1 // pred_check_branch
      %18 = sbr.rel (0) target = $region13
    $region12: #{clip_backbone_forward.25} parent=1 // pred_region
      _
    $region13: #{clip_backbone_forward.25} parent=1 // pred_fallthru
      _
    // Predicated region
    $region14: #{clip_backbone_forward.25} parent=1 // pred_check
      _
    $region15: #{clip_backbone_forward.25} parent=1 // pred_check_branch
      %20 = sbr.rel (0) target = $region17
    $region16: #{clip_backbone_forward.25} parent=1 // pred_region
      _
    $region17: #{clip_backbone_forward.25} parent=1 // pred_fallthru
      _
    // Predicated region
    $region18: #{clip_backbone_forward.25} parent=1 // pred_check
      _
    $region19: #{clip_backbone_forward.25} parent=1 // pred_check_branch
      %22 = sbr.rel (0) target = $region21
    $region20: #{clip_backbone_forward.25} parent=1 // pred_region
      _
    $region21: #{clip_backbone_forward.25} parent=1 // pred_fallthru
      _
    %p23 = scmp.eq.s32.totalorder 0, 0
    // Predicated region
    $region22: #{clip_backbone_forward.25} parent=1 // pred_check
      %p24 = pneg %p23
    $region23: #{clip_backbone_forward.25} parent=1 // pred_check_branch
      %26 = sbr.rel (%p24) target = $region25
    $region24: #{clip_backbone_forward.25} parent=1 // pred_region
      %v27 = vld [vmem:[%s0] sm:$0xf]
      %v28 = vld [vmem:[%s0 + $0x4] sm:$0xf]
      %v29 = vld [vmem:[%s0 + $0x8] sm:$0xf]
      %v30 = vld [vmem:[%s0 + $0xc] sm:$0xf]
      %v31 = vld [vmem:[%s0 + $0x10] sm:$0x1]
      %v32 = vunpack.c.l.bf16 %v27
      %v33 = vunpack.c.l.bf16 %v28
      %v34 = vunpack.c.l.bf16 %v29
      %v35 = vunpack.c.l.bf16 %v30
      %v36 = vunpack.c.l.bf16 %v31
      %37 = vadd.xlane.f32.xlu0 %v32
      %v38 = vpop.xlane.xlu0 %37
      %39 = vadd.xlane.f32.xlu0 %v33
      %v40 = vpop.xlane.xlu0 %39
      %41 = vadd.xlane.f32.xlu0 %v34
      %v42 = vpop.xlane.xlu0 %41
      %43 = vadd.xlane.f32.xlu0 %v35
      %v44 = vpop.xlane.xlu0 %43
      %vm45 = vcmask 1041408
      %v46 = vsel %vm45, %v36, 0.0
      %47 = vadd.xlane.f32.xlu0 %v46
      %v48 = vpop.xlane.xlu0 %47
      %v49 = vrcp.pop 128.0
      %v50 = vmul.f32 128.0, %v49
      %v51 = vsub.f32 1.0, %v50
      %v52 = vmul.f32 %v49, %v51
      %v53 = vadd.f32 %v49, %v52
      %vm54 = vweird.f32 %v49
      %v55 = vsel %vm54, %v49, %v53
      %v56 = vmul.f32 %v38, %v55
      %v57 = vmul.f32 %v40, %v55
      %v58 = vmul.f32 %v42, %v55
      %v59 = vmul.f32 %v44, %v55
      %v60 = vmul.f32 %v48, %v55
      %v61 = vsub.f32 %v32, %v56
      %v62 = vsub.f32 %v33, %v57
      %v63 = vsub.f32 %v34, %v58
      %v64 = vsub.f32 %v35, %v59
      %v65 = vsub.f32 %v36, %v60
      %v66 = vmul.f32 %v61, %v61
      %v67 = vmul.f32 %v62, %v62
      %v68 = vmul.f32 %v63, %v63
      %v69 = vmul.f32 %v64, %v64
      %v70 = vmul.f32 %v65, %v65
      %71 = vadd.xlane.f32.xlu0 %v66
      %v72 = vpop.xlane.xlu0 %71
      %73 = vadd.xlane.f32.xlu0 %v67
      %v74 = vpop.xlane.xlu0 %73
      %75 = vadd.xlane.f32.xlu0 %v68
      %v76 = vpop.xlane.xlu0 %75
      %77 = vadd.xlane.f32.xlu0 %v69
      %v78 = vpop.xlane.xlu0 %77
      %v79 = vsel %vm45, %v70, 0.0
      %80 = vadd.xlane.f32.xlu0 %v79
      %v81 = vpop.xlane.xlu0 %80
      %v82 = vmul.f32 %v72, %v55
      %v83 = vmul.f32 %v74, %v55
      %v84 = vmul.f32 %v76, %v55
      %v85 = vmul.f32 %v78, %v55
      %v86 = vmul.f32 %v81, %v55
      %v87 = vadd.f32 %v82, 1e-05
      %v88 = vadd.f32 %v83, 1e-05
      %v89 = vadd.f32 %v84, 1e-05
      %v90 = vadd.f32 %v85, 1e-05
      %v91 = vadd.f32 %v86, 1e-05
      %v92 = vrsqrt.pop %v87
      %v93 = vmul.f32 %v92, %v87
      %v94 = vmul.f32 %v93, %v92
      %v95 = vmul.f32 0.5, %v94
      %v96 = vsub.f32 1.5, %v95
      %v97 = vmul.f32 %v92, %v96
      %vm98 = vweird.f32 %v87
      %vm99 = vweird.f32 %v92
      %vm100 = vmor %vm98, %vm99
      %v101 = vsel %vm100, %v92, %v97
      %v102 = vrsqrt.pop %v88
      %v103 = vmul.f32 %v102, %v88
      %v104 = vmul.f32 %v103, %v102
      %v105 = vmul.f32 0.5, %v104
      %v106 = vsub.f32 1.5, %v105
      %v107 = vmul.f32 %v102, %v106
      %vm108 = vweird.f32 %v88
      %vm109 = vweird.f32 %v102
      %vm110 = vmor %vm108, %vm109
      %v111 = vsel %vm110, %v102, %v107
      %v112 = vrsqrt.pop %v89
      %v113 = vmul.f32 %v112, %v89
      %v114 = vmul.f32 %v113, %v112
      %v115 = vmul.f32 0.5, %v114
      %v116 = vsub.f32 1.5, %v115
      %v117 = vmul.f32 %v112, %v116
      %vm118 = vweird.f32 %v89
      %vm119 = vweird.f32 %v112
      %vm120 = vmor %vm118, %vm119
      %v121 = vsel %vm120, %v112, %v117
      %v122 = vrsqrt.pop %v90
      %v123 = vmul.f32 %v122, %v90
      %v124 = vmul.f32 %v123, %v122
      %v125 = vmul.f32 0.5, %v124
      %v126 = vsub.f32 1.5, %v125
      %v127 = vmul.f32 %v122, %v126
      %vm128 = vweird.f32 %v90
      %vm129 = vweird.f32 %v122
      %vm130 = vmor %vm128, %vm129
      %v131 = vsel %vm130, %v122, %v127
      %v132 = vrsqrt.pop %v91
      %v133 = vmul.f32 %v132, %v91
      %v134 = vmul.f32 %v133, %v132
      %v135 = vmul.f32 0.5, %v134
      %v136 = vsub.f32 1.5, %v135
      %v137 = vmul.f32 %v132, %v136
      %vm138 = vweird.f32 %v91
      %vm139 = vweird.f32 %v132
      %vm140 = vmor %vm138, %vm139
      %v141 = vsel %vm140, %v132, %v137
      %v142 = vmul.f32 %v61, %v101
      %v143 = vmul.f32 %v62, %v111
      %v144 = vmul.f32 %v63, %v121
      %v145 = vmul.f32 %v64, %v131
      %v146 = vmul.f32 %v65, %v141
      %v147 = vld [vmem:[%s1] sm:$0x1]
      %v149 = vperm.slane %v147, 0
      %v151 = vmul.f32 %v142, %v149
      %v152 = vmul.f32 %v143, %v149
      %v153 = vmul.f32 %v144, %v149
      %v154 = vmul.f32 %v145, %v149
      %v155 = vmul.f32 %v146, %v149
      %v156 = vld [vmem:[%s2] sm:$0x1]
      %v158 = vperm.slane %v156, 0
      %v160 = vadd.f32 %v151, %v158
      %v161 = vadd.f32 %v152, %v158
      %v162 = vadd.f32 %v153, %v158
      %v163 = vadd.f32 %v154, %v158
      %v164 = vadd.f32 %v155, %v158
      %165 = vst [vmem:[#allocation2] sm:$0xff] %v160
      %166 = vst [vmem:[#allocation2 + $0x8] sm:$0xff] %v161
      %167 = vst [vmem:[#allocation2 + $0x10] sm:$0xff] %v162
      %168 = vst [vmem:[#allocation2 + $0x18] sm:$0xff] %v163
      %169 = vst [vmem:[#allocation2 + $0x20] sm:$0x3] %v164
      %170 = vst [vmem:[%s6] sm:$0xff] %v160
      %171 = vst [vmem:[%s6 + $0x8] sm:$0xff] %v161
      %172 = vst [vmem:[%s6 + $0x10] sm:$0xff] %v162
      %173 = vst [vmem:[%s6 + $0x18] sm:$0xff] %v163
      %174 = vst [vmem:[%s6 + $0x20] sm:$0x3] %v164
    $region25: #{clip_backbone_forward.25} parent=1 // pred_fallthru
      _
    %v175 = vld [vmem:[#allocation2] sm:$0xff]
    %v176 = vld [vmem:[#allocation2 + $0x8] sm:$0xff]
    %v177 = vld [vmem:[#allocation2 + $0x10] sm:$0xff]
    %v178 = vld [vmem:[#allocation2 + $0x18] sm:$0xff]
    %v179 = vld [vmem:[#allocation2 + $0x20] sm:$0x3]
    %v180 = vpack.c.bf16 %v176, %v175
    %v181 = vpack.c.bf16 %v178, %v177
    %v182 = vpack.c.bf16 %v179, %v179
    %v183 = vld [vmem:[%s3] sm:$0xff]
    %v184 = vld [vmem:[%s3 + $0x8] sm:$0xff]
    %v185 = vld [vmem:[%s3 + $0x10] sm:$0xff]
    %v186 = vld [vmem:[%s3 + $0x18] sm:$0xff]
    %v187 = vld [vmem:[%s3 + $0x20] sm:$0xff]
    %v188 = vld [vmem:[%s3 + $0x28] sm:$0xff]
    %v189 = vld [vmem:[%s3 + $0x30] sm:$0xff]
    %v190 = vld [vmem:[%s3 + $0x38] sm:$0xff]
    %v191 = vld [vmem:[%s3 + $0x40] sm:$0xff]
    %v192 = vld [vmem:[%s3 + $0x48] sm:$0xff]
    %v193 = vld [vmem:[%s3 + $0x50] sm:$0xff]
    %v194 = vld [vmem:[%s3 + $0x58] sm:$0xff]
    %v195 = vld [vmem:[%s3 + $0x60] sm:$0xff]
    %v196 = vld [vmem:[%s3 + $0x68] sm:$0xff]
    %v197 = vld [vmem:[%s3 + $0x70] sm:$0xff]
    %v198 = vld [vmem:[%s3 + $0x78] sm:$0xff]
    %v199 = vld [vmem:[%s3 + $0x80] sm:$0xff]
    %v200 = vld [vmem:[%s3 + $0x88] sm:$0xff]
    %v201 = vld [vmem:[%s3 + $0x90] sm:$0xff]
    %v202 = vld [vmem:[%s3 + $0x98] sm:$0xff]
    %v203 = vld [vmem:[%s3 + $0xa0] sm:$0xff]
    %v204 = vld [vmem:[%s3 + $0xa8] sm:$0xff]
    %v205 = vld [vmem:[%s3 + $0xb0] sm:$0xff]
    %v206 = vld [vmem:[%s3 + $0xb8] sm:$0xff]
    %v207 = vld [vmem:[%s3 + $0xc0] sm:$0xff]
    %v208 = vld [vmem:[%s3 + $0xc8] sm:$0xff]
    %v209 = vld [vmem:[%s3 + $0xd0] sm:$0xff]
    %v210 = vld [vmem:[%s3 + $0xd8] sm:$0xff]
    %v211 = vld [vmem:[%s3 + $0xe0] sm:$0xff]
    %v212 = vld [vmem:[%s3 + $0xe8] sm:$0xff]
    %v213 = vld [vmem:[%s3 + $0xf0] sm:$0xff]
    %v214 = vld [vmem:[%s3 + $0xf8] sm:$0xff]
    %v215 = vld [vmem:[%s4] sm:$0xf]
    %v217 = vperm.slane %v215, 0
    %v218 = vperm.slane %v215, 1
    %v219 = vperm.slane %v215, 2
    %v220 = vperm.slane %v215, 3
    %v257 = vunpack.c.l.b16 %v183
    %v258 = vunpack.c.h.b16 %v183
    %v259 = vunpack.c.l.b16 %v184
    %v260 = vunpack.c.h.b16 %v184
    %v261 = vunpack.c.l.b16 %v185
    %v262 = vunpack.c.h.b16 %v185
    %v263 = vunpack.c.l.b16 %v186
    %v264 = vunpack.c.h.b16 %v186
    %v265 = vunpack.c.l.b16 %v187
    %v266 = vunpack.c.h.b16 %v187
    %v267 = vunpack.c.l.b16 %v188
    %v268 = vunpack.c.h.b16 %v188
    %v269 = vunpack.c.l.b16 %v189
    %v270 = vunpack.c.h.b16 %v189
    %v271 = vunpack.c.l.b16 %v190
    %v272 = vunpack.c.h.b16 %v190
    %v273 = vunpack.c.l.b16 %v191
    %v274 = vunpack.c.h.b16 %v191
    %v275 = vunpack.c.l.b16 %v192
    %v276 = vunpack.c.h.b16 %v192
    %v277 = vunpack.c.l.b16 %v193
    %v278 = vunpack.c.h.b16 %v193
    %v279 = vunpack.c.l.b16 %v194
    %v280 = vunpack.c.h.b16 %v194
    %v281 = vunpack.c.l.b16 %v195
    %v282 = vunpack.c.h.b16 %v195
    %v283 = vunpack.c.l.b16 %v196
    %v284 = vunpack.c.h.b16 %v196
    %v285 = vunpack.c.l.b16 %v197
    %v286 = vunpack.c.h.b16 %v197
    %v287 = vunpack.c.l.b16 %v198
    %v288 = vunpack.c.h.b16 %v198
    %v289 = vunpack.c.l.b16 %v199
    %v290 = vunpack.c.h.b16 %v199
    %v291 = vunpack.c.l.b16 %v200
    %v292 = vunpack.c.h.b16 %v200
    %v293 = vunpack.c.l.b16 %v201
    %v294 = vunpack.c.h.b16 %v201
    %v295 = vunpack.c.l.b16 %v202
    %v296 = vunpack.c.h.b16 %v202
    %v297 = vunpack.c.l.b16 %v203
    %v298 = vunpack.c.h.b16 %v203
    %v299 = vunpack.c.l.b16 %v204
    %v300 = vunpack.c.h.b16 %v204
    %v301 = vunpack.c.l.b16 %v205
    %v302 = vunpack.c.h.b16 %v205
    %v303 = vunpack.c.l.b16 %v206
    %v304 = vunpack.c.h.b16 %v206
    %v305 = vunpack.c.l.b16 %v207
    %v306 = vunpack.c.h.b16 %v207
    %v307 = vunpack.c.l.b16 %v208
    %v308 = vunpack.c.h.b16 %v208
    %v309 = vunpack.c.l.b16 %v209
    %v310 = vunpack.c.h.b16 %v209
    %v311 = vunpack.c.l.b16 %v210
    %v312 = vunpack.c.h.b16 %v210
    %v313 = vunpack.c.l.b16 %v211
    %v314 = vunpack.c.h.b16 %v211
    %v315 = vunpack.c.l.b16 %v212
    %v316 = vunpack.c.h.b16 %v212
    %v317 = vunpack.c.l.b16 %v213
    %v318 = vunpack.c.h.b16 %v213
    %v319 = vunpack.c.l.b16 %v214
    %v320 = vunpack.c.h.b16 %v214
    %v321 = vpack.c.b16 %v261, %v257
    %v322 = vpack.c.b16 %v262, %v258
    %v323 = vpack.c.b16 %v263, %v259
    %v324 = vpack.c.b16 %v264, %v260
    %v325 = vpack.c.b16 %v269, %v265
    %v326 = vpack.c.b16 %v270, %v266
    %v327 = vpack.c.b16 %v271, %v267
    %v328 = vpack.c.b16 %v272, %v268
    %v329 = vpack.c.b16 %v277, %v273
    %v330 = vpack.c.b16 %v278, %v274
    %v331 = vpack.c.b16 %v279, %v275
    %v332 = vpack.c.b16 %v280, %v276
    %v333 = vpack.c.b16 %v285, %v281
    %v334 = vpack.c.b16 %v286, %v282
    %v335 = vpack.c.b16 %v287, %v283
    %v336 = vpack.c.b16 %v288, %v284
    %v337 = vpack.c.b16 %v293, %v289
    %v338 = vpack.c.b16 %v294, %v290
    %v339 = vpack.c.b16 %v295, %v291
    %v340 = vpack.c.b16 %v296, %v292
    %v341 = vpack.c.b16 %v301, %v297
    %v342 = vpack.c.b16 %v302, %v298
    %v343 = vpack.c.b16 %v303, %v299
    %v344 = vpack.c.b16 %v304, %v300
    %v345 = vpack.c.b16 %v309, %v305
    %v346 = vpack.c.b16 %v310, %v306
    %v347 = vpack.c.b16 %v311, %v307
    %v348 = vpack.c.b16 %v312, %v308
    %v349 = vpack.c.b16 %v317, %v313
    %v350 = vpack.c.b16 %v318, %v314
    %v351 = vpack.c.b16 %v319, %v315
    %v352 = vpack.c.b16 %v320, %v316
    %385 = vmatpush.bf16.msra.mxu0 %v349
    %386 = vmatpush.bf16.msra.mxu0 %v345
    %387 = vmatpush.bf16.msra.mxu0 %v341
    %388 = vmatpush.bf16.msra.mxu0 %v337
    %389 = vmatpush.bf16.msra.mxu0 %v333
    %390 = vmatpush.bf16.msra.mxu0 %v329
    %391 = vmatpush.bf16.msra.mxu0 %v325
    %392 = vmatpush.bf16.msra.mxu0 %v321
    %393 = vmatmul.bf16.gmra.mxu0 %v180
    %v394 = vpop.f32.mrf.mxu0
    %v395 = vadd.f32 %v217, %v394
    %v396 = vpop.f32.mrf.mxu0
    %v397 = vadd.f32 %v217, %v396
    %398 = vmatmul.bf16.gmra.mxu0 %v181
    %v399 = vpop.f32.mrf.mxu0
    %v400 = vadd.f32 %v217, %v399
    %v401 = vpop.f32.mrf.mxu0
    %v402 = vadd.f32 %v217, %v401
    %403 = vmatmul.bf16.gmra.mxu0 %v182
    %v404 = vpop.f32.mrf.mxu0
    %v405 = vadd.f32 %v217, %v404
    %v406 = vpop.f32.mrf.mxu0
    %407 = vdwg.mxu0
    %408 = vmatpush.bf16.msra.mxu0 %v350
    %409 = vmatpush.bf16.msra.mxu0 %v346
    %410 = vmatpush.bf16.msra.mxu0 %v342
    %411 = vmatpush.bf16.msra.mxu0 %v338
    %412 = vmatpush.bf16.msra.mxu0 %v334
    %413 = vmatpush.bf16.msra.mxu0 %v330
    %414 = vmatpush.bf16.msra.mxu0 %v326
    %415 = vmatpush.bf16.msra.mxu0 %v322
    %416 = vmatmul.bf16.gmra.mxu0 %v180
    %v417 = vpop.f32.mrf.mxu0
    %v418 = vadd.f32 %v218, %v417
    %v419 = vpop.f32.mrf.mxu0
    %v420 = vadd.f32 %v218, %v419
    %421 = vmatmul.bf16.gmra.mxu0 %v181
    %v422 = vpop.f32.mrf.mxu0
    %v423 = vadd.f32 %v218, %v422
    %v424 = vpop.f32.mrf.mxu0
    %v425 = vadd.f32 %v218, %v424
    %426 = vmatmul.bf16.gmra.mxu0 %v182
    %v427 = vpop.f32.mrf.mxu0
    %v428 = vadd.f32 %v218, %v427
    %v429 = vpop.f32.mrf.mxu0
    %430 = vdwg.mxu0
    %431 = vmatpush.bf16.msra.mxu0 %v351
    %432 = vmatpush.bf16.msra.mxu0 %v347
    %433 = vmatpush.bf16.msra.mxu0 %v343
    %434 = vmatpush.bf16.msra.mxu0 %v339
    %435 = vmatpush.bf16.msra.mxu0 %v335
    %436 = vmatpush.bf16.msra.mxu0 %v331
    %437 = vmatpush.bf16.msra.mxu0 %v327
    %438 = vmatpush.bf16.msra.mxu0 %v323
    %439 = vmatmul.bf16.gmra.mxu0 %v180
    %v440 = vpop.f32.mrf.mxu0
    %v441 = vadd.f32 %v219, %v440
    %v442 = vpop.f32.mrf.mxu0
    %v443 = vadd.f32 %v219, %v442
    %444 = vmatmul.bf16.gmra.mxu0 %v181
    %v445 = vpop.f32.mrf.mxu0
    %v446 = vadd.f32 %v219, %v445
    %v447 = vpop.f32.mrf.mxu0
    %v448 = vadd.f32 %v219, %v447
    %449 = vmatmul.bf16.gmra.mxu0 %v182
    %v450 = vpop.f32.mrf.mxu0
    %v451 = vadd.f32 %v219, %v450
    %v452 = vpop.f32.mrf.mxu0
    %453 = vdwg.mxu0
    %454 = vmatpush.bf16.msra.mxu0 %v352
    %455 = vmatpush.bf16.msra.mxu0 %v348
    %456 = vmatpush.bf16.msra.mxu0 %v344
    %457 = vmatpush.bf16.msra.mxu0 %v340
    %458 = vmatpush.bf16.msra.mxu0 %v336
    %459 = vmatpush.bf16.msra.mxu0 %v332
    %460 = vmatpush.bf16.msra.mxu0 %v328
    %461 = vmatpush.bf16.msra.mxu0 %v324
    %462 = vmatmul.bf16.gmra.mxu0 %v180
    %v463 = vpop.f32.mrf.mxu0
    %v464 = vadd.f32 %v220, %v463
    %v465 = vpop.f32.mrf.mxu0
    %v466 = vadd.f32 %v220, %v465
    %467 = vmatmul.bf16.gmra.mxu0 %v181
    %v468 = vpop.f32.mrf.mxu0
    %v469 = vadd.f32 %v220, %v468
    %v470 = vpop.f32.mrf.mxu0
    %v471 = vadd.f32 %v220, %v470
    %472 = vmatmul.bf16.gmra.mxu0 %v182
    %v473 = vpop.f32.mrf.mxu0
    %v474 = vadd.f32 %v220, %v473
    %v475 = vpop.f32.mrf.mxu0
    %476 = vdwg.mxu0
    %v477 = vmul.f32 %v395, 1.702
    %v478 = vmul.f32 %v418, 1.702
    %v479 = vmul.f32 %v441, 1.702
    %v480 = vmul.f32 %v464, 1.702
    %v481 = vmul.f32 %v397, 1.702
    %v482 = vmul.f32 %v420, 1.702
    %v483 = vmul.f32 %v443, 1.702
    %v484 = vmul.f32 %v466, 1.702
    %v485 = vmul.f32 %v400, 1.702
    %v486 = vmul.f32 %v423, 1.702
    %v487 = vmul.f32 %v446, 1.702
    %v488 = vmul.f32 %v469, 1.702
    %v489 = vmul.f32 %v402, 1.702
    %v490 = vmul.f32 %v425, 1.702
    %v491 = vmul.f32 %v448, 1.702
    %v492 = vmul.f32 %v471, 1.702
    %v493 = vmul.f32 %v405, 1.702
    %v494 = vmul.f32 %v428, 1.702
    %v495 = vmul.f32 %v451, 1.702
    %v496 = vmul.f32 %v474, 1.702
    %v497 = vxor.u32 %v477, 2147483648
    %v498 = vxor.u32 %v478, 2147483648
    %v499 = vxor.u32 %v479, 2147483648
    %v500 = vxor.u32 %v480, 2147483648
    %v501 = vxor.u32 %v481, 2147483648
    %v502 = vxor.u32 %v482, 2147483648
    %v503 = vxor.u32 %v483, 2147483648
    %v504 = vxor.u32 %v484, 2147483648
    %v505 = vxor.u32 %v485, 2147483648
    %v506 = vxor.u32 %v486, 2147483648
    %v507 = vxor.u32 %v487, 2147483648
    %v508 = vxor.u32 %v488, 2147483648
    %v509 = vxor.u32 %v489, 2147483648
    %v510 = vxor.u32 %v490, 2147483648
    %v511 = vxor.u32 %v491, 2147483648
    %v512 = vxor.u32 %v492, 2147483648
    %v513 = vxor.u32 %v493, 2147483648
    %v514 = vxor.u32 %v494, 2147483648
    %v515 = vxor.u32 %v495, 2147483648
    %v516 = vxor.u32 %v496, 2147483648
    %v517 = vmul.f32 %v497, 1.442695
    %v518 = vpow.pop %v517
    %v519 = vmul.f32 %v498, 1.442695
    %v520 = vpow.pop %v519
    %v521 = vmul.f32 %v499, 1.442695
    %v522 = vpow.pop %v521
    %v523 = vmul.f32 %v500, 1.442695
    %v524 = vpow.pop %v523
    %v525 = vmul.f32 %v501, 1.442695
    %v526 = vpow.pop %v525
    %v527 = vmul.f32 %v502, 1.442695
    %v528 = vpow.pop %v527
    %v529 = vmul.f32 %v503, 1.442695
    %v530 = vpow.pop %v529
    %v531 = vmul.f32 %v504, 1.442695
    %v532 = vpow.pop %v531
    %v533 = vmul.f32 %v505, 1.442695
    %v534 = vpow.pop %v533
    %v535 = vmul.f32 %v506, 1.442695
    %v536 = vpow.pop %v535
    %v537 = vmul.f32 %v507, 1.442695
    %v538 = vpow.pop %v537
    %v539 = vmul.f32 %v508, 1.442695
    %v540 = vpow.pop %v539
    %v541 = vmul.f32 %v509, 1.442695
    %v542 = vpow.pop %v541
    %v543 = vmul.f32 %v510, 1.442695
    %v544 = vpow.pop %v543
    %v545 = vmul.f32 %v511, 1.442695
    %v546 = vpow.pop %v545
    %v547 = vmul.f32 %v512, 1.442695
    %v548 = vpow.pop %v547
    %v549 = vmul.f32 %v513, 1.442695
    %v550 = vpow.pop %v549
    %v551 = vmul.f32 %v514, 1.442695
    %v552 = vpow.pop %v551
    %v553 = vmul.f32 %v515, 1.442695
    %v554 = vpow.pop %v553
    %v555 = vmul.f32 %v516, 1.442695
    %v556 = vpow.pop %v555
    %v557 = vadd.f32 %v518, 1.0
    %v558 = vadd.f32 %v520, 1.0
    %v559 = vadd.f32 %v522, 1.0
    %v560 = vadd.f32 %v524, 1.0
    %v561 = vadd.f32 %v526, 1.0
    %v562 = vadd.f32 %v528, 1.0
    %v563 = vadd.f32 %v530, 1.0
    %v564 = vadd.f32 %v532, 1.0
    %v565 = vadd.f32 %v534, 1.0
    %v566 = vadd.f32 %v536, 1.0
    %v567 = vadd.f32 %v538, 1.0
    %v568 = vadd.f32 %v540, 1.0
    %v569 = vadd.f32 %v542, 1.0
    %v570 = vadd.f32 %v544, 1.0
    %v571 = vadd.f32 %v546, 1.0
    %v572 = vadd.f32 %v548, 1.0
    %v573 = vadd.f32 %v550, 1.0
    %v574 = vadd.f32 %v552, 1.0
    %v575 = vadd.f32 %v554, 1.0
    %v576 = vadd.f32 %v556, 1.0
    %v577 = vrcp.pop %v557
    %v578 = vmul.f32 %v557, %v577
    %v579 = vsub.f32 1.0, %v578
    %v580 = vmul.f32 %v577, %v579
    %v581 = vadd.f32 %v577, %v580
    %vm582 = vweird.f32 %v557
    %vm583 = vweird.f32 %v577
    %vm584 = vmor %vm582, %vm583
    %v585 = vsel %vm584, %v577, %v581
    %v586 = vand.u32 2147483647, %v557
    %vm587 = vcmp.eq.f32.partialorder %v586, 8.507059e+37
    %v588 = vand.u32 %v557, 2147483648
    %v589 = vor.u32 1.1754944e-38, %v588
    %v590 = vsel %vm587, %v589, %v585
    %v591 = vmul.f32 1.0, %v590
    %v592 = vrcp.pop %v558
    %v593 = vmul.f32 %v558, %v592
    %v594 = vsub.f32 1.0, %v593
    %v595 = vmul.f32 %v592, %v594
    %v596 = vadd.f32 %v592, %v595
    %vm597 = vweird.f32 %v558
    %vm598 = vweird.f32 %v592
    %vm599 = vmor %vm597, %vm598
    %v600 = vsel %vm599, %v592, %v596
    %v601 = vand.u32 2147483647, %v558
    %vm602 = vcmp.eq.f32.partialorder %v601, 8.507059e+37
    %v603 = vand.u32 %v558, 2147483648
    %v604 = vor.u32 1.1754944e-38, %v603
    %v605 = vsel %vm602, %v604, %v600
    %v606 = vmul.f32 1.0, %v605
    %v607 = vrcp.pop %v559
    %v608 = vmul.f32 %v559, %v607
    %v609 = vsub.f32 1.0, %v608
    %v610 = vmul.f32 %v607, %v609
    %v611 = vadd.f32 %v607, %v610
    %vm612 = vweird.f32 %v559
    %vm613 = vweird.f32 %v607
    %vm614 = vmor %vm612, %vm613
    %v615 = vsel %vm614, %v607, %v611
    %v616 = vand.u32 2147483647, %v559
    %vm617 = vcmp.eq.f32.partialorder %v616, 8.507059e+37
    %v618 = vand.u32 %v559, 2147483648
    %v619 = vor.u32 1.1754944e-38, %v618
    %v620 = vsel %vm617, %v619, %v615
    %v621 = vmul.f32 1.0, %v620
    %v622 = vrcp.pop %v560
    %v623 = vmul.f32 %v560, %v622
    %v624 = vsub.f32 1.0, %v623
    %v625 = vmul.f32 %v622, %v624
    %v626 = vadd.f32 %v622, %v625
    %vm627 = vweird.f32 %v560
    %vm628 = vweird.f32 %v622
    %vm629 = vmor %vm627, %vm628
    %v630 = vsel %vm629, %v622, %v626
    %v631 = vand.u32 2147483647, %v560
    %vm632 = vcmp.eq.f32.partialorder %v631, 8.507059e+37
    %v633 = vand.u32 %v560, 2147483648
    %v634 = vor.u32 1.1754944e-38, %v633
    %v635 = vsel %vm632, %v634, %v630
    %v636 = vmul.f32 1.0, %v635
    %v637 = vrcp.pop %v561
    %v638 = vmul.f32 %v561, %v637
    %v639 = vsub.f32 1.0, %v638
    %v640 = vmul.f32 %v637, %v639
    %v641 = vadd.f32 %v637, %v640
    %vm642 = vweird.f32 %v561
    %vm643 = vweird.f32 %v637
    %vm644 = vmor %vm642, %vm643
    %v645 = vsel %vm644, %v637, %v641
    %v646 = vand.u32 2147483647, %v561
    %vm647 = vcmp.eq.f32.partialorder %v646, 8.507059e+37
    %v648 = vand.u32 %v561, 2147483648
    %v649 = vor.u32 1.1754944e-38, %v648
    %v650 = vsel %vm647, %v649, %v645
    %v651 = vmul.f32 1.0, %v650
    %v652 = vrcp.pop %v562
    %v653 = vmul.f32 %v562, %v652
    %v654 = vsub.f32 1.0, %v653
    %v655 = vmul.f32 %v652, %v654
    %v656 = vadd.f32 %v652, %v655
    %vm657 = vweird.f32 %v562
    %vm658 = vweird.f32 %v652
    %vm659 = vmor %vm657, %vm658
    %v660 = vsel %vm659, %v652, %v656
    %v661 = vand.u32 2147483647, %v562
    %vm662 = vcmp.eq.f32.partialorder %v661, 8.507059e+37
    %v663 = vand.u32 %v562, 2147483648
    %v664 = vor.u32 1.1754944e-38, %v663
    %v665 = vsel %vm662, %v664, %v660
    %v666 = vmul.f32 1.0, %v665
    %v667 = vrcp.pop %v563
    %v668 = vmul.f32 %v563, %v667
    %v669 = vsub.f32 1.0, %v668
    %v670 = vmul.f32 %v667, %v669
    %v671 = vadd.f32 %v667, %v670
    %vm672 = vweird.f32 %v563
    %vm673 = vweird.f32 %v667
    %vm674 = vmor %vm672, %vm673
    %v675 = vsel %vm674, %v667, %v671
    %v676 = vand.u32 2147483647, %v563
    %vm677 = vcmp.eq.f32.partialorder %v676, 8.507059e+37
    %v678 = vand.u32 %v563, 2147483648
    %v679 = vor.u32 1.1754944e-38, %v678
    %v680 = vsel %vm677, %v679, %v675
    %v681 = vmul.f32 1.0, %v680
    %v682 = vrcp.pop %v564
    %v683 = vmul.f32 %v564, %v682
    %v684 = vsub.f32 1.0, %v683
    %v685 = vmul.f32 %v682, %v684
    %v686 = vadd.f32 %v682, %v685
    %vm687 = vweird.f32 %v564
    %vm688 = vweird.f32 %v682
    %vm689 = vmor %vm687, %vm688
    %v690 = vsel %vm689, %v682, %v686
    %v691 = vand.u32 2147483647, %v564
    %vm692 = vcmp.eq.f32.partialorder %v691, 8.507059e+37
    %v693 = vand.u32 %v564, 2147483648
    %v694 = vor.u32 1.1754944e-38, %v693
    %v695 = vsel %vm692, %v694, %v690
    %v696 = vmul.f32 1.0, %v695
    %v697 = vrcp.pop %v565
    %v698 = vmul.f32 %v565, %v697
    %v699 = vsub.f32 1.0, %v698
    %v700 = vmul.f32 %v697, %v699
    %v701 = vadd.f32 %v697, %v700
    %vm702 = vweird.f32 %v565
    %vm703 = vweird.f32 %v697
    %vm704 = vmor %vm702, %vm703
    %v705 = vsel %vm704, %v697, %v701
    %v706 = vand.u32 2147483647, %v565
    %vm707 = vcmp.eq.f32.partialorder %v706, 8.507059e+37
    %v708 = vand.u32 %v565, 2147483648
    %v709 = vor.u32 1.1754944e-38, %v708
    %v710 = vsel %vm707, %v709, %v705
    %v711 = vmul.f32 1.0, %v710
    %v712 = vrcp.pop %v566
    %v713 = vmul.f32 %v566, %v712
    %v714 = vsub.f32 1.0, %v713
    %v715 = vmul.f32 %v712, %v714
    %v716 = vadd.f32 %v712, %v715
    %vm717 = vweird.f32 %v566
    %vm718 = vweird.f32 %v712
    %vm719 = vmor %vm717, %vm718
    %v720 = vsel %vm719, %v712, %v716
    %v721 = vand.u32 2147483647, %v566
    %vm722 = vcmp.eq.f32.partialorder %v721, 8.507059e+37
    %v723 = vand.u32 %v566, 2147483648
    %v724 = vor.u32 1.1754944e-38, %v723
    %v725 = vsel %vm722, %v724, %v720
    %v726 = vmul.f32 1.0, %v725
    %v727 = vrcp.pop %v567
    %v728 = vmul.f32 %v567, %v727
    %v729 = vsub.f32 1.0, %v728
    %v730 = vmul.f32 %v727, %v729
    %v731 = vadd.f32 %v727, %v730
    %vm732 = vweird.f32 %v567
    %vm733 = vweird.f32 %v727
    %vm734 = vmor %vm732, %vm733
    %v735 = vsel %vm734, %v727, %v731
    %v736 = vand.u32 2147483647, %v567
    %vm737 = vcmp.eq.f32.partialorder %v736, 8.507059e+37
    %v738 = vand.u32 %v567, 2147483648
    %v739 = vor.u32 1.1754944e-38, %v738
    %v740 = vsel %vm737, %v739, %v735
    %v741 = vmul.f32 1.0, %v740
    %v742 = vrcp.pop %v568
    %v743 = vmul.f32 %v568, %v742
    %v744 = vsub.f32 1.0, %v743
    %v745 = vmul.f32 %v742, %v744
    %v746 = vadd.f32 %v742, %v745
    %vm747 = vweird.f32 %v568
    %vm748 = vweird.f32 %v742
    %vm749 = vmor %vm747, %vm748
    %v750 = vsel %vm749, %v742, %v746
    %v751 = vand.u32 2147483647, %v568
    %vm752 = vcmp.eq.f32.partialorder %v751, 8.507059e+37
    %v753 = vand.u32 %v568, 2147483648
    %v754 = vor.u32 1.1754944e-38, %v753
    %v755 = vsel %vm752, %v754, %v750
    %v756 = vmul.f32 1.0, %v755
    %v757 = vrcp.pop %v569
    %v758 = vmul.f32 %v569, %v757
    %v759 = vsub.f32 1.0, %v758
    %v760 = vmul.f32 %v757, %v759
    %v761 = vadd.f32 %v757, %v760
    %vm762 = vweird.f32 %v569
    %vm763 = vweird.f32 %v757
    %vm764 = vmor %vm762, %vm763
    %v765 = vsel %vm764, %v757, %v761
    %v766 = vand.u32 2147483647, %v569
    %vm767 = vcmp.eq.f32.partialorder %v766, 8.507059e+37
    %v768 = vand.u32 %v569, 2147483648
    %v769 = vor.u32 1.1754944e-38, %v768
    %v770 = vsel %vm767, %v769, %v765
    %v771 = vmul.f32 1.0, %v770
    %v772 = vrcp.pop %v570
    %v773 = vmul.f32 %v570, %v772
    %v774 = vsub.f32 1.0, %v773
    %v775 = vmul.f32 %v772, %v774
    %v776 = vadd.f32 %v772, %v775
    %vm777 = vweird.f32 %v570
    %vm778 = vweird.f32 %v772
    %vm779 = vmor %vm777, %vm778
    %v780 = vsel %vm779, %v772, %v776
    %v781 = vand.u32 2147483647, %v570
    %vm782 = vcmp.eq.f32.partialorder %v781, 8.507059e+37
    %v783 = vand.u32 %v570, 2147483648
    %v784 = vor.u32 1.1754944e-38, %v783
    %v785 = vsel %vm782, %v784, %v780
    %v786 = vmul.f32 1.0, %v785
    %v787 = vrcp.pop %v571
    %v788 = vmul.f32 %v571, %v787
    %v789 = vsub.f32 1.0, %v788
    %v790 = vmul.f32 %v787, %v789
    %v791 = vadd.f32 %v787, %v790
    %vm792 = vweird.f32 %v571
    %vm793 = vweird.f32 %v787
    %vm794 = vmor %vm792, %vm793
    %v795 = vsel %vm794, %v787, %v791
    %v796 = vand.u32 2147483647, %v571
    %vm797 = vcmp.eq.f32.partialorder %v796, 8.507059e+37
    %v798 = vand.u32 %v571, 2147483648
    %v799 = vor.u32 1.1754944e-38, %v798
    %v800 = vsel %vm797, %v799, %v795
    %v801 = vmul.f32 1.0, %v800
    %v802 = vrcp.pop %v572
    %v803 = vmul.f32 %v572, %v802
    %v804 = vsub.f32 1.0, %v803
    %v805 = vmul.f32 %v802, %v804
    %v806 = vadd.f32 %v802, %v805
    %vm807 = vweird.f32 %v572
    %vm808 = vweird.f32 %v802
    %vm809 = vmor %vm807, %vm808
    %v810 = vsel %vm809, %v802, %v806
    %v811 = vand.u32 2147483647, %v572
    %vm812 = vcmp.eq.f32.partialorder %v811, 8.507059e+37
    %v813 = vand.u32 %v572, 2147483648
    %v814 = vor.u32 1.1754944e-38, %v813
    %v815 = vsel %vm812, %v814, %v810
    %v816 = vmul.f32 1.0, %v815
    %v817 = vrcp.pop %v573
    %v818 = vmul.f32 %v573, %v817
    %v819 = vsub.f32 1.0, %v818
    %v820 = vmul.f32 %v817, %v819
    %v821 = vadd.f32 %v817, %v820
    %vm822 = vweird.f32 %v573
    %vm823 = vweird.f32 %v817
    %vm824 = vmor %vm822, %vm823
    %v825 = vsel %vm824, %v817, %v821
    %v826 = vand.u32 2147483647, %v573
    %vm827 = vcmp.eq.f32.partialorder %v826, 8.507059e+37
    %v828 = vand.u32 %v573, 2147483648
    %v829 = vor.u32 1.1754944e-38, %v828
    %v830 = vsel %vm827, %v829, %v825
    %v831 = vmul.f32 1.0, %v830
    %v832 = vrcp.pop %v574
    %v833 = vmul.f32 %v574, %v832
    %v834 = vsub.f32 1.0, %v833
    %v835 = vmul.f32 %v832, %v834
    %v836 = vadd.f32 %v832, %v835
    %vm837 = vweird.f32 %v574
    %vm838 = vweird.f32 %v832
    %vm839 = vmor %vm837, %vm838
    %v840 = vsel %vm839, %v832, %v836
    %v841 = vand.u32 2147483647, %v574
    %vm842 = vcmp.eq.f32.partialorder %v841, 8.507059e+37
    %v843 = vand.u32 %v574, 2147483648
    %v844 = vor.u32 1.1754944e-38, %v843
    %v845 = vsel %vm842, %v844, %v840
    %v846 = vmul.f32 1.0, %v845
    %v847 = vrcp.pop %v575
    %v848 = vmul.f32 %v575, %v847
    %v849 = vsub.f32 1.0, %v848
    %v850 = vmul.f32 %v847, %v849
    %v851 = vadd.f32 %v847, %v850
    %vm852 = vweird.f32 %v575
    %vm853 = vweird.f32 %v847
    %vm854 = vmor %vm852, %vm853
    %v855 = vsel %vm854, %v847, %v851
    %v856 = vand.u32 2147483647, %v575
    %vm857 = vcmp.eq.f32.partialorder %v856, 8.507059e+37
    %v858 = vand.u32 %v575, 2147483648
    %v859 = vor.u32 1.1754944e-38, %v858
    %v860 = vsel %vm857, %v859, %v855
    %v861 = vmul.f32 1.0, %v860
    %v862 = vrcp.pop %v576
    %v863 = vmul.f32 %v576, %v862
    %v864 = vsub.f32 1.0, %v863
    %v865 = vmul.f32 %v862, %v864
    %v866 = vadd.f32 %v862, %v865
    %vm867 = vweird.f32 %v576
    %vm868 = vweird.f32 %v862
    %vm869 = vmor %vm867, %vm868
    %v870 = vsel %vm869, %v862, %v866
    %v871 = vand.u32 2147483647, %v576
    %vm872 = vcmp.eq.f32.partialorder %v871, 8.507059e+37
    %v873 = vand.u32 %v576, 2147483648
    %v874 = vor.u32 1.1754944e-38, %v873
    %v875 = vsel %vm872, %v874, %v870
    %v876 = vmul.f32 1.0, %v875
    %v877 = vmul.f32 %v395, %v591
    %v878 = vmul.f32 %v418, %v606
    %v879 = vmul.f32 %v441, %v621
    %v880 = vmul.f32 %v464, %v636
    %v881 = vmul.f32 %v397, %v651
    %v882 = vmul.f32 %v420, %v666
    %v883 = vmul.f32 %v443, %v681
    %v884 = vmul.f32 %v466, %v696
    %v885 = vmul.f32 %v400, %v711
    %v886 = vmul.f32 %v423, %v726
    %v887 = vmul.f32 %v446, %v741
    %v888 = vmul.f32 %v469, %v756
    %v889 = vmul.f32 %v402, %v771
    %v890 = vmul.f32 %v425, %v786
    %v891 = vmul.f32 %v448, %v801
    %v892 = vmul.f32 %v471, %v816
    %v893 = vmul.f32 %v405, %v831
    %v894 = vmul.f32 %v428, %v846
    %v895 = vmul.f32 %v451, %v861
    %v896 = vmul.f32 %v474, %v876
    %v897 = vpack.c.bf16 %v878, %v877
    %v898 = vpack.c.bf16 %v880, %v879
    %v899 = vpack.c.bf16 %v882, %v881
    %v900 = vpack.c.bf16 %v884, %v883
    %v901 = vpack.c.bf16 %v886, %v885
    %v902 = vpack.c.bf16 %v888, %v887
    %v903 = vpack.c.bf16 %v890, %v889
    %v904 = vpack.c.bf16 %v892, %v891
    %v905 = vpack.c.bf16 %v894, %v893
    %v906 = vpack.c.bf16 %v896, %v895
    %907 = vst [vmem:[#allocation3] sm:$0xff] %v897
    %908 = vst [vmem:[#allocation3 + $0x8] sm:$0xff] %v898
    %909 = vst [vmem:[#allocation3 + $0x10] sm:$0xff] %v899
    %910 = vst [vmem:[#allocation3 + $0x18] sm:$0xff] %v900
    %911 = vst [vmem:[#allocation3 + $0x20] sm:$0xff] %v901
    %912 = vst [vmem:[#allocation3 + $0x28] sm:$0xff] %v902
    %913 = vst [vmem:[#allocation3 + $0x30] sm:$0xff] %v903
    %914 = vst [vmem:[#allocation3 + $0x38] sm:$0xff] %v904
    %915 = vst [vmem:[#allocation3 + $0x40] sm:$0x11] %v905
    %916 = vst [vmem:[#allocation3 + $0x48] sm:$0x11] %v906
    // Predicated region
    $region26: #{clip_backbone_forward.25} parent=1 // pred_check
      _
    $region27: #{clip_backbone_forward.25} parent=1 // pred_check_branch
      %918 = sbr.rel (0) target = $region29
    $region28: #{clip_backbone_forward.25} parent=1 // pred_region
      %920 = vsyncadd [#allocation4], 0
      %s921 = sshll.u32 [#allocation3], 4
      %s922 = int_to_ptr.vmem [resolvable:$true] %s921
      %s923 = sshll.u32 %s5, 4
      %s924 = int_to_ptr.hbm [resolvable:$true] %s923
      %929 = dma.vmem_to_hbm [thread:$0]  %s922, 1280, %s924, [#allocation4], 256, 256, 16
    $region29: #{clip_backbone_forward.25} parent=1 // pred_fallthru
      _
    // Predicated region
    $region30: #{clip_backbone_forward.25} parent=1 // pred_check
      _
    $region31: #{clip_backbone_forward.25} parent=1 // pred_check_branch
      %931 = sbr.rel (0) target = $region33
    $region32: #{clip_backbone_forward.25} parent=1 // pred_region
      _
    $region33: #{clip_backbone_forward.25} parent=1 // pred_fallthru
      _
    // Predicated region
    $region34: #{clip_backbone_forward.25} parent=1 // pred_check
      _
    $region35: #{clip_backbone_forward.25} parent=1 // pred_check_branch
      %933 = sbr.rel (0) target = $region37
    $region36: #{clip_backbone_forward.25} parent=1 // pred_region
      %935 = dma.done [#allocation4], 1280
    $region37: #{clip_backbone_forward.25} parent=1 // pred_fallthru
      _
    // Predicated region
    $region38: #{clip_backbone_forward.25} parent=1 // pred_check
      _
    $region39: #{clip_backbone_forward.25} parent=1 // pred_check_branch
      %937 = sbr.rel (0) target = $region41
    $region40: #{clip_backbone_forward.25} parent=1 // pred_region
      _
    $region41: #{clip_backbone_forward.25} parent=1 // pred_fallthru
      _
    %938 = vsyncpa [#allocation4], 1

</llo_original>
